<compile_context>
chip_gen: v5e
topology: v5e:2x2
jax: 0.10.0
libtpu: 0.0.40
codegen_flags: <defaults>
</compile_context>

<pallas_src>
import functools

import jax
import jax.numpy as jnp
from jax.experimental import pallas as pl
from jax.experimental.pallas import tpu as pltpu

_EPS = 1e-5
_ACC_BYTES_CAP = 128 * 1024        # target size for the f32 accumulator tile


def _round_up(x, m):
    return (x + m - 1) // m * m


# ---------------------------------------------------------------------------
# Kernel factory: fused 3x3 conv (+ folded BN bias) + ReLU + pad-lane masking.
#
# refs = (*src_planes, w, b, mask, out, xk_scratch)
#   src_planes[i] : (Cin, L_src)   guarded padded-flat image plane(s)
#   w             : (Cout, 9*Cin)  bf16; columns [k*Cin:(k+1)*Cin] = tap k
#   b             : (Cout, 1)      f32 folded BN bias
#   mask          : (1, TILE)      f32 0/1 validity of each output lane
#   out           : (Cout, TILE)   lane-dense output tile
#   xk_scratch    : (9*Cin, TILE)  bf16 stacked-K MXU operand
# ---------------------------------------------------------------------------
def _make_conv_kernel(taps, n_src, tile, win, num_tiles):
    def kernel(*refs):
        srcs = refs[:n_src]
        w_ref, b_ref, m_ref, o_ref, xk_ref = refs[n_src:]
        cin = srcs[0].shape[0]

        if num_tiles == 1:
            base = 0
        else:
            base = pl.multiple_of(pl.program_id(1) * tile, tile)

        # One (Cin, WIN) window per source plane; cast once to bf16 (the
        # MXU's native rate).  No f32 staging of activations or weights.
        wins = [s_ref[:, pl.ds(base, win)].astype(jnp.bfloat16)
                for s_ref in srcs]

        # Stack the nine shifted tap slices along the contraction axis into a
        # VMEM scratch so ONE matmul with K = 9*Cin replaces nine tiny-K dots.
        for k, (si, off) in enumerate(taps):
            xk_ref[k * cin:(k + 1) * cin, :] = wins[si][:, off:off + tile]

        acc = jnp.dot(w_ref[...], xk_ref[...],
                      preferred_element_type=jnp.float32)      # (Cout, TILE)
        acc = jnp.maximum(acc + b_ref[...], 0.0)               # bias + ReLU
        acc = acc * m_ref[...]        # zero guard / pad-column / tail lanes
        o_ref[...] = acc.astype(o_ref.dtype)

    return kernel


# ---------------------------------------------------------------------------
# One fused layer = one pallas_call.
# ---------------------------------------------------------------------------
def _conv_layer(srcs, w_stack, bias, mask, *, taps, tile, l_lanes, out_dtype):
    n, cin, l_src = srcs[0].shape
    cout = w_stack.shape[0]
    assert w_stack.shape[1] == 9 * cin
    n_src = len(srcs)
    num_tiles = l_lanes // tile
    max_off = max(off for _, off in taps)
    win = tile + max_off
    assert l_src >= (num_tiles - 1) * tile + win, (l_src, num_tiles, tile, win)

    kernel = _make_conv_kernel(tuple(taps), n_src, tile, win, num_tiles)

    src_specs = [pl.BlockSpec((None, cin, l_src), lambda nn, tt: (nn, 0, 0))
                 for _ in range(n_src)]
    w_spec = pl.BlockSpec((cout, 9 * cin), lambda nn, tt: (0, 0))
    b_spec = pl.BlockSpec((cout, 1), lambda nn, tt: (0, 0))
    m_spec = pl.BlockSpec((1, tile), lambda nn, tt: (0, tt))
    out_spec = pl.BlockSpec((None, cout, tile), lambda nn, tt: (nn, 0, tt))

    in_item = jnp.dtype(srcs[0].dtype).itemsize
    out_item = jnp.dtype(out_dtype).itemsize

    # Scoped-VMEM budget from actual residency (double-buffered blocks,
    # scratch, temporaries) with ~2x headroom -- never the whole physical VMEM.
    est = (2 * n_src * cin * l_src * in_item              # resident src planes
           + 2 * (cout * 9 * cin * 2 + cout * 4 + tile * 4)   # w / b / mask
           + 2 * cout * tile * out_item                   # output blocks
           + n_src * cin * win * 2                        # staged bf16 windows
           + 9 * cin * tile * 2                           # stacked-K scratch
           + 2 * cout * tile * 4)                         # f32 accumulator
    vmem_limit = int(min(max(2 * est + (8 << 20), 32 << 20), 100 << 20))

    flops = 2 * n * num_tiles * tile * 9 * cin * cout
    bytes_accessed = int(n * n_src * cin * l_src * in_item
                         + cout * (9 * cin * 2 + 4) + l_lanes * 4
                         + n * cout * l_lanes * out_item)

    return pl.pallas_call(
        kernel,
        out_shape=jax.ShapeDtypeStruct((n, cout, l_lanes), out_dtype),
        grid=(n, num_tiles),
        in_specs=src_specs + [w_spec, b_spec, m_spec],
        out_specs=out_spec,
        scratch_shapes=[pltpu.VMEM((9 * cin, tile), jnp.bfloat16)],
        compiler_params=pltpu.CompilerParams(
            dimension_semantics=("parallel", "parallel"),
            vmem_limit_bytes=vmem_limit),
        cost_estimate=pl.CostEstimate(flops=flops, transcendentals=0,
                                      bytes_accessed=bytes_accessed),
    )(*srcs, w_stack, bias, mask)


# ---------------------------------------------------------------------------
# Static planning of the guarded padded-flat activation layout.
#
# Output lane p of a layer maps to conv output pixel
#   (row, col) = ((p - guard) // w_row, (p - guard) % w_row),  w_row = Wo + 1,
# valid iff 0 <= p - guard < Ho * w_row and col < Wo (col == Wo is the shared
# zero pad column between rows).  Because consecutive stride-1 guards differ
# by exactly w_row + 1, every 3x3 tap of a stride-1 layer is the constant,
# non-negative lane offset  kh * w_row + kw.
# ---------------------------------------------------------------------------
def _plan_layers(h, w, strides, couts, tile_lanes):
    n_layers = len(strides)

    dims = []
    hh, ww = h, w
    for s in strides:
        ho, wo = (hh - 1) // s + 1, (ww - 1) // s + 1
        dims.append((hh, ww, ho, wo))
        hh, ww = ho, wo

    # Output guards, back to front.
    g_out = [0] * n_layers
    for i in range(n_layers - 2, -1, -1):
        g_out[i] = g_out[i + 1] + dims[i][3] + 2 if strides[i + 1] == 1 else 0

    taps_list, g_phase = [], [0] * n_layers
    for i, s in enumerate(strides):
        _, win_sp, ho, wo = dims[i]
        w_row = wo + 1
        if s == 1:
            w_in = win_sp + 1                         # == w_row for stride 1
            g_in = g_out[i - 1] if i > 0 else g_out[i] + w_in + 1
            taps = [(0, (g_in - g_out[i]) + (kh - 1) * w_in + (kw - 1))
                    for kh in range(3) for kw in range(3)]
        else:
            g_phase[i] = g_out[i] + w_row + 1
            taps = []
            for kh in range(3):
                for kw in range(3):
                    rp, cp = (kh + 1) % 2, (kw + 1) % 2
                    dr = -1 if kh == 0 else 0
                    dc = -1 if kw == 0 else 0
                    taps.append((2 * rp + cp,
                                 (g_phase[i] - g_out[i]) + dr * w_row + dc))
        assert min(o for _, o in taps) >= 0
        taps_list.append(taps)

    # Tile sizes and output lane lengths, back to front (a producer must be
    # long enough for its stride-1 consumer's last window).
    tiles, l_lanes, next_need = [0] * n_layers, [0] * n_layers, 0
    for i in range(n_layers - 1, -1, -1):
        _, _, ho, wo = dims[i]
        content = g_out[i] + ho * (wo + 1)
        acc_cap = max(128, (_ACC_BYTES_CAP // (4 * couts[i])) // 128 * 128)
        t = max(128, min(tile_lanes, acc_cap, _round_up(content, 128)))
        tiles[i] = t
        l_lanes[i] = _round_up(max(content, next_need), t)
        max_off = max(o for _, o in taps_list[i])
        next_need = l_lanes[i] + max_off if strides[i] == 1 else 0

    return dims, g_out, g_phase, taps_list, tiles, l_lanes


def _lane_mask(l_lanes, guard, w_row, ho):
    """0/1 validity of every output lane of the guarded padded-flat layout."""
    lane = jnp.arange(l_lanes, dtype=jnp.int32)
    q = lane - guard
    valid = (q >= 0) & (q < ho * w_row) & (q % w_row < w_row - 1)
    return valid.astype(jnp.float32)[None, :]


def _phase_planes(x2d, guard, w_row, ho, wo, l_src):
    """Polyphase (even/odd row+col) split of an NCHW activation, each phase
    emitted directly into the guarded padded-flat layout (bf16)."""
    nb, c, h, w = x2d.shape
    xb = jnp.pad(x2d.astype(jnp.bfloat16),
                 ((0, 0), (0, 0), (0, h % 2), (0, w % 2)))
    planes = []
    for rp in (0, 1):
        for cp in (0, 1):
            ph = xb[:, :, rp::2, cp::2]                       # (nb, c, ho, wo)
            ph = jnp.pad(ph, ((0, 0), (0, 0), (0, 0), (0, w_row - wo)))
            ph = ph.reshape(nb, c, ho * w_row)
            ph = jnp.pad(ph, ((0, 0), (0, 0),
                              (guard, l_src - guard - ho * w_row)))
            planes.append(ph)
    return planes


def _canonical_to_nchw(flat, guard, w_row, h, w):
    nb, c = flat.shape[0], flat.shape[1]
    return flat[:, :, guard:guard + h * w_row].reshape(
        nb, c, h, w_row)[:, :, :, :w]


# ---------------------------------------------------------------------------
# DetailBranch forward (NCHW in / NCHW out, like the PyTorch module).
# ---------------------------------------------------------------------------
@functools.partial(jax.jit, static_argnames=("strides", "tile_lanes"))
def detail_branch_forward(x_nchw, params, strides, tile_lanes=1024):
    h, w = x_nchw.shape[2], x_nchw.shape[3]
    couts = [p[0].shape[0] for p in params]
    dims, g_out, g_phase, taps_list, tiles, l_lanes = _plan_layers(
        h, w, strides, couts, tile_lanes)

    cur_canon = None                       # (flat, guard, w_row, H, W)
    for i, s in enumerate(strides):
        w_stack, bias = params[i]
        _, _, ho, wo = dims[i]
        w_row = wo + 1
        # Sub-16-channel layers are stored as f32 so stores are sublane-dense.
        out_dtype = jnp.float32 if couts[i] < 16 else jnp.bfloat16
        max_off = max(o for _, o in taps_list[i])

        if s == 2:
            x2d = x_nchw if cur_canon is None else _canonical_to_nchw(*cur_canon)
            srcs = _phase_planes(x2d, g_phase[i], w_row, ho, wo,
                                 l_lanes[i] + max_off)
        else:
            # Stride-1: consume the previous layer's output buffer directly
            # (already guarded / padded / zero-masked) -- no HBM round trip.
            assert cur_canon is not None, "DetailBranch starts with stride 2"
            srcs = [cur_canon[0]]

        mask = _lane_mask(l_lanes[i], g_out[i], w_row, ho)
        out_flat = _conv_layer(srcs, w_stack, bias, mask,
                               taps=taps_list[i], tile=tiles[i],
                               l_lanes=l_lanes[i], out_dtype=out_dtype)
        cur_canon = (out_flat, g_out[i], w_row, ho, wo)

    return _canonical_to_nchw(*cur_canon).astype(jnp.float32)


# ---------------------------------------------------------------------------
# Deterministic parameters with eval-mode BatchNorm folded into the conv.
# ---------------------------------------------------------------------------
def make_detail_branch_params(key, in_channels, out_channels):
    c0, c1 = out_channels
    cfg = [
        (in_channels, c0, 2), (c0, c0, 1),                    # S1
        (c0, c0, 2), (c0, c0, 1), (c0, c0, 1),                # S2
        (c0, c1, 2), (c1, c1, 1), (c1, c1, 1),                # S3
    ]
    params, strides = [], []
    for i, (cin, cout, stride) in enumerate(cfg):
        k = jax.random.fold_in(key, i)
        kw_, kg, kb, km, kv = jax.random.split(k, 5)
        wgt = 0.1 * jax.random.normal(kw_, (cout, cin, 3, 3), jnp.float32)
        gamma = jax.random.uniform(kg, (cout,), jnp.float32, 0.5, 1.5)
        beta = 0.1 * jax.random.normal(kb, (cout,), jnp.float32)
        mean = 0.1 * jax.random.normal(km, (cout,), jnp.float32)
        var = jax.random.uniform(kv, (cout,), jnp.float32, 0.5, 1.5)
        scale = gamma / jnp.sqrt(var + _EPS)                  # (Cout,)
        w_eff = wgt * scale[:, None, None, None]              # (Cout,Cin,3,3)
        b_eff = beta - mean * scale                           # (Cout,)
        # (Cout, 9*Cin): column block k = 3*kh + kw holds tap (kh, kw) --
        # matches the in-kernel stacked-K assembly order.
        w_stack = jnp.transpose(w_eff, (0, 2, 3, 1)).reshape(cout, 9 * cin)
        params.append((w_stack.astype(jnp.bfloat16),
                       b_eff.astype(jnp.float32).reshape(cout, 1)))
        strides.append(stride)
    return params, tuple(strides)


# ---------------------------------------------------------------------------
# Pure-JAX reference (lax conv) with the SAME bf16 quantization of
# activations/weights and f32 accumulation as the Pallas path.
# ---------------------------------------------------------------------------
def detail_branch_reference(x_nchw, params, strides):
    x = x_nchw
    for (w_stack, b), s in zip(params, strides):
        cout = w_stack.shape[0]
        cin = w_stack.shape[1] // 9
        wq = w_stack.astype(jnp.float32).reshape(cout, 3, 3, cin)
        w_oihw = jnp.transpose(wq, (0, 3, 1, 2))
        xq = x.astype(jnp.bfloat16).astype(jnp.float32)
        y = jax.lax.conv_general_dilated(
            xq, w_oihw, window_strides=(s, s), padding=((1, 1), (1, 1)),
            dimension_numbers=("NCHW", "OIHW", "NCHW"),
            precision=jax.lax.Precision.HIGHEST)
        y = jnp.maximum(y + b.reshape(1, cout, 1, 1), 0.0)
        x = y.astype(jnp.bfloat16)
    return x.astype(jnp.float32)


if __name__ == "__main__":
    key = jax.random.PRNGKey(0)
    kx, kp = jax.random.split(key)

    N, CIN, H, W = 2, 4, 16, 16
    out_channels = (8, 16)

    x = jax.random.normal(kx, (N, CIN, H, W), jnp.float32)
    params, strides = make_detail_branch_params(kp, CIN, out_channels)

    out = detail_branch_forward(x, params, strides=strides)
    out = jax.block_until_ready(out)

    # Three stride-2 stages -> H/8 x W/8 spatial, out_channels[1] channels.
    assert out.shape == (N, out_channels[1], H // 8, W // 8), out.shape

    ref = detail_branch_reference(x, params, strides)
    err = float(jnp.max(jnp.abs(out - ref)))
    assert jnp.allclose(out, ref, atol=2e-2, rtol=2e-2), err

    print("KERNEL_OK")
</pallas_src>

<mosaic_0001>
module attributes {stable_mosaic.version = 11 : i64} {
  func.func @kernel(%arg0: i32, %arg1: i32, %arg2: memref<1x4x266xbf16, #tpu.memory_space<vmem>>, %arg3: memref<1x4x266xbf16, #tpu.memory_space<vmem>>, %arg4: memref<1x4x266xbf16, #tpu.memory_space<vmem>>, %arg5: memref<1x4x266xbf16, #tpu.memory_space<vmem>>, %arg6: memref<8x36xbf16, #tpu.memory_space<vmem>>, %arg7: memref<8x1xf32, #tpu.memory_space<vmem>>, %arg8: memref<1x128xf32, #tpu.memory_space<vmem>>, %arg9: memref<1x8x128xf32, #tpu.memory_space<vmem>>, %arg10: memref<36x128xbf16, #tpu.memory_space<vmem>>) attributes {dimension_semantics = [#tpu.dimension_semantics<parallel>, #tpu.dimension_semantics<parallel>], iteration_bounds = array<i64: 2, 2>, scalar_prefetch = 0 : i64, scratch_operands = 1 : i64, tpu.core_type = #tpu.core_type<tc>, window_params = [{transform_indices = @transform_0, window_bounds = array<i64: 1, 4, 266>}, {transform_indices = @transform_1, window_bounds = array<i64: 1, 4, 266>}, {transform_indices = @transform_2, window_bounds = array<i64: 1, 4, 266>}, {transform_indices = @transform_3, window_bounds = array<i64: 1, 4, 266>}, {pipeline_mode = #tpu.pipeline_mode<synchronous>, transform_indices = @transform_4, window_bounds = array<i64: 8, 36>}, {pipeline_mode = #tpu.pipeline_mode<synchronous>, transform_indices = @transform_5, window_bounds = array<i64: 8, 1>}, {transform_indices = @transform_6, window_bounds = array<i64: 1, 128>}, {transform_indices = @transform_7, window_bounds = array<i64: 1, 8, 128>}]} {
    %c128_i32 = arith.constant 128 : i32
    %0 = arith.muli %arg1, %c128_i32 : i32
    %1 = tpu.assume_multiple %0, 128 : i32
    %c0 = arith.constant 0 : index
    %c0_0 = arith.constant 0 : index
    %2 = arith.index_cast %1 : i32 to index
    %3 = vector.load %arg2[%c0, %c0_0, %2] : memref<1x4x266xbf16, #tpu.memory_space<vmem>>, vector<1x4x138xbf16>
    %4 = vector.shape_cast %3 : vector<1x4x138xbf16> to vector<4x138xbf16>
    %c0_1 = arith.constant 0 : index
    %c0_2 = arith.constant 0 : index
    %5 = arith.index_cast %1 : i32 to index
    %6 = vector.load %arg3[%c0_1, %c0_2, %5] : memref<1x4x266xbf16, #tpu.memory_space<vmem>>, vector<1x4x138xbf16>
    %7 = vector.shape_cast %6 : vector<1x4x138xbf16> to vector<4x138xbf16>
    %c0_3 = arith.constant 0 : index
    %c0_4 = arith.constant 0 : index
    %8 = arith.index_cast %1 : i32 to index
    %9 = vector.load %arg4[%c0_3, %c0_4, %8] : memref<1x4x266xbf16, #tpu.memory_space<vmem>>, vector<1x4x138xbf16>
    %10 = vector.shape_cast %9 : vector<1x4x138xbf16> to vector<4x138xbf16>
    %c0_5 = arith.constant 0 : index
    %c0_6 = arith.constant 0 : index
    %11 = arith.index_cast %1 : i32 to index
    %12 = vector.load %arg5[%c0_5, %c0_6, %11] : memref<1x4x266xbf16, #tpu.memory_space<vmem>>, vector<1x4x138xbf16>
    %13 = vector.shape_cast %12 : vector<1x4x138xbf16> to vector<4x138xbf16>
    %14 = vector.extract_strided_slice %13 {offsets = [0, 0], sizes = [4, 128], strides = [1, 1]} : vector<4x138xbf16> to vector<4x128xbf16>
    %c0_7 = arith.constant 0 : index
    %c0_8 = arith.constant 0 : index
    %15 = vector.load %arg10[%c0_7, %c0_8] : memref<36x128xbf16, #tpu.memory_space<vmem>>, vector<4x128xbf16>
    tpu.vector_store %arg10[%c0_7, %c0_8], %14 {strides = array<i32>} : memref<36x128xbf16, #tpu.memory_space<vmem>>, vector<4x128xbf16>,
    %16 = vector.extract_strided_slice %10 {offsets = [0, 1], sizes = [4, 128], strides = [1, 1]} : vector<4x138xbf16> to vector<4x128xbf16>
    %c4 = arith.constant 4 : index
    %c0_9 = arith.constant 0 : index
    %17 = vector.load %arg10[%c4, %c0_9] : memref<36x128xbf16, #tpu.memory_space<vmem>>, vector<4x128xbf16>
    tpu.vector_store %arg10[%c4, %c0_9], %16 {strides = array<i32>} : memref<36x128xbf16, #tpu.memory_space<vmem>>, vector<4x128xbf16>,
    %18 = vector.extract_strided_slice %13 {offsets = [0, 1], sizes = [4, 128], strides = [1, 1]} : vector<4x138xbf16> to vector<4x128xbf16>
    %c8 = arith.constant 8 : index
    %c0_10 = arith.constant 0 : index
    %19 = vector.load %arg10[%c8, %c0_10] : memref<36x128xbf16, #tpu.memory_space<vmem>>, vector<4x128xbf16>
    tpu.vector_store %arg10[%c8, %c0_10], %18 {strides = array<i32>} : memref<36x128xbf16, #tpu.memory_space<vmem>>, vector<4x128xbf16>,
    %20 = vector.extract_strided_slice %7 {offsets = [0, 9], sizes = [4, 128], strides = [1, 1]} : vector<4x138xbf16> to vector<4x128xbf16>
    %c12 = arith.constant 12 : index
    %c0_11 = arith.constant 0 : index
    %21 = vector.load %arg10[%c12, %c0_11] : memref<36x128xbf16, #tpu.memory_space<vmem>>, vector<4x128xbf16>
    tpu.vector_store %arg10[%c12, %c0_11], %20 {strides = array<i32>} : memref<36x128xbf16, #tpu.memory_space<vmem>>, vector<4x128xbf16>,
    %22 = vector.extract_strided_slice %4 {offsets = [0, 10], sizes = [4, 128], strides = [1, 1]} : vector<4x138xbf16> to vector<4x128xbf16>
    %c16 = arith.constant 16 : index
    %c0_12 = arith.constant 0 : index
    %23 = vector.load %arg10[%c16, %c0_12] : memref<36x128xbf16, #tpu.memory_space<vmem>>, vector<4x128xbf16>
    tpu.vector_store %arg10[%c16, %c0_12], %22 {strides = array<i32>} : memref<36x128xbf16, #tpu.memory_space<vmem>>, vector<4x128xbf16>,
    %24 = vector.extract_strided_slice %7 {offsets = [0, 10], sizes = [4, 128], strides = [1, 1]} : vector<4x138xbf16> to vector<4x128xbf16>
    %c20 = arith.constant 20 : index
    %c0_13 = arith.constant 0 : index
    %25 = vector.load %arg10[%c20, %c0_13] : memref<36x128xbf16, #tpu.memory_space<vmem>>, vector<4x128xbf16>
    tpu.vector_store %arg10[%c20, %c0_13], %24 {strides = array<i32>} : memref<36x128xbf16, #tpu.memory_space<vmem>>, vector<4x128xbf16>,
    %26 = vector.extract_strided_slice %13 {offsets = [0, 9], sizes = [4, 128], strides = [1, 1]} : vector<4x138xbf16> to vector<4x128xbf16>
    %c24 = arith.constant 24 : index
    %c0_14 = arith.constant 0 : index
    %27 = vector.load %arg10[%c24, %c0_14] : memref<36x128xbf16, #tpu.memory_space<vmem>>, vector<4x128xbf16>
    tpu.vector_store %arg10[%c24, %c0_14], %26 {strides = array<i32>} : memref<36x128xbf16, #tpu.memory_space<vmem>>, vector<4x128xbf16>,
    %28 = vector.extract_strided_slice %10 {offsets = [0, 10], sizes = [4, 128], strides = [1, 1]} : vector<4x138xbf16> to vector<4x128xbf16>
    %c28 = arith.constant 28 : index
    %c0_15 = arith.constant 0 : index
    %29 = vector.load %arg10[%c28, %c0_15] : memref<36x128xbf16, #tpu.memory_space<vmem>>, vector<4x128xbf16>
    tpu.vector_store %arg10[%c28, %c0_15], %28 {strides = array<i32>} : memref<36x128xbf16, #tpu.memory_space<vmem>>, vector<4x128xbf16>,
    %30 = vector.extract_strided_slice %13 {offsets = [0, 10], sizes = [4, 128], strides = [1, 1]} : vector<4x138xbf16> to vector<4x128xbf16>
    %c32 = arith.constant 32 : index
    %c0_16 = arith.constant 0 : index
    %31 = vector.load %arg10[%c32, %c0_16] : memref<36x128xbf16, #tpu.memory_space<vmem>>, vector<4x128xbf16>
    tpu.vector_store %arg10[%c32, %c0_16], %30 {strides = array<i32>} : memref<36x128xbf16, #tpu.memory_space<vmem>>, vector<4x128xbf16>,
    %c0_17 = arith.constant 0 : index
    %c0_18 = arith.constant 0 : index
    %32 = vector.load %arg6[%c0_17, %c0_18] : memref<8x36xbf16, #tpu.memory_space<vmem>>, vector<8x36xbf16>
    %c0_19 = arith.constant 0 : index
    %c0_20 = arith.constant 0 : index
    %33 = vector.load %arg10[%c0_19, %c0_20] : memref<36x128xbf16, #tpu.memory_space<vmem>>, vector<36x128xbf16>
    %cst = arith.constant dense<0.000000e+00> : vector<8x128xf32>
    %34 = tpu.matmul %32, %33, %cst {dimension_numbers = #tpu.dot_dimension_numbers<[1], [0], [0], [1], [0, 0, 1, 1], [], []>} : vector<8x36xbf16>, vector<36x128xbf16>, vector<8x128xf32> -> vector<8x128xf32>
    %c0_21 = arith.constant 0 : index
    %c0_22 = arith.constant 0 : index
    %35 = vector.load %arg7[%c0_21, %c0_22] : memref<8x1xf32, #tpu.memory_space<vmem>>, vector<8x1xf32>
    %36 = vector.broadcast %35 : vector<8x1xf32> to vector<8x128xf32>
    %37 = arith.addf %34, %36 : vector<8x128xf32>
    %cst_23 = arith.constant 0.000000e+00 : f32
    %38 = vector.broadcast %cst_23 : f32 to vector<8x128xf32>
    %39 = arith.maximumf %37, %38 : vector<8x128xf32>
    %c0_24 = arith.constant 0 : index
    %c0_25 = arith.constant 0 : index
    %40 = vector.load %arg8[%c0_24, %c0_25] : memref<1x128xf32, #tpu.memory_space<vmem>>, vector<1x128xf32>
    %41 = vector.broadcast %40 : vector<1x128xf32> to vector<8x128xf32>
    %42 = arith.mulf %39, %41 : vector<8x128xf32>
    %c0_26 = arith.constant 0 : index
    %c0_27 = arith.constant 0 : index
    %c0_28 = arith.constant 0 : index
    %43 = vector.load %arg9[%c0_26, %c0_27, %c0_28] : memref<1x8x128xf32, #tpu.memory_space<vmem>>, vector<1x8x128xf32>
    %44 = vector.shape_cast %43 : vector<1x8x128xf32> to vector<8x128xf32>
    %45 = vector.shape_cast %42 : vector<8x128xf32> to vector<1x8x128xf32>
    tpu.vector_store %arg9[%c0_26, %c0_27, %c0_28], %45 {strides = array<i32>} : memref<1x8x128xf32, #tpu.memory_space<vmem>>, vector<1x8x128xf32>,
    return
  }
  func.func @transform_0(%arg0: i32, %arg1: i32) -> (i32, i32, i32) {
    %c0_i32 = arith.constant 0 : i32
    %c0_i32_0 = arith.constant 0 : i32
    %c0_i32_1 = arith.constant 0 : i32
    return %arg0, %c0_i32, %c0_i32_0 : i32, i32, i32
  }
  func.func @transform_1(%arg0: i32, %arg1: i32) -> (i32, i32, i32) {
    %c0_i32 = arith.constant 0 : i32
    %c0_i32_0 = arith.constant 0 : i32
    %c0_i32_1 = arith.constant 0 : i32
    return %arg0, %c0_i32, %c0_i32_0 : i32, i32, i32
  }
  func.func @transform_2(%arg0: i32, %arg1: i32) -> (i32, i32, i32) {
    %c0_i32 = arith.constant 0 : i32
    %c0_i32_0 = arith.constant 0 : i32
    %c0_i32_1 = arith.constant 0 : i32
    return %arg0, %c0_i32, %c0_i32_0 : i32, i32, i32
  }
  func.func @transform_3(%arg0: i32, %arg1: i32) -> (i32, i32, i32) {
    %c0_i32 = arith.constant 0 : i32
    %c0_i32_0 = arith.constant 0 : i32
    %c0_i32_1 = arith.constant 0 : i32
    return %arg0, %c0_i32, %c0_i32_0 : i32, i32, i32
  }
  func.func @transform_4(%arg0: i32, %arg1: i32) -> (i32, i32) {
    %c0_i32 = arith.constant 0 : i32
    %c0_i32_0 = arith.constant 0 : i32
    %c0_i32_1 = arith.constant 0 : i32
    return %c0_i32, %c0_i32_0 : i32, i32
  }
  func.func @transform_5(%arg0: i32, %arg1: i32) -> (i32, i32) {
    %c0_i32 = arith.constant 0 : i32
    %c0_i32_0 = arith.constant 0 : i32
    %c0_i32_1 = arith.constant 0 : i32
    return %c0_i32, %c0_i32_0 : i32, i32
  }
  func.func @transform_6(%arg0: i32, %arg1: i32) -> (i32, i32) {
    %c0_i32 = arith.constant 0 : i32
    %c0_i32_0 = arith.constant 0 : i32
    return %c0_i32, %arg1 : i32, i32
  }
  func.func @transform_7(%arg0: i32, %arg1: i32) -> (i32, i32, i32) {
    %c0_i32 = arith.constant 0 : i32
    %c0_i32_0 = arith.constant 0 : i32
    return %arg0, %c0_i32, %arg1 : i32, i32, i32
  }
}

module attributes {stable_mosaic.version = 11 : i64} {
  func.func @kernel(%arg0: i32, %arg1: i32, %arg2: memref<1x8x256xf32, #tpu.memory_space<vmem>>, %arg3: memref<8x72xbf16, #tpu.memory_space<vmem>>, %arg4: memref<8x1xf32, #tpu.memory_space<vmem>>, %arg5: memref<1x128xf32, #tpu.memory_space<vmem>>, %arg6: memref<1x8x128xf32, #tpu.memory_space<vmem>>, %arg7: memref<72x128xbf16, #tpu.memory_space<vmem>>) attributes {dimension_semantics = [#tpu.dimension_semantics<parallel>, #tpu.dimension_semantics<parallel>], iteration_bounds = array<i64: 2, 1>, scalar_prefetch = 0 : i64, scratch_operands = 1 : i64, tpu.core_type = #tpu.core_type<tc>, window_params = [{transform_indices = @transform_0, window_bounds = array<i64: 1, 8, 256>}, {pipeline_mode = #tpu.pipeline_mode<synchronous>, transform_indices = @transform_1, window_bounds = array<i64: 8, 72>}, {pipeline_mode = #tpu.pipeline_mode<synchronous>, transform_indices = @transform_2, window_bounds = array<i64: 8, 1>}, {transform_indices = @transform_3, window_bounds = array<i64: 1, 128>}, {transform_indices = @transform_4, window_bounds = array<i64: 1, 8, 128>}]} {
    %c0 = arith.constant 0 : index
    %c0_0 = arith.constant 0 : index
    %c0_1 = arith.constant 0 : index
    %0 = vector.load %arg2[%c0, %c0_0, %c0_1] : memref<1x8x256xf32, #tpu.memory_space<vmem>>, vector<1x8x148xf32>
    %1 = vector.shape_cast %0 : vector<1x8x148xf32> to vector<8x148xf32>
    %2 = arith.truncf %1 : vector<8x148xf32> to vector<8x148xbf16>
    %3 = vector.extract_strided_slice %2 {offsets = [0, 0], sizes = [8, 128], strides = [1, 1]} : vector<8x148xbf16> to vector<8x128xbf16>
    %c0_2 = arith.constant 0 : index
    %c0_3 = arith.constant 0 : index
    %4 = vector.load %arg7[%c0_2, %c0_3] : memref<72x128xbf16, #tpu.memory_space<vmem>>, vector<8x128xbf16>
    tpu.vector_store %arg7[%c0_2, %c0_3], %3 {strides = array<i32>} : memref<72x128xbf16, #tpu.memory_space<vmem>>, vector<8x128xbf16>,
    %5 = vector.extract_strided_slice %2 {offsets = [0, 1], sizes = [8, 128], strides = [1, 1]} : vector<8x148xbf16> to vector<8x128xbf16>
    %c8 = arith.constant 8 : index
    %c0_4 = arith.constant 0 : index
    %6 = vector.load %arg7[%c8, %c0_4] : memref<72x128xbf16, #tpu.memory_space<vmem>>, vector<8x128xbf16>
    tpu.vector_store %arg7[%c8, %c0_4], %5 {strides = array<i32>} : memref<72x128xbf16, #tpu.memory_space<vmem>>, vector<8x128xbf16>,
    %7 = vector.extract_strided_slice %2 {offsets = [0, 2], sizes = [8, 128], strides = [1, 1]} : vector<8x148xbf16> to vector<8x128xbf16>
    %c16 = arith.constant 16 : index
    %c0_5 = arith.constant 0 : index
    %8 = vector.load %arg7[%c16, %c0_5] : memref<72x128xbf16, #tpu.memory_space<vmem>>, vector<8x128xbf16>
    tpu.vector_store %arg7[%c16, %c0_5], %7 {strides = array<i32>} : memref<72x128xbf16, #tpu.memory_space<vmem>>, vector<8x128xbf16>,
    %9 = vector.extract_strided_slice %2 {offsets = [0, 9], sizes = [8, 128], strides = [1, 1]} : vector<8x148xbf16> to vector<8x128xbf16>
    %c24 = arith.constant 24 : index
    %c0_6 = arith.constant 0 : index
    %10 = vector.load %arg7[%c24, %c0_6] : memref<72x128xbf16, #tpu.memory_space<vmem>>, vector<8x128xbf16>
    tpu.vector_store %arg7[%c24, %c0_6], %9 {strides = array<i32>} : memref<72x128xbf16, #tpu.memory_space<vmem>>, vector<8x128xbf16>,
    %11 = vector.extract_strided_slice %2 {offsets = [0, 10], sizes = [8, 128], strides = [1, 1]} : vector<8x148xbf16> to vector<8x128xbf16>
    %c32 = arith.constant 32 : index
    %c0_7 = arith.constant 0 : index
    %12 = vector.load %arg7[%c32, %c0_7] : memref<72x128xbf16, #tpu.memory_space<vmem>>, vector<8x128xbf16>
    tpu.vector_store %arg7[%c32, %c0_7], %11 {strides = array<i32>} : memref<72x128xbf16, #tpu.memory_space<vmem>>, vector<8x128xbf16>,
    %13 = vector.extract_strided_slice %2 {offsets = [0, 11], sizes = [8, 128], strides = [1, 1]} : vector<8x148xbf16> to vector<8x128xbf16>
    %c40 = arith.constant 40 : index
    %c0_8 = arith.constant 0 : index
    %14 = vector.load %arg7[%c40, %c0_8] : memref<72x128xbf16, #tpu.memory_space<vmem>>, vector<8x128xbf16>
    tpu.vector_store %arg7[%c40, %c0_8], %13 {strides = array<i32>} : memref<72x128xbf16, #tpu.memory_space<vmem>>, vector<8x128xbf16>,
    %15 = vector.extract_strided_slice %2 {offsets = [0, 18], sizes = [8, 128], strides = [1, 1]} : vector<8x148xbf16> to vector<8x128xbf16>
    %c48 = arith.constant 48 : index
    %c0_9 = arith.constant 0 : index
    %16 = vector.load %arg7[%c48, %c0_9] : memref<72x128xbf16, #tpu.memory_space<vmem>>, vector<8x128xbf16>
    tpu.vector_store %arg7[%c48, %c0_9], %15 {strides = array<i32>} : memref<72x128xbf16, #tpu.memory_space<vmem>>, vector<8x128xbf16>,
    %17 = vector.extract_strided_slice %2 {offsets = [0, 19], sizes = [8, 128], strides = [1, 1]} : vector<8x148xbf16> to vector<8x128xbf16>
    %c56 = arith.constant 56 : index
    %c0_10 = arith.constant 0 : index
    %18 = vector.load %arg7[%c56, %c0_10] : memref<72x128xbf16, #tpu.memory_space<vmem>>, vector<8x128xbf16>
    tpu.vector_store %arg7[%c56, %c0_10], %17 {strides = array<i32>} : memref<72x128xbf16, #tpu.memory_space<vmem>>, vector<8x128xbf16>,
    %19 = vector.extract_strided_slice %2 {offsets = [0, 20], sizes = [8, 128], strides = [1, 1]} : vector<8x148xbf16> to vector<8x128xbf16>
    %c64 = arith.constant 64 : index
    %c0_11 = arith.constant 0 : index
    %20 = vector.load %arg7[%c64, %c0_11] : memref<72x128xbf16, #tpu.memory_space<vmem>>, vector<8x128xbf16>
    tpu.vector_store %arg7[%c64, %c0_11], %19 {strides = array<i32>} : memref<72x128xbf16, #tpu.memory_space<vmem>>, vector<8x128xbf16>,
    %c0_12 = arith.constant 0 : index
    %c0_13 = arith.constant 0 : index
    %21 = vector.load %arg3[%c0_12, %c0_13] : memref<8x72xbf16, #tpu.memory_space<vmem>>, vector<8x72xbf16>
    %c0_14 = arith.constant 0 : index
    %c0_15 = arith.constant 0 : index
    %22 = vector.load %arg7[%c0_14, %c0_15] : memref<72x128xbf16, #tpu.memory_space<vmem>>, vector<72x128xbf16>
    %cst = arith.constant dense<0.000000e+00> : vector<8x128xf32>
    %23 = tpu.matmul %21, %22, %cst {dimension_numbers = #tpu.dot_dimension_numbers<[1], [0], [0], [1], [0, 0, 1, 1], [], []>} : vector<8x72xbf16>, vector<72x128xbf16>, vector<8x128xf32> -> vector<8x128xf32>
    %c0_16 = arith.constant 0 : index
    %c0_17 = arith.constant 0 : index
    %24 = vector.load %arg4[%c0_16, %c0_17] : memref<8x1xf32, #tpu.memory_space<vmem>>, vector<8x1xf32>
    %25 = vector.broadcast %24 : vector<8x1xf32> to vector<8x128xf32>
    %26 = arith.addf %23, %25 : vector<8x128xf32>
    %cst_18 = arith.constant 0.000000e+00 : f32
    %27 = vector.broadcast %cst_18 : f32 to vector<8x128xf32>
    %28 = arith.maximumf %26, %27 : vector<8x128xf32>
    %c0_19 = arith.constant 0 : index
    %c0_20 = arith.constant 0 : index
    %29 = vector.load %arg5[%c0_19, %c0_20] : memref<1x128xf32, #tpu.memory_space<vmem>>, vector<1x128xf32>
    %30 = vector.broadcast %29 : vector<1x128xf32> to vector<8x128xf32>
    %31 = arith.mulf %28, %30 : vector<8x128xf32>
    %c0_21 = arith.constant 0 : index
    %c0_22 = arith.constant 0 : index
    %c0_23 = arith.constant 0 : index
    %32 = vector.load %arg6[%c0_21, %c0_22, %c0_23] : memref<1x8x128xf32, #tpu.memory_space<vmem>>, vector<1x8x128xf32>
    %33 = vector.shape_cast %32 : vector<1x8x128xf32> to vector<8x128xf32>
    %34 = vector.shape_cast %31 : vector<8x128xf32> to vector<1x8x128xf32>
    tpu.vector_store %arg6[%c0_21, %c0_22, %c0_23], %34 {strides = array<i32>} : memref<1x8x128xf32, #tpu.memory_space<vmem>>, vector<1x8x128xf32>,
    return
  }
  func.func @transform_0(%arg0: i32, %arg1: i32) -> (i32, i32, i32) {
    %c0_i32 = arith.constant 0 : i32
    %c0_i32_0 = arith.constant 0 : i32
    %c0_i32_1 = arith.constant 0 : i32
    return %arg0, %c0_i32, %c0_i32_0 : i32, i32, i32
  }
  func.func @transform_1(%arg0: i32, %arg1: i32) -> (i32, i32) {
    %c0_i32 = arith.constant 0 : i32
    %c0_i32_0 = arith.constant 0 : i32
    %c0_i32_1 = arith.constant 0 : i32
    return %c0_i32, %c0_i32_0 : i32, i32
  }
  func.func @transform_2(%arg0: i32, %arg1: i32) -> (i32, i32) {
    %c0_i32 = arith.constant 0 : i32
    %c0_i32_0 = arith.constant 0 : i32
    %c0_i32_1 = arith.constant 0 : i32
    return %c0_i32, %c0_i32_0 : i32, i32
  }
  func.func @transform_3(%arg0: i32, %arg1: i32) -> (i32, i32) {
    %c0_i32 = arith.constant 0 : i32
    %c0_i32_0 = arith.constant 0 : i32
    return %c0_i32, %arg1 : i32, i32
  }
  func.func @transform_4(%arg0: i32, %arg1: i32) -> (i32, i32, i32) {
    %c0_i32 = arith.constant 0 : i32
    %c0_i32_0 = arith.constant 0 : i32
    return %arg0, %c0_i32, %arg1 : i32, i32, i32
  }
}

module attributes {stable_mosaic.version = 11 : i64} {
  func.func @kernel(%arg0: i32, %arg1: i32, %arg2: memref<1x8x390xbf16, #tpu.memory_space<vmem>>, %arg3: memref<1x8x390xbf16, #tpu.memory_space<vmem>>, %arg4: memref<1x8x390xbf16, #tpu.memory_space<vmem>>, %arg5: memref<1x8x390xbf16, #tpu.memory_space<vmem>>, %arg6: memref<8x72xbf16, #tpu.memory_space<vmem>>, %arg7: memref<8x1xf32, #tpu.memory_space<vmem>>, %arg8: memref<1x128xf32, #tpu.memory_space<vmem>>, %arg9: memref<1x8x128xf32, #tpu.memory_space<vmem>>, %arg10: memref<72x128xbf16, #tpu.memory_space<vmem>>) attributes {dimension_semantics = [#tpu.dimension_semantics<parallel>, #tpu.dimension_semantics<parallel>], iteration_bounds = array<i64: 2, 3>, scalar_prefetch = 0 : i64, scratch_operands = 1 : i64, tpu.core_type = #tpu.core_type<tc>, window_params = [{transform_indices = @transform_0, window_bounds = array<i64: 1, 8, 390>}, {transform_indices = @transform_1, window_bounds = array<i64: 1, 8, 390>}, {transform_indices = @transform_2, window_bounds = array<i64: 1, 8, 390>}, {transform_indices = @transform_3, window_bounds = array<i64: 1, 8, 390>}, {pipeline_mode = #tpu.pipeline_mode<synchronous>, transform_indices = @transform_4, window_bounds = array<i64: 8, 72>}, {pipeline_mode = #tpu.pipeline_mode<synchronous>, transform_indices = @transform_5, window_bounds = array<i64: 8, 1>}, {transform_indices = @transform_6, window_bounds = array<i64: 1, 128>}, {transform_indices = @transform_7, window_bounds = array<i64: 1, 8, 128>}]} {
    %c128_i32 = arith.constant 128 : i32
    %0 = arith.muli %arg1, %c128_i32 : i32
    %1 = tpu.assume_multiple %0, 128 : i32
    %c0 = arith.constant 0 : index
    %c0_0 = arith.constant 0 : index
    %2 = arith.index_cast %1 : i32 to index
    %3 = vector.load %arg2[%c0, %c0_0, %2] : memref<1x8x390xbf16, #tpu.memory_space<vmem>>, vector<1x8x134xbf16>
    %4 = vector.shape_cast %3 : vector<1x8x134xbf16> to vector<8x134xbf16>
    %c0_1 = arith.constant 0 : index
    %c0_2 = arith.constant 0 : index
    %5 = arith.index_cast %1 : i32 to index
    %6 = vector.load %arg3[%c0_1, %c0_2, %5] : memref<1x8x390xbf16, #tpu.memory_space<vmem>>, vector<1x8x134xbf16>
    %7 = vector.shape_cast %6 : vector<1x8x134xbf16> to vector<8x134xbf16>
    %c0_3 = arith.constant 0 : index
    %c0_4 = arith.constant 0 : index
    %8 = arith.index_cast %1 : i32 to index
    %9 = vector.load %arg4[%c0_3, %c0_4, %8] : memref<1x8x390xbf16, #tpu.memory_space<vmem>>, vector<1x8x134xbf16>
    %10 = vector.shape_cast %9 : vector<1x8x134xbf16> to vector<8x134xbf16>
    %c0_5 = arith.constant 0 : index
    %c0_6 = arith.constant 0 : index
    %11 = arith.index_cast %1 : i32 to index
    %12 = vector.load %arg5[%c0_5, %c0_6, %11] : memref<1x8x390xbf16, #tpu.memory_space<vmem>>, vector<1x8x134xbf16>
    %13 = vector.shape_cast %12 : vector<1x8x134xbf16> to vector<8x134xbf16>
    %14 = vector.extract_strided_slice %13 {offsets = [0, 0], sizes = [8, 128], strides = [1, 1]} : vector<8x134xbf16> to vector<8x128xbf16>
    %c0_7 = arith.constant 0 : index
    %c0_8 = arith.constant 0 : index
    %15 = vector.load %arg10[%c0_7, %c0_8] : memref<72x128xbf16, #tpu.memory_space<vmem>>, vector<8x128xbf16>
    tpu.vector_store %arg10[%c0_7, %c0_8], %14 {strides = array<i32>} : memref<72x128xbf16, #tpu.memory_space<vmem>>, vector<8x128xbf16>,
    %16 = vector.extract_strided_slice %10 {offsets = [0, 1], sizes = [8, 128], strides = [1, 1]} : vector<8x134xbf16> to vector<8x128xbf16>
    %c8 = arith.constant 8 : index
    %c0_9 = arith.constant 0 : index
    %17 = vector.load %arg10[%c8, %c0_9] : memref<72x128xbf16, #tpu.memory_space<vmem>>, vector<8x128xbf16>
    tpu.vector_store %arg10[%c8, %c0_9], %16 {strides = array<i32>} : memref<72x128xbf16, #tpu.memory_space<vmem>>, vector<8x128xbf16>,
    %18 = vector.extract_strided_slice %13 {offsets = [0, 1], sizes = [8, 128], strides = [1, 1]} : vector<8x134xbf16> to vector<8x128xbf16>
    %c16 = arith.constant 16 : index
    %c0_10 = arith.constant 0 : index
    %19 = vector.load %arg10[%c16, %c0_10] : memref<72x128xbf16, #tpu.memory_space<vmem>>, vector<8x128xbf16>
    tpu.vector_store %arg10[%c16, %c0_10], %18 {strides = array<i32>} : memref<72x128xbf16, #tpu.memory_space<vmem>>, vector<8x128xbf16>,
    %20 = vector.extract_strided_slice %7 {offsets = [0, 5], sizes = [8, 128], strides = [1, 1]} : vector<8x134xbf16> to vector<8x128xbf16>
    %c24 = arith.constant 24 : index
    %c0_11 = arith.constant 0 : index
    %21 = vector.load %arg10[%c24, %c0_11] : memref<72x128xbf16, #tpu.memory_space<vmem>>, vector<8x128xbf16>
    tpu.vector_store %arg10[%c24, %c0_11], %20 {strides = array<i32>} : memref<72x128xbf16, #tpu.memory_space<vmem>>, vector<8x128xbf16>,
    %22 = vector.extract_strided_slice %4 {offsets = [0, 6], sizes = [8, 128], strides = [1, 1]} : vector<8x134xbf16> to vector<8x128xbf16>
    %c32 = arith.constant 32 : index
    %c0_12 = arith.constant 0 : index
    %23 = vector.load %arg10[%c32, %c0_12] : memref<72x128xbf16, #tpu.memory_space<vmem>>, vector<8x128xbf16>
    tpu.vector_store %arg10[%c32, %c0_12], %22 {strides = array<i32>} : memref<72x128xbf16, #tpu.memory_space<vmem>>, vector<8x128xbf16>,
    %24 = vector.extract_strided_slice %7 {offsets = [0, 6], sizes = [8, 128], strides = [1, 1]} : vector<8x134xbf16> to vector<8x128xbf16>
    %c40 = arith.constant 40 : index
    %c0_13 = arith.constant 0 : index
    %25 = vector.load %arg10[%c40, %c0_13] : memref<72x128xbf16, #tpu.memory_space<vmem>>, vector<8x128xbf16>
    tpu.vector_store %arg10[%c40, %c0_13], %24 {strides = array<i32>} : memref<72x128xbf16, #tpu.memory_space<vmem>>, vector<8x128xbf16>,
    %26 = vector.extract_strided_slice %13 {offsets = [0, 5], sizes = [8, 128], strides = [1, 1]} : vector<8x134xbf16> to vector<8x128xbf16>
    %c48 = arith.constant 48 : index
    %c0_14 = arith.constant 0 : index
    %27 = vector.load %arg10[%c48, %c0_14] : memref<72x128xbf16, #tpu.memory_space<vmem>>, vector<8x128xbf16>
    tpu.vector_store %arg10[%c48, %c0_14], %26 {strides = array<i32>} : memref<72x128xbf16, #tpu.memory_space<vmem>>, vector<8x128xbf16>,
    %28 = vector.extract_strided_slice %10 {offsets = [0, 6], sizes = [8, 128], strides = [1, 1]} : vector<8x134xbf16> to vector<8x128xbf16>
    %c56 = arith.constant 56 : index
    %c0_15 = arith.constant 0 : index
    %29 = vector.load %arg10[%c56, %c0_15] : memref<72x128xbf16, #tpu.memory_space<vmem>>, vector<8x128xbf16>
    tpu.vector_store %arg10[%c56, %c0_15], %28 {strides = array<i32>} : memref<72x128xbf16, #tpu.memory_space<vmem>>, vector<8x128xbf16>,
    %30 = vector.extract_strided_slice %13 {offsets = [0, 6], sizes = [8, 128], strides = [1, 1]} : vector<8x134xbf16> to vector<8x128xbf16>
    %c64 = arith.constant 64 : index
    %c0_16 = arith.constant 0 : index
    %31 = vector.load %arg10[%c64, %c0_16] : memref<72x128xbf16, #tpu.memory_space<vmem>>, vector<8x128xbf16>
    tpu.vector_store %arg10[%c64, %c0_16], %30 {strides = array<i32>} : memref<72x128xbf16, #tpu.memory_space<vmem>>, vector<8x128xbf16>,
    %c0_17 = arith.constant 0 : index
    %c0_18 = arith.constant 0 : index
    %32 = vector.load %arg6[%c0_17, %c0_18] : memref<8x72xbf16, #tpu.memory_space<vmem>>, vector<8x72xbf16>
    %c0_19 = arith.constant 0 : index
    %c0_20 = arith.constant 0 : index
    %33 = vector.load %arg10[%c0_19, %c0_20] : memref<72x128xbf16, #tpu.memory_space<vmem>>, vector<72x128xbf16>
    %cst = arith.constant dense<0.000000e+00> : vector<8x128xf32>
    %34 = tpu.matmul %32, %33, %cst {dimension_numbers = #tpu.dot_dimension_numbers<[1], [0], [0], [1], [0, 0, 1, 1], [], []>} : vector<8x72xbf16>, vector<72x128xbf16>, vector<8x128xf32> -> vector<8x128xf32>
    %c0_21 = arith.constant 0 : index
    %c0_22 = arith.constant 0 : index
    %35 = vector.load %arg7[%c0_21, %c0_22] : memref<8x1xf32, #tpu.memory_space<vmem>>, vector<8x1xf32>
    %36 = vector.broadcast %35 : vector<8x1xf32> to vector<8x128xf32>
    %37 = arith.addf %34, %36 : vector<8x128xf32>
    %cst_23 = arith.constant 0.000000e+00 : f32
    %38 = vector.broadcast %cst_23 : f32 to vector<8x128xf32>
    %39 = arith.maximumf %37, %38 : vector<8x128xf32>
    %c0_24 = arith.constant 0 : index
    %c0_25 = arith.constant 0 : index
    %40 = vector.load %arg8[%c0_24, %c0_25] : memref<1x128xf32, #tpu.memory_space<vmem>>, vector<1x128xf32>
    %41 = vector.broadcast %40 : vector<1x128xf32> to vector<8x128xf32>
    %42 = arith.mulf %39, %41 : vector<8x128xf32>
    %c0_26 = arith.constant 0 : index
    %c0_27 = arith.constant 0 : index
    %c0_28 = arith.constant 0 : index
    %43 = vector.load %arg9[%c0_26, %c0_27, %c0_28] : memref<1x8x128xf32, #tpu.memory_space<vmem>>, vector<1x8x128xf32>
    %44 = vector.shape_cast %43 : vector<1x8x128xf32> to vector<8x128xf32>
    %45 = vector.shape_cast %42 : vector<8x128xf32> to vector<1x8x128xf32>
    tpu.vector_store %arg9[%c0_26, %c0_27, %c0_28], %45 {strides = array<i32>} : memref<1x8x128xf32, #tpu.memory_space<vmem>>, vector<1x8x128xf32>,
    return
  }
  func.func @transform_0(%arg0: i32, %arg1: i32) -> (i32, i32, i32) {
    %c0_i32 = arith.constant 0 : i32
    %c0_i32_0 = arith.constant 0 : i32
    %c0_i32_1 = arith.constant 0 : i32
    return %arg0, %c0_i32, %c0_i32_0 : i32, i32, i32
  }
  func.func @transform_1(%arg0: i32, %arg1: i32) -> (i32, i32, i32) {
    %c0_i32 = arith.constant 0 : i32
    %c0_i32_0 = arith.constant 0 : i32
    %c0_i32_1 = arith.constant 0 : i32
    return %arg0, %c0_i32, %c0_i32_0 : i32, i32, i32
  }
  func.func @transform_2(%arg0: i32, %arg1: i32) -> (i32, i32, i32) {
    %c0_i32 = arith.constant 0 : i32
    %c0_i32_0 = arith.constant 0 : i32
    %c0_i32_1 = arith.constant 0 : i32
    return %arg0, %c0_i32, %c0_i32_0 : i32, i32, i32
  }
  func.func @transform_3(%arg0: i32, %arg1: i32) -> (i32, i32, i32) {
    %c0_i32 = arith.constant 0 : i32
    %c0_i32_0 = arith.constant 0 : i32
    %c0_i32_1 = arith.constant 0 : i32
    return %arg0, %c0_i32, %c0_i32_0 : i32, i32, i32
  }
  func.func @transform_4(%arg0: i32, %arg1: i32) -> (i32, i32) {
    %c0_i32 = arith.constant 0 : i32
    %c0_i32_0 = arith.constant 0 : i32
    %c0_i32_1 = arith.constant 0 : i32
    return %c0_i32, %c0_i32_0 : i32, i32
  }
  func.func @transform_5(%arg0: i32, %arg1: i32) -> (i32, i32) {
    %c0_i32 = arith.constant 0 : i32
    %c0_i32_0 = arith.constant 0 : i32
    %c0_i32_1 = arith.constant 0 : i32
    return %c0_i32, %c0_i32_0 : i32, i32
  }
  func.func @transform_6(%arg0: i32, %arg1: i32) -> (i32, i32) {
    %c0_i32 = arith.constant 0 : i32
    %c0_i32_0 = arith.constant 0 : i32
    return %c0_i32, %arg1 : i32, i32
  }
  func.func @transform_7(%arg0: i32, %arg1: i32) -> (i32, i32, i32) {
    %c0_i32 = arith.constant 0 : i32
    %c0_i32_0 = arith.constant 0 : i32
    return %arg0, %c0_i32, %arg1 : i32, i32, i32
  }
}

module attributes {stable_mosaic.version = 11 : i64} {
  func.func @kernel(%arg0: i32, %arg1: i32, %arg2: memref<1x8x384xf32, #tpu.memory_space<vmem>>, %arg3: memref<8x72xbf16, #tpu.memory_space<vmem>>, %arg4: memref<8x1xf32, #tpu.memory_space<vmem>>, %arg5: memref<1x128xf32, #tpu.memory_space<vmem>>, %arg6: memref<1x8x128xf32, #tpu.memory_space<vmem>>, %arg7: memref<72x128xbf16, #tpu.memory_space<vmem>>) attributes {dimension_semantics = [#tpu.dimension_semantics<parallel>, #tpu.dimension_semantics<parallel>], iteration_bounds = array<i64: 2, 2>, scalar_prefetch = 0 : i64, scratch_operands = 1 : i64, tpu.core_type = #tpu.core_type<tc>, window_params = [{transform_indices = @transform_0, window_bounds = array<i64: 1, 8, 384>}, {pipeline_mode = #tpu.pipeline_mode<synchronous>, transform_indices = @transform_1, window_bounds = array<i64: 8, 72>}, {pipeline_mode = #tpu.pipeline_mode<synchronous>, transform_indices = @transform_2, window_bounds = array<i64: 8, 1>}, {transform_indices = @transform_3, window_bounds = array<i64: 1, 128>}, {transform_indices = @transform_4, window_bounds = array<i64: 1, 8, 128>}]} {
    %c128_i32 = arith.constant 128 : i32
    %0 = arith.muli %arg1, %c128_i32 : i32
    %1 = tpu.assume_multiple %0, 128 : i32
    %c0 = arith.constant 0 : index
    %c0_0 = arith.constant 0 : index
    %2 = arith.index_cast %1 : i32 to index
    %3 = vector.load %arg2[%c0, %c0_0, %2] : memref<1x8x384xf32, #tpu.memory_space<vmem>>, vector<1x8x140xf32>
    %4 = vector.shape_cast %3 : vector<1x8x140xf32> to vector<8x140xf32>
    %5 = arith.truncf %4 : vector<8x140xf32> to vector<8x140xbf16>
    %6 = vector.extract_strided_slice %5 {offsets = [0, 0], sizes = [8, 128], strides = [1, 1]} : vector<8x140xbf16> to vector<8x128xbf16>
    %c0_1 = arith.constant 0 : index
    %c0_2 = arith.constant 0 : index
    %7 = vector.load %arg7[%c0_1, %c0_2] : memref<72x128xbf16, #tpu.memory_space<vmem>>, vector<8x128xbf16>
    tpu.vector_store %arg7[%c0_1, %c0_2], %6 {strides = array<i32>} : memref<72x128xbf16, #tpu.memory_space<vmem>>, vector<8x128xbf16>,
    %8 = vector.extract_strided_slice %5 {offsets = [0, 1], sizes = [8, 128], strides = [1, 1]} : vector<8x140xbf16> to vector<8x128xbf16>
    %c8 = arith.constant 8 : index
    %c0_3 = arith.constant 0 : index
    %9 = vector.load %arg7[%c8, %c0_3] : memref<72x128xbf16, #tpu.memory_space<vmem>>, vector<8x128xbf16>
    tpu.vector_store %arg7[%c8, %c0_3], %8 {strides = array<i32>} : memref<72x128xbf16, #tpu.memory_space<vmem>>, vector<8x128xbf16>,
    %10 = vector.extract_strided_slice %5 {offsets = [0, 2], sizes = [8, 128], strides = [1, 1]} : vector<8x140xbf16> to vector<8x128xbf16>
    %c16 = arith.constant 16 : index
    %c0_4 = arith.constant 0 : index
    %11 = vector.load %arg7[%c16, %c0_4] : memref<72x128xbf16, #tpu.memory_space<vmem>>, vector<8x128xbf16>
    tpu.vector_store %arg7[%c16, %c0_4], %10 {strides = array<i32>} : memref<72x128xbf16, #tpu.memory_space<vmem>>, vector<8x128xbf16>,
    %12 = vector.extract_strided_slice %5 {offsets = [0, 5], sizes = [8, 128], strides = [1, 1]} : vector<8x140xbf16> to vector<8x128xbf16>
    %c24 = arith.constant 24 : index
    %c0_5 = arith.constant 0 : index
    %13 = vector.load %arg7[%c24, %c0_5] : memref<72x128xbf16, #tpu.memory_space<vmem>>, vector<8x128xbf16>
    tpu.vector_store %arg7[%c24, %c0_5], %12 {strides = array<i32>} : memref<72x128xbf16, #tpu.memory_space<vmem>>, vector<8x128xbf16>,
    %14 = vector.extract_strided_slice %5 {offsets = [0, 6], sizes = [8, 128], strides = [1, 1]} : vector<8x140xbf16> to vector<8x128xbf16>
    %c32 = arith.constant 32 : index
    %c0_6 = arith.constant 0 : index
    %15 = vector.load %arg7[%c32, %c0_6] : memref<72x128xbf16, #tpu.memory_space<vmem>>, vector<8x128xbf16>
    tpu.vector_store %arg7[%c32, %c0_6], %14 {strides = array<i32>} : memref<72x128xbf16, #tpu.memory_space<vmem>>, vector<8x128xbf16>,
    %16 = vector.extract_strided_slice %5 {offsets = [0, 7], sizes = [8, 128], strides = [1, 1]} : vector<8x140xbf16> to vector<8x128xbf16>
    %c40 = arith.constant 40 : index
    %c0_7 = arith.constant 0 : index
    %17 = vector.load %arg7[%c40, %c0_7] : memref<72x128xbf16, #tpu.memory_space<vmem>>, vector<8x128xbf16>
    tpu.vector_store %arg7[%c40, %c0_7], %16 {strides = array<i32>} : memref<72x128xbf16, #tpu.memory_space<vmem>>, vector<8x128xbf16>,
    %18 = vector.extract_strided_slice %5 {offsets = [0, 10], sizes = [8, 128], strides = [1, 1]} : vector<8x140xbf16> to vector<8x128xbf16>
    %c48 = arith.constant 48 : index
    %c0_8 = arith.constant 0 : index
    %19 = vector.load %arg7[%c48, %c0_8] : memref<72x128xbf16, #tpu.memory_space<vmem>>, vector<8x128xbf16>
    tpu.vector_store %arg7[%c48, %c0_8], %18 {strides = array<i32>} : memref<72x128xbf16, #tpu.memory_space<vmem>>, vector<8x128xbf16>,
    %20 = vector.extract_strided_slice %5 {offsets = [0, 11], sizes = [8, 128], strides = [1, 1]} : vector<8x140xbf16> to vector<8x128xbf16>
    %c56 = arith.constant 56 : index
    %c0_9 = arith.constant 0 : index
    %21 = vector.load %arg7[%c56, %c0_9] : memref<72x128xbf16, #tpu.memory_space<vmem>>, vector<8x128xbf16>
    tpu.vector_store %arg7[%c56, %c0_9], %20 {strides = array<i32>} : memref<72x128xbf16, #tpu.memory_space<vmem>>, vector<8x128xbf16>,
    %22 = vector.extract_strided_slice %5 {offsets = [0, 12], sizes = [8, 128], strides = [1, 1]} : vector<8x140xbf16> to vector<8x128xbf16>
    %c64 = arith.constant 64 : index
    %c0_10 = arith.constant 0 : index
    %23 = vector.load %arg7[%c64, %c0_10] : memref<72x128xbf16, #tpu.memory_space<vmem>>, vector<8x128xbf16>
    tpu.vector_store %arg7[%c64, %c0_10], %22 {strides = array<i32>} : memref<72x128xbf16, #tpu.memory_space<vmem>>, vector<8x128xbf16>,
    %c0_11 = arith.constant 0 : index
    %c0_12 = arith.constant 0 : index
    %24 = vector.load %arg3[%c0_11, %c0_12] : memref<8x72xbf16, #tpu.memory_space<vmem>>, vector<8x72xbf16>
    %c0_13 = arith.constant 0 : index
    %c0_14 = arith.constant 0 : index
    %25 = vector.load %arg7[%c0_13, %c0_14] : memref<72x128xbf16, #tpu.memory_space<vmem>>, vector<72x128xbf16>
    %cst = arith.constant dense<0.000000e+00> : vector<8x128xf32>
    %26 = tpu.matmul %24, %25, %cst {dimension_numbers = #tpu.dot_dimension_numbers<[1], [0], [0], [1], [0, 0, 1, 1], [], []>} : vector<8x72xbf16>, vector<72x128xbf16>, vector<8x128xf32> -> vector<8x128xf32>
    %c0_15 = arith.constant 0 : index
    %c0_16 = arith.constant 0 : index
    %27 = vector.load %arg4[%c0_15, %c0_16] : memref<8x1xf32, #tpu.memory_space<vmem>>, vector<8x1xf32>
    %28 = vector.broadcast %27 : vector<8x1xf32> to vector<8x128xf32>
    %29 = arith.addf %26, %28 : vector<8x128xf32>
    %cst_17 = arith.constant 0.000000e+00 : f32
    %30 = vector.broadcast %cst_17 : f32 to vector<8x128xf32>
    %31 = arith.maximumf %29, %30 : vector<8x128xf32>
    %c0_18 = arith.constant 0 : index
    %c0_19 = arith.constant 0 : index
    %32 = vector.load %arg5[%c0_18, %c0_19] : memref<1x128xf32, #tpu.memory_space<vmem>>, vector<1x128xf32>
    %33 = vector.broadcast %32 : vector<1x128xf32> to vector<8x128xf32>
    %34 = arith.mulf %31, %33 : vector<8x128xf32>
    %c0_20 = arith.constant 0 : index
    %c0_21 = arith.constant 0 : index
    %c0_22 = arith.constant 0 : index
    %35 = vector.load %arg6[%c0_20, %c0_21, %c0_22] : memref<1x8x128xf32, #tpu.memory_space<vmem>>, vector<1x8x128xf32>
    %36 = vector.shape_cast %35 : vector<1x8x128xf32> to vector<8x128xf32>
    %37 = vector.shape_cast %34 : vector<8x128xf32> to vector<1x8x128xf32>
    tpu.vector_store %arg6[%c0_20, %c0_21, %c0_22], %37 {strides = array<i32>} : memref<1x8x128xf32, #tpu.memory_space<vmem>>, vector<1x8x128xf32>,
    return
  }
  func.func @transform_0(%arg0: i32, %arg1: i32) -> (i32, i32, i32) {
    %c0_i32 = arith.constant 0 : i32
    %c0_i32_0 = arith.constant 0 : i32
    %c0_i32_1 = arith.constant 0 : i32
    return %arg0, %c0_i32, %c0_i32_0 : i32, i32, i32
  }
  func.func @transform_1(%arg0: i32, %arg1: i32) -> (i32, i32) {
    %c0_i32 = arith.constant 0 : i32
    %c0_i32_0 = arith.constant 0 : i32
    %c0_i32_1 = arith.constant 0 : i32
    return %c0_i32, %c0_i32_0 : i32, i32
  }
  func.func @transform_2(%arg0: i32, %arg1: i32) -> (i32, i32) {
    %c0_i32 = arith.constant 0 : i32
    %c0_i32_0 = arith.constant 0 : i32
    %c0_i32_1 = arith.constant 0 : i32
    return %c0_i32, %c0_i32_0 : i32, i32
  }
  func.func @transform_3(%arg0: i32, %arg1: i32) -> (i32, i32) {
    %c0_i32 = arith.constant 0 : i32
    %c0_i32_0 = arith.constant 0 : i32
    return %c0_i32, %arg1 : i32, i32
  }
  func.func @transform_4(%arg0: i32, %arg1: i32) -> (i32, i32, i32) {
    %c0_i32 = arith.constant 0 : i32
    %c0_i32_0 = arith.constant 0 : i32
    return %arg0, %c0_i32, %arg1 : i32, i32, i32
  }
}

module attributes {stable_mosaic.version = 11 : i64} {
  func.func @kernel(%arg0: i32, %arg1: i32, %arg2: memref<1x8x256xf32, #tpu.memory_space<vmem>>, %arg3: memref<8x72xbf16, #tpu.memory_space<vmem>>, %arg4: memref<8x1xf32, #tpu.memory_space<vmem>>, %arg5: memref<1x128xf32, #tpu.memory_space<vmem>>, %arg6: memref<1x8x128xf32, #tpu.memory_space<vmem>>, %arg7: memref<72x128xbf16, #tpu.memory_space<vmem>>) attributes {dimension_semantics = [#tpu.dimension_semantics<parallel>, #tpu.dimension_semantics<parallel>], iteration_bounds = array<i64: 2, 1>, scalar_prefetch = 0 : i64, scratch_operands = 1 : i64, tpu.core_type = #tpu.core_type<tc>, window_params = [{transform_indices = @transform_0, window_bounds = array<i64: 1, 8, 256>}, {pipeline_mode = #tpu.pipeline_mode<synchronous>, transform_indices = @transform_1, window_bounds = array<i64: 8, 72>}, {pipeline_mode = #tpu.pipeline_mode<synchronous>, transform_indices = @transform_2, window_bounds = array<i64: 8, 1>}, {transform_indices = @transform_3, window_bounds = array<i64: 1, 128>}, {transform_indices = @transform_4, window_bounds = array<i64: 1, 8, 128>}]} {
    %c0 = arith.constant 0 : index
    %c0_0 = arith.constant 0 : index
    %c0_1 = arith.constant 0 : index
    %0 = vector.load %arg2[%c0, %c0_0, %c0_1] : memref<1x8x256xf32, #tpu.memory_space<vmem>>, vector<1x8x140xf32>
    %1 = vector.shape_cast %0 : vector<1x8x140xf32> to vector<8x140xf32>
    %2 = arith.truncf %1 : vector<8x140xf32> to vector<8x140xbf16>
    %3 = vector.extract_strided_slice %2 {offsets = [0, 0], sizes = [8, 128], strides = [1, 1]} : vector<8x140xbf16> to vector<8x128xbf16>
    %c0_2 = arith.constant 0 : index
    %c0_3 = arith.constant 0 : index
    %4 = vector.load %arg7[%c0_2, %c0_3] : memref<72x128xbf16, #tpu.memory_space<vmem>>, vector<8x128xbf16>
    tpu.vector_store %arg7[%c0_2, %c0_3], %3 {strides = array<i32>} : memref<72x128xbf16, #tpu.memory_space<vmem>>, vector<8x128xbf16>,
    %5 = vector.extract_strided_slice %2 {offsets = [0, 1], sizes = [8, 128], strides = [1, 1]} : vector<8x140xbf16> to vector<8x128xbf16>
    %c8 = arith.constant 8 : index
    %c0_4 = arith.constant 0 : index
    %6 = vector.load %arg7[%c8, %c0_4] : memref<72x128xbf16, #tpu.memory_space<vmem>>, vector<8x128xbf16>
    tpu.vector_store %arg7[%c8, %c0_4], %5 {strides = array<i32>} : memref<72x128xbf16, #tpu.memory_space<vmem>>, vector<8x128xbf16>,
    %7 = vector.extract_strided_slice %2 {offsets = [0, 2], sizes = [8, 128], strides = [1, 1]} : vector<8x140xbf16> to vector<8x128xbf16>
    %c16 = arith.constant 16 : index
    %c0_5 = arith.constant 0 : index
    %8 = vector.load %arg7[%c16, %c0_5] : memref<72x128xbf16, #tpu.memory_space<vmem>>, vector<8x128xbf16>
    tpu.vector_store %arg7[%c16, %c0_5], %7 {strides = array<i32>} : memref<72x128xbf16, #tpu.memory_space<vmem>>, vector<8x128xbf16>,
    %9 = vector.extract_strided_slice %2 {offsets = [0, 5], sizes = [8, 128], strides = [1, 1]} : vector<8x140xbf16> to vector<8x128xbf16>
    %c24 = arith.constant 24 : index
    %c0_6 = arith.constant 0 : index
    %10 = vector.load %arg7[%c24, %c0_6] : memref<72x128xbf16, #tpu.memory_space<vmem>>, vector<8x128xbf16>
    tpu.vector_store %arg7[%c24, %c0_6], %9 {strides = array<i32>} : memref<72x128xbf16, #tpu.memory_space<vmem>>, vector<8x128xbf16>,
    %11 = vector.extract_strided_slice %2 {offsets = [0, 6], sizes = [8, 128], strides = [1, 1]} : vector<8x140xbf16> to vector<8x128xbf16>
    %c32 = arith.constant 32 : index
    %c0_7 = arith.constant 0 : index
    %12 = vector.load %arg7[%c32, %c0_7] : memref<72x128xbf16, #tpu.memory_space<vmem>>, vector<8x128xbf16>
    tpu.vector_store %arg7[%c32, %c0_7], %11 {strides = array<i32>} : memref<72x128xbf16, #tpu.memory_space<vmem>>, vector<8x128xbf16>,
    %13 = vector.extract_strided_slice %2 {offsets = [0, 7], sizes = [8, 128], strides = [1, 1]} : vector<8x140xbf16> to vector<8x128xbf16>
    %c40 = arith.constant 40 : index
    %c0_8 = arith.constant 0 : index
    %14 = vector.load %arg7[%c40, %c0_8] : memref<72x128xbf16, #tpu.memory_space<vmem>>, vector<8x128xbf16>
    tpu.vector_store %arg7[%c40, %c0_8], %13 {strides = array<i32>} : memref<72x128xbf16, #tpu.memory_space<vmem>>, vector<8x128xbf16>,
    %15 = vector.extract_strided_slice %2 {offsets = [0, 10], sizes = [8, 128], strides = [1, 1]} : vector<8x140xbf16> to vector<8x128xbf16>
    %c48 = arith.constant 48 : index
    %c0_9 = arith.constant 0 : index
    %16 = vector.load %arg7[%c48, %c0_9] : memref<72x128xbf16, #tpu.memory_space<vmem>>, vector<8x128xbf16>
    tpu.vector_store %arg7[%c48, %c0_9], %15 {strides = array<i32>} : memref<72x128xbf16, #tpu.memory_space<vmem>>, vector<8x128xbf16>,
    %17 = vector.extract_strided_slice %2 {offsets = [0, 11], sizes = [8, 128], strides = [1, 1]} : vector<8x140xbf16> to vector<8x128xbf16>
    %c56 = arith.constant 56 : index
    %c0_10 = arith.constant 0 : index
    %18 = vector.load %arg7[%c56, %c0_10] : memref<72x128xbf16, #tpu.memory_space<vmem>>, vector<8x128xbf16>
    tpu.vector_store %arg7[%c56, %c0_10], %17 {strides = array<i32>} : memref<72x128xbf16, #tpu.memory_space<vmem>>, vector<8x128xbf16>,
    %19 = vector.extract_strided_slice %2 {offsets = [0, 12], sizes = [8, 128], strides = [1, 1]} : vector<8x140xbf16> to vector<8x128xbf16>
    %c64 = arith.constant 64 : index
    %c0_11 = arith.constant 0 : index
    %20 = vector.load %arg7[%c64, %c0_11] : memref<72x128xbf16, #tpu.memory_space<vmem>>, vector<8x128xbf16>
    tpu.vector_store %arg7[%c64, %c0_11], %19 {strides = array<i32>} : memref<72x128xbf16, #tpu.memory_space<vmem>>, vector<8x128xbf16>,
    %c0_12 = arith.constant 0 : index
    %c0_13 = arith.constant 0 : index
    %21 = vector.load %arg3[%c0_12, %c0_13] : memref<8x72xbf16, #tpu.memory_space<vmem>>, vector<8x72xbf16>
    %c0_14 = arith.constant 0 : index
    %c0_15 = arith.constant 0 : index
    %22 = vector.load %arg7[%c0_14, %c0_15] : memref<72x128xbf16, #tpu.memory_space<vmem>>, vector<72x128xbf16>
    %cst = arith.constant dense<0.000000e+00> : vector<8x128xf32>
    %23 = tpu.matmul %21, %22, %cst {dimension_numbers = #tpu.dot_dimension_numbers<[1], [0], [0], [1], [0, 0, 1, 1], [], []>} : vector<8x72xbf16>, vector<72x128xbf16>, vector<8x128xf32> -> vector<8x128xf32>
    %c0_16 = arith.constant 0 : index
    %c0_17 = arith.constant 0 : index
    %24 = vector.load %arg4[%c0_16, %c0_17] : memref<8x1xf32, #tpu.memory_space<vmem>>, vector<8x1xf32>
    %25 = vector.broadcast %24 : vector<8x1xf32> to vector<8x128xf32>
    %26 = arith.addf %23, %25 : vector<8x128xf32>
    %cst_18 = arith.constant 0.000000e+00 : f32
    %27 = vector.broadcast %cst_18 : f32 to vector<8x128xf32>
    %28 = arith.maximumf %26, %27 : vector<8x128xf32>
    %c0_19 = arith.constant 0 : index
    %c0_20 = arith.constant 0 : index
    %29 = vector.load %arg5[%c0_19, %c0_20] : memref<1x128xf32, #tpu.memory_space<vmem>>, vector<1x128xf32>
    %30 = vector.broadcast %29 : vector<1x128xf32> to vector<8x128xf32>
    %31 = arith.mulf %28, %30 : vector<8x128xf32>
    %c0_21 = arith.constant 0 : index
    %c0_22 = arith.constant 0 : index
    %c0_23 = arith.constant 0 : index
    %32 = vector.load %arg6[%c0_21, %c0_22, %c0_23] : memref<1x8x128xf32, #tpu.memory_space<vmem>>, vector<1x8x128xf32>
    %33 = vector.shape_cast %32 : vector<1x8x128xf32> to vector<8x128xf32>
    %34 = vector.shape_cast %31 : vector<8x128xf32> to vector<1x8x128xf32>
    tpu.vector_store %arg6[%c0_21, %c0_22, %c0_23], %34 {strides = array<i32>} : memref<1x8x128xf32, #tpu.memory_space<vmem>>, vector<1x8x128xf32>,
    return
  }
  func.func @transform_0(%arg0: i32, %arg1: i32) -> (i32, i32, i32) {
    %c0_i32 = arith.constant 0 : i32
    %c0_i32_0 = arith.constant 0 : i32
    %c0_i32_1 = arith.constant 0 : i32
    return %arg0, %c0_i32, %c0_i32_0 : i32, i32, i32
  }
  func.func @transform_1(%arg0: i32, %arg1: i32) -> (i32, i32) {
    %c0_i32 = arith.constant 0 : i32
    %c0_i32_0 = arith.constant 0 : i32
    %c0_i32_1 = arith.constant 0 : i32
    return %c0_i32, %c0_i32_0 : i32, i32
  }
  func.func @transform_2(%arg0: i32, %arg1: i32) -> (i32, i32) {
    %c0_i32 = arith.constant 0 : i32
    %c0_i32_0 = arith.constant 0 : i32
    %c0_i32_1 = arith.constant 0 : i32
    return %c0_i32, %c0_i32_0 : i32, i32
  }
  func.func @transform_3(%arg0: i32, %arg1: i32) -> (i32, i32) {
    %c0_i32 = arith.constant 0 : i32
    %c0_i32_0 = arith.constant 0 : i32
    return %c0_i32, %arg1 : i32, i32
  }
  func.func @transform_4(%arg0: i32, %arg1: i32) -> (i32, i32, i32) {
    %c0_i32 = arith.constant 0 : i32
    %c0_i32_0 = arith.constant 0 : i32
    return %arg0, %c0_i32, %arg1 : i32, i32, i32
  }
}

module attributes {stable_mosaic.version = 11 : i64} {
  func.func @kernel(%arg0: i32, %arg1: i32, %arg2: memref<1x16x384xbf16, #tpu.memory_space<vmem>>, %arg3: memref<16x144xbf16, #tpu.memory_space<vmem>>, %arg4: memref<16x1xf32, #tpu.memory_space<vmem>>, %arg5: memref<1x128xf32, #tpu.memory_space<vmem>>, %arg6: memref<1x16x128xbf16, #tpu.memory_space<vmem>>, %arg7: memref<144x128xbf16, #tpu.memory_space<vmem>>) attributes {dimension_semantics = [#tpu.dimension_semantics<parallel>, #tpu.dimension_semantics<parallel>], iteration_bounds = array<i64: 2, 2>, scalar_prefetch = 0 : i64, scratch_operands = 1 : i64, tpu.core_type = #tpu.core_type<tc>, window_params = [{transform_indices = @transform_0, window_bounds = array<i64: 1, 16, 384>}, {pipeline_mode = #tpu.pipeline_mode<synchronous>, transform_indices = @transform_1, window_bounds = array<i64: 16, 144>}, {pipeline_mode = #tpu.pipeline_mode<synchronous>, transform_indices = @transform_2, window_bounds = array<i64: 16, 1>}, {transform_indices = @transform_3, window_bounds = array<i64: 1, 128>}, {transform_indices = @transform_4, window_bounds = array<i64: 1, 16, 128>}]} {
    %c128_i32 = arith.constant 128 : i32
    %0 = arith.muli %arg1, %c128_i32 : i32
    %1 = tpu.assume_multiple %0, 128 : i32
    %c0 = arith.constant 0 : index
    %c0_0 = arith.constant 0 : index
    %2 = arith.index_cast %1 : i32 to index
    %3 = vector.load %arg2[%c0, %c0_0, %2] : memref<1x16x384xbf16, #tpu.memory_space<vmem>>, vector<1x16x136xbf16>
    %4 = vector.shape_cast %3 : vector<1x16x136xbf16> to vector<16x136xbf16>
    %5 = vector.extract_strided_slice %4 {offsets = [0, 0], sizes = [16, 128], strides = [1, 1]} : vector<16x136xbf16> to vector<16x128xbf16>
    %c0_1 = arith.constant 0 : index
    %c0_2 = arith.constant 0 : index
    %6 = vector.load %arg7[%c0_1, %c0_2] : memref<144x128xbf16, #tpu.memory_space<vmem>>, vector<16x128xbf16>
    tpu.vector_store %arg7[%c0_1, %c0_2], %5 {strides = array<i32>} : memref<144x128xbf16, #tpu.memory_space<vmem>>, vector<16x128xbf16>,
    %7 = vector.extract_strided_slice %4 {offsets = [0, 1], sizes = [16, 128], strides = [1, 1]} : vector<16x136xbf16> to vector<16x128xbf16>
    %c16 = arith.constant 16 : index
    %c0_3 = arith.constant 0 : index
    %8 = vector.load %arg7[%c16, %c0_3] : memref<144x128xbf16, #tpu.memory_space<vmem>>, vector<16x128xbf16>
    tpu.vector_store %arg7[%c16, %c0_3], %7 {strides = array<i32>} : memref<144x128xbf16, #tpu.memory_space<vmem>>, vector<16x128xbf16>,
    %9 = vector.extract_strided_slice %4 {offsets = [0, 2], sizes = [16, 128], strides = [1, 1]} : vector<16x136xbf16> to vector<16x128xbf16>
    %c32 = arith.constant 32 : index
    %c0_4 = arith.constant 0 : index
    %10 = vector.load %arg7[%c32, %c0_4] : memref<144x128xbf16, #tpu.memory_space<vmem>>, vector<16x128xbf16>
    tpu.vector_store %arg7[%c32, %c0_4], %9 {strides = array<i32>} : memref<144x128xbf16, #tpu.memory_space<vmem>>, vector<16x128xbf16>,
    %11 = vector.extract_strided_slice %4 {offsets = [0, 3], sizes = [16, 128], strides = [1, 1]} : vector<16x136xbf16> to vector<16x128xbf16>
    %c48 = arith.constant 48 : index
    %c0_5 = arith.constant 0 : index
    %12 = vector.load %arg7[%c48, %c0_5] : memref<144x128xbf16, #tpu.memory_space<vmem>>, vector<16x128xbf16>
    tpu.vector_store %arg7[%c48, %c0_5], %11 {strides = array<i32>} : memref<144x128xbf16, #tpu.memory_space<vmem>>, vector<16x128xbf16>,
    %13 = vector.extract_strided_slice %4 {offsets = [0, 4], sizes = [16, 128], strides = [1, 1]} : vector<16x136xbf16> to vector<16x128xbf16>
    %c64 = arith.constant 64 : index
    %c0_6 = arith.constant 0 : index
    %14 = vector.load %arg7[%c64, %c0_6] : memref<144x128xbf16, #tpu.memory_space<vmem>>, vector<16x128xbf16>
    tpu.vector_store %arg7[%c64, %c0_6], %13 {strides = array<i32>} : memref<144x128xbf16, #tpu.memory_space<vmem>>, vector<16x128xbf16>,
    %15 = vector.extract_strided_slice %4 {offsets = [0, 5], sizes = [16, 128], strides = [1, 1]} : vector<16x136xbf16> to vector<16x128xbf16>
    %c80 = arith.constant 80 : index
    %c0_7 = arith.constant 0 : index
    %16 = vector.load %arg7[%c80, %c0_7] : memref<144x128xbf16, #tpu.memory_space<vmem>>, vector<16x128xbf16>
    tpu.vector_store %arg7[%c80, %c0_7], %15 {strides = array<i32>} : memref<144x128xbf16, #tpu.memory_space<vmem>>, vector<16x128xbf16>,
    %17 = vector.extract_strided_slice %4 {offsets = [0, 6], sizes = [16, 128], strides = [1, 1]} : vector<16x136xbf16> to vector<16x128xbf16>
    %c96 = arith.constant 96 : index
    %c0_8 = arith.constant 0 : index
    %18 = vector.load %arg7[%c96, %c0_8] : memref<144x128xbf16, #tpu.memory_space<vmem>>, vector<16x128xbf16>
    tpu.vector_store %arg7[%c96, %c0_8], %17 {strides = array<i32>} : memref<144x128xbf16, #tpu.memory_space<vmem>>, vector<16x128xbf16>,
    %19 = vector.extract_strided_slice %4 {offsets = [0, 7], sizes = [16, 128], strides = [1, 1]} : vector<16x136xbf16> to vector<16x128xbf16>
    %c112 = arith.constant 112 : index
    %c0_9 = arith.constant 0 : index
    %20 = vector.load %arg7[%c112, %c0_9] : memref<144x128xbf16, #tpu.memory_space<vmem>>, vector<16x128xbf16>
    tpu.vector_store %arg7[%c112, %c0_9], %19 {strides = array<i32>} : memref<144x128xbf16, #tpu.memory_space<vmem>>, vector<16x128xbf16>,
    %21 = vector.extract_strided_slice %4 {offsets = [0, 8], sizes = [16, 128], strides = [1, 1]} : vector<16x136xbf16> to vector<16x128xbf16>
    %c128 = arith.constant 128 : index
    %c0_10 = arith.constant 0 : index
    %22 = vector.load %arg7[%c128, %c0_10] : memref<144x128xbf16, #tpu.memory_space<vmem>>, vector<16x128xbf16>
    tpu.vector_store %arg7[%c128, %c0_10], %21 {strides = array<i32>} : memref<144x128xbf16, #tpu.memory_space<vmem>>, vector<16x128xbf16>,
    %c0_11 = arith.constant 0 : index
    %c0_12 = arith.constant 0 : index
    %23 = vector.load %arg3[%c0_11, %c0_12] : memref<16x144xbf16, #tpu.memory_space<vmem>>, vector<16x144xbf16>
    %c0_13 = arith.constant 0 : index
    %c0_14 = arith.constant 0 : index
    %24 = vector.load %arg7[%c0_13, %c0_14] : memref<144x128xbf16, #tpu.memory_space<vmem>>, vector<144x128xbf16>
    %cst = arith.constant dense<0.000000e+00> : vector<16x128xf32>
    %25 = tpu.matmul %23, %24, %cst {dimension_numbers = #tpu.dot_dimension_numbers<[1], [0], [0], [1], [0, 0, 1, 1], [], []>} : vector<16x144xbf16>, vector<144x128xbf16>, vector<16x128xf32> -> vector<16x128xf32>
    %c0_15 = arith.constant 0 : index
    %c0_16 = arith.constant 0 : index
    %26 = vector.load %arg4[%c0_15, %c0_16] : memref<16x1xf32, #tpu.memory_space<vmem>>, vector<16x1xf32>
    %27 = vector.broadcast %26 : vector<16x1xf32> to vector<16x128xf32>
    %28 = arith.addf %25, %27 : vector<16x128xf32>
    %cst_17 = arith.constant 0.000000e+00 : f32
    %29 = vector.broadcast %cst_17 : f32 to vector<16x128xf32>
    %30 = arith.maximumf %28, %29 : vector<16x128xf32>
    %c0_18 = arith.constant 0 : index
    %c0_19 = arith.constant 0 : index
    %31 = vector.load %arg5[%c0_18, %c0_19] : memref<1x128xf32, #tpu.memory_space<vmem>>, vector<1x128xf32>
    %32 = vector.broadcast %31 : vector<1x128xf32> to vector<16x128xf32>
    %33 = arith.mulf %30, %32 : vector<16x128xf32>
    %34 = arith.truncf %33 : vector<16x128xf32> to vector<16x128xbf16>
    %c0_20 = arith.constant 0 : index
    %c0_21 = arith.constant 0 : index
    %c0_22 = arith.constant 0 : index
    %35 = vector.load %arg6[%c0_20, %c0_21, %c0_22] : memref<1x16x128xbf16, #tpu.memory_space<vmem>>, vector<1x16x128xbf16>
    %36 = vector.shape_cast %35 : vector<1x16x128xbf16> to vector<16x128xbf16>
    %37 = vector.shape_cast %34 : vector<16x128xbf16> to vector<1x16x128xbf16>
    tpu.vector_store %arg6[%c0_20, %c0_21, %c0_22], %37 {strides = array<i32>} : memref<1x16x128xbf16, #tpu.memory_space<vmem>>, vector<1x16x128xbf16>,
    return
  }
  func.func @transform_0(%arg0: i32, %arg1: i32) -> (i32, i32, i32) {
    %c0_i32 = arith.constant 0 : i32
    %c0_i32_0 = arith.constant 0 : i32
    %c0_i32_1 = arith.constant 0 : i32
    return %arg0, %c0_i32, %c0_i32_0 : i32, i32, i32
  }
  func.func @transform_1(%arg0: i32, %arg1: i32) -> (i32, i32) {
    %c0_i32 = arith.constant 0 : i32
    %c0_i32_0 = arith.constant 0 : i32
    %c0_i32_1 = arith.constant 0 : i32
    return %c0_i32, %c0_i32_0 : i32, i32
  }
  func.func @transform_2(%arg0: i32, %arg1: i32) -> (i32, i32) {
    %c0_i32 = arith.constant 0 : i32
    %c0_i32_0 = arith.constant 0 : i32
    %c0_i32_1 = arith.constant 0 : i32
    return %c0_i32, %c0_i32_0 : i32, i32
  }
  func.func @transform_3(%arg0: i32, %arg1: i32) -> (i32, i32) {
    %c0_i32 = arith.constant 0 : i32
    %c0_i32_0 = arith.constant 0 : i32
    return %c0_i32, %arg1 : i32, i32
  }
  func.func @transform_4(%arg0: i32, %arg1: i32) -> (i32, i32, i32) {
    %c0_i32 = arith.constant 0 : i32
    %c0_i32_0 = arith.constant 0 : i32
    return %arg0, %c0_i32, %arg1 : i32, i32, i32
  }
}

module attributes {stable_mosaic.version = 11 : i64} {
  func.func @kernel(%arg0: i32, %arg1: i32, %arg2: memref<1x16x256xbf16, #tpu.memory_space<vmem>>, %arg3: memref<16x144xbf16, #tpu.memory_space<vmem>>, %arg4: memref<16x1xf32, #tpu.memory_space<vmem>>, %arg5: memref<1x128xf32, #tpu.memory_space<vmem>>, %arg6: memref<1x16x128xbf16, #tpu.memory_space<vmem>>, %arg7: memref<144x128xbf16, #tpu.memory_space<vmem>>) attributes {dimension_semantics = [#tpu.dimension_semantics<parallel>, #tpu.dimension_semantics<parallel>], iteration_bounds = array<i64: 2, 1>, scalar_prefetch = 0 : i64, scratch_operands = 1 : i64, tpu.core_type = #tpu.core_type<tc>, window_params = [{transform_indices = @transform_0, window_bounds = array<i64: 1, 16, 256>}, {pipeline_mode = #tpu.pipeline_mode<synchronous>, transform_indices = @transform_1, window_bounds = array<i64: 16, 144>}, {pipeline_mode = #tpu.pipeline_mode<synchronous>, transform_indices = @transform_2, window_bounds = array<i64: 16, 1>}, {transform_indices = @transform_3, window_bounds = array<i64: 1, 128>}, {transform_indices = @transform_4, window_bounds = array<i64: 1, 16, 128>}]} {
    %c0 = arith.constant 0 : index
    %c0_0 = arith.constant 0 : index
    %c0_1 = arith.constant 0 : index
    %0 = vector.load %arg2[%c0, %c0_0, %c0_1] : memref<1x16x256xbf16, #tpu.memory_space<vmem>>, vector<1x16x136xbf16>
    %1 = vector.shape_cast %0 : vector<1x16x136xbf16> to vector<16x136xbf16>
    %2 = vector.extract_strided_slice %1 {offsets = [0, 0], sizes = [16, 128], strides = [1, 1]} : vector<16x136xbf16> to vector<16x128xbf16>
    %c0_2 = arith.constant 0 : index
    %c0_3 = arith.constant 0 : index
    %3 = vector.load %arg7[%c0_2, %c0_3] : memref<144x128xbf16, #tpu.memory_space<vmem>>, vector<16x128xbf16>
    tpu.vector_store %arg7[%c0_2, %c0_3], %2 {strides = array<i32>} : memref<144x128xbf16, #tpu.memory_space<vmem>>, vector<16x128xbf16>,
    %4 = vector.extract_strided_slice %1 {offsets = [0, 1], sizes = [16, 128], strides = [1, 1]} : vector<16x136xbf16> to vector<16x128xbf16>
    %c16 = arith.constant 16 : index
    %c0_4 = arith.constant 0 : index
    %5 = vector.load %arg7[%c16, %c0_4] : memref<144x128xbf16, #tpu.memory_space<vmem>>, vector<16x128xbf16>
    tpu.vector_store %arg7[%c16, %c0_4], %4 {strides = array<i32>} : memref<144x128xbf16, #tpu.memory_space<vmem>>, vector<16x128xbf16>,
    %6 = vector.extract_strided_slice %1 {offsets = [0, 2], sizes = [16, 128], strides = [1, 1]} : vector<16x136xbf16> to vector<16x128xbf16>
    %c32 = arith.constant 32 : index
    %c0_5 = arith.constant 0 : index
    %7 = vector.load %arg7[%c32, %c0_5] : memref<144x128xbf16, #tpu.memory_space<vmem>>, vector<16x128xbf16>
    tpu.vector_store %arg7[%c32, %c0_5], %6 {strides = array<i32>} : memref<144x128xbf16, #tpu.memory_space<vmem>>, vector<16x128xbf16>,
    %8 = vector.extract_strided_slice %1 {offsets = [0, 3], sizes = [16, 128], strides = [1, 1]} : vector<16x136xbf16> to vector<16x128xbf16>
    %c48 = arith.constant 48 : index
    %c0_6 = arith.constant 0 : index
    %9 = vector.load %arg7[%c48, %c0_6] : memref<144x128xbf16, #tpu.memory_space<vmem>>, vector<16x128xbf16>
    tpu.vector_store %arg7[%c48, %c0_6], %8 {strides = array<i32>} : memref<144x128xbf16, #tpu.memory_space<vmem>>, vector<16x128xbf16>,
    %10 = vector.extract_strided_slice %1 {offsets = [0, 4], sizes = [16, 128], strides = [1, 1]} : vector<16x136xbf16> to vector<16x128xbf16>
    %c64 = arith.constant 64 : index
    %c0_7 = arith.constant 0 : index
    %11 = vector.load %arg7[%c64, %c0_7] : memref<144x128xbf16, #tpu.memory_space<vmem>>, vector<16x128xbf16>
    tpu.vector_store %arg7[%c64, %c0_7], %10 {strides = array<i32>} : memref<144x128xbf16, #tpu.memory_space<vmem>>, vector<16x128xbf16>,
    %12 = vector.extract_strided_slice %1 {offsets = [0, 5], sizes = [16, 128], strides = [1, 1]} : vector<16x136xbf16> to vector<16x128xbf16>
    %c80 = arith.constant 80 : index
    %c0_8 = arith.constant 0 : index
    %13 = vector.load %arg7[%c80, %c0_8] : memref<144x128xbf16, #tpu.memory_space<vmem>>, vector<16x128xbf16>
    tpu.vector_store %arg7[%c80, %c0_8], %12 {strides = array<i32>} : memref<144x128xbf16, #tpu.memory_space<vmem>>, vector<16x128xbf16>,
    %14 = vector.extract_strided_slice %1 {offsets = [0, 6], sizes = [16, 128], strides = [1, 1]} : vector<16x136xbf16> to vector<16x128xbf16>
    %c96 = arith.constant 96 : index
    %c0_9 = arith.constant 0 : index
    %15 = vector.load %arg7[%c96, %c0_9] : memref<144x128xbf16, #tpu.memory_space<vmem>>, vector<16x128xbf16>
    tpu.vector_store %arg7[%c96, %c0_9], %14 {strides = array<i32>} : memref<144x128xbf16, #tpu.memory_space<vmem>>, vector<16x128xbf16>,
    %16 = vector.extract_strided_slice %1 {offsets = [0, 7], sizes = [16, 128], strides = [1, 1]} : vector<16x136xbf16> to vector<16x128xbf16>
    %c112 = arith.constant 112 : index
    %c0_10 = arith.constant 0 : index
    %17 = vector.load %arg7[%c112, %c0_10] : memref<144x128xbf16, #tpu.memory_space<vmem>>, vector<16x128xbf16>
    tpu.vector_store %arg7[%c112, %c0_10], %16 {strides = array<i32>} : memref<144x128xbf16, #tpu.memory_space<vmem>>, vector<16x128xbf16>,
    %18 = vector.extract_strided_slice %1 {offsets = [0, 8], sizes = [16, 128], strides = [1, 1]} : vector<16x136xbf16> to vector<16x128xbf16>
    %c128 = arith.constant 128 : index
    %c0_11 = arith.constant 0 : index
    %19 = vector.load %arg7[%c128, %c0_11] : memref<144x128xbf16, #tpu.memory_space<vmem>>, vector<16x128xbf16>
    tpu.vector_store %arg7[%c128, %c0_11], %18 {strides = array<i32>} : memref<144x128xbf16, #tpu.memory_space<vmem>>, vector<16x128xbf16>,
    %c0_12 = arith.constant 0 : index
    %c0_13 = arith.constant 0 : index
    %20 = vector.load %arg3[%c0_12, %c0_13] : memref<16x144xbf16, #tpu.memory_space<vmem>>, vector<16x144xbf16>
    %c0_14 = arith.constant 0 : index
    %c0_15 = arith.constant 0 : index
    %21 = vector.load %arg7[%c0_14, %c0_15] : memref<144x128xbf16, #tpu.memory_space<vmem>>, vector<144x128xbf16>
    %cst = arith.constant dense<0.000000e+00> : vector<16x128xf32>
    %22 = tpu.matmul %20, %21, %cst {dimension_numbers = #tpu.dot_dimension_numbers<[1], [0], [0], [1], [0, 0, 1, 1], [], []>} : vector<16x144xbf16>, vector<144x128xbf16>, vector<16x128xf32> -> vector<16x128xf32>
    %c0_16 = arith.constant 0 : index
    %c0_17 = arith.constant 0 : index
    %23 = vector.load %arg4[%c0_16, %c0_17] : memref<16x1xf32, #tpu.memory_space<vmem>>, vector<16x1xf32>
    %24 = vector.broadcast %23 : vector<16x1xf32> to vector<16x128xf32>
    %25 = arith.addf %22, %24 : vector<16x128xf32>
    %cst_18 = arith.constant 0.000000e+00 : f32
    %26 = vector.broadcast %cst_18 : f32 to vector<16x128xf32>
    %27 = arith.maximumf %25, %26 : vector<16x128xf32>
    %c0_19 = arith.constant 0 : index
    %c0_20 = arith.constant 0 : index
    %28 = vector.load %arg5[%c0_19, %c0_20] : memref<1x128xf32, #tpu.memory_space<vmem>>, vector<1x128xf32>
    %29 = vector.broadcast %28 : vector<1x128xf32> to vector<16x128xf32>
    %30 = arith.mulf %27, %29 : vector<16x128xf32>
    %31 = arith.truncf %30 : vector<16x128xf32> to vector<16x128xbf16>
    %c0_21 = arith.constant 0 : index
    %c0_22 = arith.constant 0 : index
    %c0_23 = arith.constant 0 : index
    %32 = vector.load %arg6[%c0_21, %c0_22, %c0_23] : memref<1x16x128xbf16, #tpu.memory_space<vmem>>, vector<1x16x128xbf16>
    %33 = vector.shape_cast %32 : vector<1x16x128xbf16> to vector<16x128xbf16>
    %34 = vector.shape_cast %31 : vector<16x128xbf16> to vector<1x16x128xbf16>
    tpu.vector_store %arg6[%c0_21, %c0_22, %c0_23], %34 {strides = array<i32>} : memref<1x16x128xbf16, #tpu.memory_space<vmem>>, vector<1x16x128xbf16>,
    return
  }
  func.func @transform_0(%arg0: i32, %arg1: i32) -> (i32, i32, i32) {
    %c0_i32 = arith.constant 0 : i32
    %c0_i32_0 = arith.constant 0 : i32
    %c0_i32_1 = arith.constant 0 : i32
    return %arg0, %c0_i32, %c0_i32_0 : i32, i32, i32
  }
  func.func @transform_1(%arg0: i32, %arg1: i32) -> (i32, i32) {
    %c0_i32 = arith.constant 0 : i32
    %c0_i32_0 = arith.constant 0 : i32
    %c0_i32_1 = arith.constant 0 : i32
    return %c0_i32, %c0_i32_0 : i32, i32
  }
  func.func @transform_2(%arg0: i32, %arg1: i32) -> (i32, i32) {
    %c0_i32 = arith.constant 0 : i32
    %c0_i32_0 = arith.constant 0 : i32
    %c0_i32_1 = arith.constant 0 : i32
    return %c0_i32, %c0_i32_0 : i32, i32
  }
  func.func @transform_3(%arg0: i32, %arg1: i32) -> (i32, i32) {
    %c0_i32 = arith.constant 0 : i32
    %c0_i32_0 = arith.constant 0 : i32
    return %c0_i32, %arg1 : i32, i32
  }
  func.func @transform_4(%arg0: i32, %arg1: i32) -> (i32, i32, i32) {
    %c0_i32 = arith.constant 0 : i32
    %c0_i32_0 = arith.constant 0 : i32
    return %arg0, %c0_i32, %arg1 : i32, i32, i32
  }
}

module attributes {stable_mosaic.version = 11 : i64} {
  func.func @kernel(%arg0: i32, %arg1: i32, %arg2: memref<1x8x388xbf16, #tpu.memory_space<vmem>>, %arg3: memref<1x8x388xbf16, #tpu.memory_space<vmem>>, %arg4: memref<1x8x388xbf16, #tpu.memory_space<vmem>>, %arg5: memref<1x8x388xbf16, #tpu.memory_space<vmem>>, %arg6: memref<16x72xbf16, #tpu.memory_space<vmem>>, %arg7: memref<16x1xf32, #tpu.memory_space<vmem>>, %arg8: memref<1x128xf32, #tpu.memory_space<vmem>>, %arg9: memref<1x16x128xbf16, #tpu.memory_space<vmem>>, %arg10: memref<72x128xbf16, #tpu.memory_space<vmem>>) attributes {dimension_semantics = [#tpu.dimension_semantics<parallel>, #tpu.dimension_semantics<parallel>], iteration_bounds = array<i64: 2, 3>, scalar_prefetch = 0 : i64, scratch_operands = 1 : i64, tpu.core_type = #tpu.core_type<tc>, window_params = [{transform_indices = @transform_0, window_bounds = array<i64: 1, 8, 388>}, {transform_indices = @transform_1, window_bounds = array<i64: 1, 8, 388>}, {transform_indices = @transform_2, window_bounds = array<i64: 1, 8, 388>}, {transform_indices = @transform_3, window_bounds = array<i64: 1, 8, 388>}, {pipeline_mode = #tpu.pipeline_mode<synchronous>, transform_indices = @transform_4, window_bounds = array<i64: 16, 72>}, {pipeline_mode = #tpu.pipeline_mode<synchronous>, transform_indices = @transform_5, window_bounds = array<i64: 16, 1>}, {transform_indices = @transform_6, window_bounds = array<i64: 1, 128>}, {transform_indices = @transform_7, window_bounds = array<i64: 1, 16, 128>}]} {
    %c128_i32 = arith.constant 128 : i32
    %0 = arith.muli %arg1, %c128_i32 : i32
    %1 = tpu.assume_multiple %0, 128 : i32
    %c0 = arith.constant 0 : index
    %c0_0 = arith.constant 0 : index
    %2 = arith.index_cast %1 : i32 to index
    %3 = vector.load %arg2[%c0, %c0_0, %2] : memref<1x8x388xbf16, #tpu.memory_space<vmem>>, vector<1x8x132xbf16>
    %4 = vector.shape_cast %3 : vector<1x8x132xbf16> to vector<8x132xbf16>
    %c0_1 = arith.constant 0 : index
    %c0_2 = arith.constant 0 : index
    %5 = arith.index_cast %1 : i32 to index
    %6 = vector.load %arg3[%c0_1, %c0_2, %5] : memref<1x8x388xbf16, #tpu.memory_space<vmem>>, vector<1x8x132xbf16>
    %7 = vector.shape_cast %6 : vector<1x8x132xbf16> to vector<8x132xbf16>
    %c0_3 = arith.constant 0 : index
    %c0_4 = arith.constant 0 : index
    %8 = arith.index_cast %1 : i32 to index
    %9 = vector.load %arg4[%c0_3, %c0_4, %8] : memref<1x8x388xbf16, #tpu.memory_space<vmem>>, vector<1x8x132xbf16>
    %10 = vector.shape_cast %9 : vector<1x8x132xbf16> to vector<8x132xbf16>
    %c0_5 = arith.constant 0 : index
    %c0_6 = arith.constant 0 : index
    %11 = arith.index_cast %1 : i32 to index
    %12 = vector.load %arg5[%c0_5, %c0_6, %11] : memref<1x8x388xbf16, #tpu.memory_space<vmem>>, vector<1x8x132xbf16>
    %13 = vector.shape_cast %12 : vector<1x8x132xbf16> to vector<8x132xbf16>
    %14 = vector.extract_strided_slice %13 {offsets = [0, 0], sizes = [8, 128], strides = [1, 1]} : vector<8x132xbf16> to vector<8x128xbf16>
    %c0_7 = arith.constant 0 : index
    %c0_8 = arith.constant 0 : index
    %15 = vector.load %arg10[%c0_7, %c0_8] : memref<72x128xbf16, #tpu.memory_space<vmem>>, vector<8x128xbf16>
    tpu.vector_store %arg10[%c0_7, %c0_8], %14 {strides = array<i32>} : memref<72x128xbf16, #tpu.memory_space<vmem>>, vector<8x128xbf16>,
    %16 = vector.extract_strided_slice %10 {offsets = [0, 1], sizes = [8, 128], strides = [1, 1]} : vector<8x132xbf16> to vector<8x128xbf16>
    %c8 = arith.constant 8 : index
    %c0_9 = arith.constant 0 : index
    %17 = vector.load %arg10[%c8, %c0_9] : memref<72x128xbf16, #tpu.memory_space<vmem>>, vector<8x128xbf16>
    tpu.vector_store %arg10[%c8, %c0_9], %16 {strides = array<i32>} : memref<72x128xbf16, #tpu.memory_space<vmem>>, vector<8x128xbf16>,
    %18 = vector.extract_strided_slice %13 {offsets = [0, 1], sizes = [8, 128], strides = [1, 1]} : vector<8x132xbf16> to vector<8x128xbf16>
    %c16 = arith.constant 16 : index
    %c0_10 = arith.constant 0 : index
    %19 = vector.load %arg10[%c16, %c0_10] : memref<72x128xbf16, #tpu.memory_space<vmem>>, vector<8x128xbf16>
    tpu.vector_store %arg10[%c16, %c0_10], %18 {strides = array<i32>} : memref<72x128xbf16, #tpu.memory_space<vmem>>, vector<8x128xbf16>,
    %20 = vector.extract_strided_slice %7 {offsets = [0, 3], sizes = [8, 128], strides = [1, 1]} : vector<8x132xbf16> to vector<8x128xbf16>
    %c24 = arith.constant 24 : index
    %c0_11 = arith.constant 0 : index
    %21 = vector.load %arg10[%c24, %c0_11] : memref<72x128xbf16, #tpu.memory_space<vmem>>, vector<8x128xbf16>
    tpu.vector_store %arg10[%c24, %c0_11], %20 {strides = array<i32>} : memref<72x128xbf16, #tpu.memory_space<vmem>>, vector<8x128xbf16>,
    %22 = vector.extract_strided_slice %4 {offsets = [0, 4], sizes = [8, 128], strides = [1, 1]} : vector<8x132xbf16> to vector<8x128xbf16>
    %c32 = arith.constant 32 : index
    %c0_12 = arith.constant 0 : index
    %23 = vector.load %arg10[%c32, %c0_12] : memref<72x128xbf16, #tpu.memory_space<vmem>>, vector<8x128xbf16>
    tpu.vector_store %arg10[%c32, %c0_12], %22 {strides = array<i32>} : memref<72x128xbf16, #tpu.memory_space<vmem>>, vector<8x128xbf16>,
    %24 = vector.extract_strided_slice %7 {offsets = [0, 4], sizes = [8, 128], strides = [1, 1]} : vector<8x132xbf16> to vector<8x128xbf16>
    %c40 = arith.constant 40 : index
    %c0_13 = arith.constant 0 : index
    %25 = vector.load %arg10[%c40, %c0_13] : memref<72x128xbf16, #tpu.memory_space<vmem>>, vector<8x128xbf16>
    tpu.vector_store %arg10[%c40, %c0_13], %24 {strides = array<i32>} : memref<72x128xbf16, #tpu.memory_space<vmem>>, vector<8x128xbf16>,
    %26 = vector.extract_strided_slice %13 {offsets = [0, 3], sizes = [8, 128], strides = [1, 1]} : vector<8x132xbf16> to vector<8x128xbf16>
    %c48 = arith.constant 48 : index
    %c0_14 = arith.constant 0 : index
    %27 = vector.load %arg10[%c48, %c0_14] : memref<72x128xbf16, #tpu.memory_space<vmem>>, vector<8x128xbf16>
    tpu.vector_store %arg10[%c48, %c0_14], %26 {strides = array<i32>} : memref<72x128xbf16, #tpu.memory_space<vmem>>, vector<8x128xbf16>,
    %28 = vector.extract_strided_slice %10 {offsets = [0, 4], sizes = [8, 128], strides = [1, 1]} : vector<8x132xbf16> to vector<8x128xbf16>
    %c56 = arith.constant 56 : index
    %c0_15 = arith.constant 0 : index
    %29 = vector.load %arg10[%c56, %c0_15] : memref<72x128xbf16, #tpu.memory_space<vmem>>, vector<8x128xbf16>
    tpu.vector_store %arg10[%c56, %c0_15], %28 {strides = array<i32>} : memref<72x128xbf16, #tpu.memory_space<vmem>>, vector<8x128xbf16>,
    %30 = vector.extract_strided_slice %13 {offsets = [0, 4], sizes = [8, 128], strides = [1, 1]} : vector<8x132xbf16> to vector<8x128xbf16>
    %c64 = arith.constant 64 : index
    %c0_16 = arith.constant 0 : index
    %31 = vector.load %arg10[%c64, %c0_16] : memref<72x128xbf16, #tpu.memory_space<vmem>>, vector<8x128xbf16>
    tpu.vector_store %arg10[%c64, %c0_16], %30 {strides = array<i32>} : memref<72x128xbf16, #tpu.memory_space<vmem>>, vector<8x128xbf16>,
    %c0_17 = arith.constant 0 : index
    %c0_18 = arith.constant 0 : index
    %32 = vector.load %arg6[%c0_17, %c0_18] : memref<16x72xbf16, #tpu.memory_space<vmem>>, vector<16x72xbf16>
    %c0_19 = arith.constant 0 : index
    %c0_20 = arith.constant 0 : index
    %33 = vector.load %arg10[%c0_19, %c0_20] : memref<72x128xbf16, #tpu.memory_space<vmem>>, vector<72x128xbf16>
    %cst = arith.constant dense<0.000000e+00> : vector<16x128xf32>
    %34 = tpu.matmul %32, %33, %cst {dimension_numbers = #tpu.dot_dimension_numbers<[1], [0], [0], [1], [0, 0, 1, 1], [], []>} : vector<16x72xbf16>, vector<72x128xbf16>, vector<16x128xf32> -> vector<16x128xf32>
    %c0_21 = arith.constant 0 : index
    %c0_22 = arith.constant 0 : index
    %35 = vector.load %arg7[%c0_21, %c0_22] : memref<16x1xf32, #tpu.memory_space<vmem>>, vector<16x1xf32>
    %36 = vector.broadcast %35 : vector<16x1xf32> to vector<16x128xf32>
    %37 = arith.addf %34, %36 : vector<16x128xf32>
    %cst_23 = arith.constant 0.000000e+00 : f32
    %38 = vector.broadcast %cst_23 : f32 to vector<16x128xf32>
    %39 = arith.maximumf %37, %38 : vector<16x128xf32>
    %c0_24 = arith.constant 0 : index
    %c0_25 = arith.constant 0 : index
    %40 = vector.load %arg8[%c0_24, %c0_25] : memref<1x128xf32, #tpu.memory_space<vmem>>, vector<1x128xf32>
    %41 = vector.broadcast %40 : vector<1x128xf32> to vector<16x128xf32>
    %42 = arith.mulf %39, %41 : vector<16x128xf32>
    %43 = arith.truncf %42 : vector<16x128xf32> to vector<16x128xbf16>
    %c0_26 = arith.constant 0 : index
    %c0_27 = arith.constant 0 : index
    %c0_28 = arith.constant 0 : index
    %44 = vector.load %arg9[%c0_26, %c0_27, %c0_28] : memref<1x16x128xbf16, #tpu.memory_space<vmem>>, vector<1x16x128xbf16>
    %45 = vector.shape_cast %44 : vector<1x16x128xbf16> to vector<16x128xbf16>
    %46 = vector.shape_cast %43 : vector<16x128xbf16> to vector<1x16x128xbf16>
    tpu.vector_store %arg9[%c0_26, %c0_27, %c0_28], %46 {strides = array<i32>} : memref<1x16x128xbf16, #tpu.memory_space<vmem>>, vector<1x16x128xbf16>,
    return
  }
  func.func @transform_0(%arg0: i32, %arg1: i32) -> (i32, i32, i32) {
    %c0_i32 = arith.constant 0 : i32
    %c0_i32_0 = arith.constant 0 : i32
    %c0_i32_1 = arith.constant 0 : i32
    return %arg0, %c0_i32, %c0_i32_0 : i32, i32, i32
  }
  func.func @transform_1(%arg0: i32, %arg1: i32) -> (i32, i32, i32) {
    %c0_i32 = arith.constant 0 : i32
    %c0_i32_0 = arith.constant 0 : i32
    %c0_i32_1 = arith.constant 0 : i32
    return %arg0, %c0_i32, %c0_i32_0 : i32, i32, i32
  }
  func.func @transform_2(%arg0: i32, %arg1: i32) -> (i32, i32, i32) {
    %c0_i32 = arith.constant 0 : i32
    %c0_i32_0 = arith.constant 0 : i32
    %c0_i32_1 = arith.constant 0 : i32
    return %arg0, %c0_i32, %c0_i32_0 : i32, i32, i32
  }
  func.func @transform_3(%arg0: i32, %arg1: i32) -> (i32, i32, i32) {
    %c0_i32 = arith.constant 0 : i32
    %c0_i32_0 = arith.constant 0 : i32
    %c0_i32_1 = arith.constant 0 : i32
    return %arg0, %c0_i32, %c0_i32_0 : i32, i32, i32
  }
  func.func @transform_4(%arg0: i32, %arg1: i32) -> (i32, i32) {
    %c0_i32 = arith.constant 0 : i32
    %c0_i32_0 = arith.constant 0 : i32
    %c0_i32_1 = arith.constant 0 : i32
    return %c0_i32, %c0_i32_0 : i32, i32
  }
  func.func @transform_5(%arg0: i32, %arg1: i32) -> (i32, i32) {
    %c0_i32 = arith.constant 0 : i32
    %c0_i32_0 = arith.constant 0 : i32
    %c0_i32_1 = arith.constant 0 : i32
    return %c0_i32, %c0_i32_0 : i32, i32
  }
  func.func @transform_6(%arg0: i32, %arg1: i32) -> (i32, i32) {
    %c0_i32 = arith.constant 0 : i32
    %c0_i32_0 = arith.constant 0 : i32
    return %c0_i32, %arg1 : i32, i32
  }
  func.func @transform_7(%arg0: i32, %arg1: i32) -> (i32, i32, i32) {
    %c0_i32 = arith.constant 0 : i32
    %c0_i32_0 = arith.constant 0 : i32
    return %arg0, %c0_i32, %arg1 : i32, i32, i32
  }
}

</mosaic_0001>

<llo_original>
// kernel: detail_branch_forward.8
$region0: #{detail_branch_forward.8}
  #allocation0 [shape = 'u32[]', space=smem, size = 0x4, offset = 0x4, fixed_abs, tag = 'smem constant byte address 0x4 - core index']
  #allocation1 [shape = 'u32[72,128]{1,0:T(1,128)}', space=vmem, size = 0x9000, scoped, tag = 'internal scratch']
  #allocation2 [shape = 'bf16[36,128]{1,0:T(8,128)(2,1)}', space=vmem, size = 0x2800, scoped, tag = 'scratch operand']
  %s0 = inlined_call_operand.vmem [shape: bf16[2,4,266], index: 0, kind: input, shape index: {}]
  %s1 = inlined_call_operand.vmem [shape: bf16[2,4,266], index: 1, kind: input, shape index: {}]
  %s2 = inlined_call_operand.vmem [shape: bf16[2,4,266], index: 2, kind: input, shape index: {}]
  %s3 = inlined_call_operand.vmem [shape: bf16[2,4,266], index: 3, kind: input, shape index: {}]
  %s4 = inlined_call_operand.vmem [shape: bf16[8,36], index: 4, kind: input, shape index: {}]
  %s5 = inlined_call_operand.vmem [shape: f32[8,1], index: 5, kind: input, shape index: {}]
  %s6 = inlined_call_operand.vmem [shape: f32[1,256], index: 6, kind: input, shape index: {}]
  %s7 = inlined_call_operand.vmem [shape: f32[2,8,256], index: 7, kind: output, shape index: {}]
  %s8 = sld [smem:[#allocation0]]
  $region61: #{detail_branch_forward.8} parent=0
    _
  %s10 = ssub.s32 1, %s8
  %s11 = scalar_select 0, %s10, %s8
  loop: start=0, step=1, limit=6
  $region2: #{detail_branch_forward.8} parent=0 // loop_pre_header
    _
  $region3: #{detail_branch_forward.8} parent=0 // loop_header
    %s13 = sphi 0, %s17
    %p14 = scmp.ge.s32.totalorder %s13, 6
    %s20 = sphi 0, %s32
    %s21 = sphi 0, %s28
    %s22 = sphi 0, %s20
    %s23 = sphi 0, %s21
    %s24 = sphi 0, %s22
    %s25 = sphi 0, %s23
    %s35 = sphi 0, %s37
    %s38 = sphi 0, %s35
    %s39 = sphi 0, %s38
    %s55 = sphi 0, %s39
    %s61 = sphi 0, %s63
    %s64 = sphi 0, %s61
    %s65 = sphi 0, %s64
    %s81 = sphi 0, %s65
    %s87 = sphi 0, %s89
    %s90 = sphi 0, %s87
    %s91 = sphi 0, %s90
    %s107 = sphi 0, %s91
    %s113 = sphi 0, %s115
    %s116 = sphi 0, %s113
    %s117 = sphi 0, %s116
    %s133 = sphi 0, %s117
    %s137 = sphi 0, %s137
    %s139 = sphi 0, %s137
    %s140 = sphi 0, %s139
    %s154 = sphi 0, %s140
    %s158 = sphi 0, %s158
    %s160 = sphi 0, %s158
    %s161 = sphi 0, %s160
    %s175 = sphi 0, %s161
    %s181 = sphi 0, %s183
    %s184 = sphi 0, %s181
    %s185 = sphi 0, %s184
    %s201 = sphi 0, %s185
    %s209 = sphi 0, %s211
    %s212 = sphi 0, %s209
    %s213 = sphi 0, %s212
    %s229 = sphi 0, %s213
  $region4: #{detail_branch_forward.8} parent=0 // loop_header_branch
    %16 = sbr.rel (%p14) target = $region8
  $region5: #{detail_branch_forward.8} parent=0 // loop_body
    %s18 = ssub.s32 %s13, 1
    %s19 = ssub.s32 %s13, 2
    %s26 = sadd.s32 1, %s21
    %p27 = scmp.ge.s32.totalorder %s26, 2
    %s28 = scalar_select %p27, 0, %s26
    %s29 = sadd.s32 1, %s20
    %s30 = scalar_select %p27, %s29, %s20
    %p31 = scmp.ge.s32.totalorder %s30, 2
    %s32 = scalar_select %p31, 0, %s30
    %s33 = ssub.s32 %s20, %s32
    %p34 = scmp.eq.s32.totalorder %s33, 0
    %s36 = sadd.s32 %s35, 1
    %s37 = scalar_select %p34, %s35, %s36
    %p40 = pneg %p34
    %p41 = scmp.eq.s32.totalorder %s13, 3
    %p42 = por %p40, %p41
    %p43 = scmp.ne.s32.totalorder %s35, %s38
    %p44 = scmp.eq.s32.totalorder %s13, 0
    %p45 = por %p43, %p44
    %p46 = scmp.ne.s32.totalorder %s35, %s38
    %p47 = scmp.eq.s32.totalorder %s18, 3
    %p48 = por %p46, %p47
    %p49 = scmp.ne.s32.totalorder %s38, %s39
    %p50 = scmp.eq.s32.totalorder %s18, 0
    %p51 = por %p49, %p50
    %p52 = scmp.ne.s32.totalorder %s38, %s39
    %p53 = scmp.eq.s32.totalorder %s19, 3
    %p54 = por %p52, %p53
    %p56 = scmp.ne.s32.totalorder %s39, %s55
    %p57 = scmp.eq.s32.totalorder %s19, 0
    %p58 = por %p56, %p57
    %s59 = ssub.s32 %s20, %s32
    %p60 = scmp.eq.s32.totalorder %s59, 0
    %s62 = sadd.s32 %s61, 1
    %s63 = scalar_select %p60, %s61, %s62
    %p66 = pneg %p60
    %p67 = scmp.eq.s32.totalorder %s13, 3
    %p68 = por %p66, %p67
    %p69 = scmp.ne.s32.totalorder %s61, %s64
    %p70 = scmp.eq.s32.totalorder %s13, 0
    %p71 = por %p69, %p70
    %p72 = scmp.ne.s32.totalorder %s61, %s64
    %p73 = scmp.eq.s32.totalorder %s18, 3
    %p74 = por %p72, %p73
    %p75 = scmp.ne.s32.totalorder %s64, %s65
    %p76 = scmp.eq.s32.totalorder %s18, 0
    %p77 = por %p75, %p76
    %p78 = scmp.ne.s32.totalorder %s64, %s65
    %p79 = scmp.eq.s32.totalorder %s19, 3
    %p80 = por %p78, %p79
    %p82 = scmp.ne.s32.totalorder %s65, %s81
    %p83 = scmp.eq.s32.totalorder %s19, 0
    %p84 = por %p82, %p83
    %s85 = ssub.s32 %s20, %s32
    %p86 = scmp.eq.s32.totalorder %s85, 0
    %s88 = sadd.s32 %s87, 1
    %s89 = scalar_select %p86, %s87, %s88
    %p92 = pneg %p86
    %p93 = scmp.eq.s32.totalorder %s13, 3
    %p94 = por %p92, %p93
    %p95 = scmp.ne.s32.totalorder %s87, %s90
    %p96 = scmp.eq.s32.totalorder %s13, 0
    %p97 = por %p95, %p96
    %p98 = scmp.ne.s32.totalorder %s87, %s90
    %p99 = scmp.eq.s32.totalorder %s18, 3
    %p100 = por %p98, %p99
    %p101 = scmp.ne.s32.totalorder %s90, %s91
    %p102 = scmp.eq.s32.totalorder %s18, 0
    %p103 = por %p101, %p102
    %p104 = scmp.ne.s32.totalorder %s90, %s91
    %p105 = scmp.eq.s32.totalorder %s19, 3
    %p106 = por %p104, %p105
    %p108 = scmp.ne.s32.totalorder %s91, %s107
    %p109 = scmp.eq.s32.totalorder %s19, 0
    %p110 = por %p108, %p109
    %s111 = ssub.s32 %s20, %s32
    %p112 = scmp.eq.s32.totalorder %s111, 0
    %s114 = sadd.s32 %s113, 1
    %s115 = scalar_select %p112, %s113, %s114
    %p118 = pneg %p112
    %p119 = scmp.eq.s32.totalorder %s13, 3
    %p120 = por %p118, %p119
    %p121 = scmp.ne.s32.totalorder %s113, %s116
    %p122 = scmp.eq.s32.totalorder %s13, 0
    %p123 = por %p121, %p122
    %p124 = scmp.ne.s32.totalorder %s113, %s116
    %p125 = scmp.eq.s32.totalorder %s18, 3
    %p126 = por %p124, %p125
    %p127 = scmp.ne.s32.totalorder %s116, %s117
    %p128 = scmp.eq.s32.totalorder %s18, 0
    %p129 = por %p127, %p128
    %p130 = scmp.ne.s32.totalorder %s116, %s117
    %p131 = scmp.eq.s32.totalorder %s19, 3
    %p132 = por %p130, %p131
    %p134 = scmp.ne.s32.totalorder %s117, %s133
    %p135 = scmp.eq.s32.totalorder %s19, 0
    %p136 = por %p134, %p135
    %s138 = sadd.s32 %s137, 1
    %p141 = scmp.eq.s32.totalorder %s13, 3
    %p142 = scmp.ne.s32.totalorder %s137, %s139
    %p143 = scmp.eq.s32.totalorder %s13, 0
    %p144 = por %p142, %p143
    %p145 = scmp.ne.s32.totalorder %s137, %s139
    %p146 = scmp.eq.s32.totalorder %s18, 3
    %p147 = por %p145, %p146
    %p148 = scmp.ne.s32.totalorder %s139, %s140
    %p149 = scmp.eq.s32.totalorder %s18, 0
    %p150 = por %p148, %p149
    %p151 = scmp.ne.s32.totalorder %s139, %s140
    %p152 = scmp.eq.s32.totalorder %s19, 3
    %p153 = por %p151, %p152
    %p155 = scmp.ne.s32.totalorder %s140, %s154
    %p156 = scmp.eq.s32.totalorder %s19, 0
    %p157 = por %p155, %p156
    %s159 = sadd.s32 %s158, 1
    %p162 = scmp.eq.s32.totalorder %s13, 3
    %p163 = scmp.ne.s32.totalorder %s158, %s160
    %p164 = scmp.eq.s32.totalorder %s13, 0
    %p165 = por %p163, %p164
    %p166 = scmp.ne.s32.totalorder %s158, %s160
    %p167 = scmp.eq.s32.totalorder %s18, 3
    %p168 = por %p166, %p167
    %p169 = scmp.ne.s32.totalorder %s160, %s161
    %p170 = scmp.eq.s32.totalorder %s18, 0
    %p171 = por %p169, %p170
    %p172 = scmp.ne.s32.totalorder %s160, %s161
    %p173 = scmp.eq.s32.totalorder %s19, 3
    %p174 = por %p172, %p173
    %p176 = scmp.ne.s32.totalorder %s161, %s175
    %p177 = scmp.eq.s32.totalorder %s19, 0
    %p178 = por %p176, %p177
    %s179 = ssub.s32 %s21, %s28
    %p180 = scmp.eq.s32.totalorder %s179, 0
    %s182 = sadd.s32 %s181, 1
    %s183 = scalar_select %p180, %s181, %s182
    %p186 = pneg %p180
    %p187 = scmp.eq.s32.totalorder %s13, 3
    %p188 = por %p186, %p187
    %p189 = scmp.ne.s32.totalorder %s181, %s184
    %p190 = scmp.eq.s32.totalorder %s13, 0
    %p191 = por %p189, %p190
    %p192 = scmp.ne.s32.totalorder %s181, %s184
    %p193 = scmp.eq.s32.totalorder %s18, 3
    %p194 = por %p192, %p193
    %p195 = scmp.ne.s32.totalorder %s184, %s185
    %p196 = scmp.eq.s32.totalorder %s18, 0
    %p197 = por %p195, %p196
    %p198 = scmp.ne.s32.totalorder %s184, %s185
    %p199 = scmp.eq.s32.totalorder %s19, 3
    %p200 = por %p198, %p199
    %p202 = scmp.ne.s32.totalorder %s185, %s201
    %p203 = scmp.eq.s32.totalorder %s19, 0
    %p204 = por %p202, %p203
    %s205 = ssub.s32 %s20, %s32
    %s206 = ssub.s32 %s21, %s28
    %s207 = sor.u32 %s205, %s206
    %p208 = scmp.eq.s32.totalorder %s207, 0
    %s210 = sadd.s32 %s209, 1
    %s211 = scalar_select %p208, %s209, %s210
    %p214 = pneg %p208
    %p215 = scmp.eq.s32.totalorder %s13, 3
    %p216 = por %p214, %p215
    %p217 = scmp.ne.s32.totalorder %s209, %s212
    %p218 = scmp.eq.s32.totalorder %s13, 0
    %p219 = por %p217, %p218
    %p220 = scmp.ne.s32.totalorder %s209, %s212
    %p221 = scmp.eq.s32.totalorder %s18, 3
    %p222 = por %p220, %p221
    %p223 = scmp.ne.s32.totalorder %s212, %s213
    %p224 = scmp.eq.s32.totalorder %s18, 0
    %p225 = por %p223, %p224
    %p226 = scmp.ne.s32.totalorder %s212, %s213
    %p227 = scmp.eq.s32.totalorder %s19, 3
    %p228 = por %p226, %p227
    %p230 = scmp.ne.s32.totalorder %s213, %s229
    %p231 = scmp.eq.s32.totalorder %s19, 0
    %p232 = por %p230, %p231
    %p233 = scmp.le.s32.totalorder 1, %s13
    %p234 = scmp.lt.s32.totalorder %s13, 5
    %p235 = pnand %p233, %p234
    %p236 = pneg %p235
    // Predicated region
    $region9: #{detail_branch_forward.8} parent=5 // pred_check
      _
    $region10: #{detail_branch_forward.8} parent=5 // pred_check_branch
      %238 = sbr.rel (%p235) target = $region12
    $region11: #{detail_branch_forward.8} parent=5 // pred_region
      %s239 = ssub.s32 %s13, 1
      // Predicated region
      $region13: #{detail_branch_forward.8} parent=11 // pred_check
        %p240 = pneg %p150
      $region14: #{detail_branch_forward.8} parent=11 // pred_check_branch
        %242 = sbr.rel (%p240) target = $region16
      $region15: #{detail_branch_forward.8} parent=11 // pred_region
        _
      $region16: #{detail_branch_forward.8} parent=11 // pred_fallthru
        _
      // Predicated region
      $region17: #{detail_branch_forward.8} parent=11 // pred_check
        %p243 = pneg %p171
      $region18: #{detail_branch_forward.8} parent=11 // pred_check_branch
        %245 = sbr.rel (%p243) target = $region20
      $region19: #{detail_branch_forward.8} parent=11 // pred_region
        _
      $region20: #{detail_branch_forward.8} parent=11 // pred_fallthru
        _
    $region12: #{detail_branch_forward.8} parent=5 // pred_fallthru
      _
    %p246 = scmp.lt.s32.totalorder %s13, 4
    // Predicated region
    $region21: #{detail_branch_forward.8} parent=5 // pred_check
      %p247 = pneg %p246
    $region22: #{detail_branch_forward.8} parent=5 // pred_check_branch
      %249 = sbr.rel (%p247) target = $region24
    $region23: #{detail_branch_forward.8} parent=5 // pred_region
      // Predicated region
      $region25: #{detail_branch_forward.8} parent=23 // pred_check
        %p250 = pneg %p45
      $region26: #{detail_branch_forward.8} parent=23 // pred_check_branch
        %252 = sbr.rel (%p250) target = $region28
      $region27: #{detail_branch_forward.8} parent=23 // pred_region
        %p253 = scmp.lt.s32.totalorder %s20, 1
        %s254 = scalar_select %p253, %s20, 1
        %s255 = smul.addr %s254, 3
        %s256 = smul.addr %s255, 2
        %s257 = scalar_lea.vmem %s0, %s256
      $region28: #{detail_branch_forward.8} parent=23 // pred_fallthru
        _
      // Predicated region
      $region29: #{detail_branch_forward.8} parent=23 // pred_check
        %p258 = pneg %p71
      $region30: #{detail_branch_forward.8} parent=23 // pred_check_branch
        %260 = sbr.rel (%p258) target = $region32
      $region31: #{detail_branch_forward.8} parent=23 // pred_region
        %p261 = scmp.lt.s32.totalorder %s20, 1
        %s262 = scalar_select %p261, %s20, 1
        %s263 = smul.addr %s262, 3
        %s264 = smul.addr %s263, 2
        %s265 = scalar_lea.vmem %s1, %s264
      $region32: #{detail_branch_forward.8} parent=23 // pred_fallthru
        _
      // Predicated region
      $region33: #{detail_branch_forward.8} parent=23 // pred_check
        %p266 = pneg %p97
      $region34: #{detail_branch_forward.8} parent=23 // pred_check_branch
        %268 = sbr.rel (%p266) target = $region36
      $region35: #{detail_branch_forward.8} parent=23 // pred_region
        %p269 = scmp.lt.s32.totalorder %s20, 1
        %s270 = scalar_select %p269, %s20, 1
        %s271 = smul.addr %s270, 3
        %s272 = smul.addr %s271, 2
        %s273 = scalar_lea.vmem %s2, %s272
      $region36: #{detail_branch_forward.8} parent=23 // pred_fallthru
        _
      // Predicated region
      $region37: #{detail_branch_forward.8} parent=23 // pred_check
        %p274 = pneg %p123
      $region38: #{detail_branch_forward.8} parent=23 // pred_check_branch
        %276 = sbr.rel (%p274) target = $region40
      $region39: #{detail_branch_forward.8} parent=23 // pred_region
        %p277 = scmp.lt.s32.totalorder %s20, 1
        %s278 = scalar_select %p277, %s20, 1
        %s279 = smul.addr %s278, 3
        %s280 = smul.addr %s279, 2
        %s281 = scalar_lea.vmem %s3, %s280
      $region40: #{detail_branch_forward.8} parent=23 // pred_fallthru
        _
      // Predicated region
      $region41: #{detail_branch_forward.8} parent=23 // pred_check
        %p282 = pneg %p191
      $region42: #{detail_branch_forward.8} parent=23 // pred_check_branch
        %284 = sbr.rel (%p282) target = $region44
      $region43: #{detail_branch_forward.8} parent=23 // pred_region
        %p285 = scmp.lt.s32.totalorder %s21, 1
        %s286 = scalar_select %p285, %s21, 1
        %s287 = scalar_lea.vmem %s6, %s286
      $region44: #{detail_branch_forward.8} parent=23 // pred_fallthru
        _
    $region24: #{detail_branch_forward.8} parent=5 // pred_fallthru
      _
    %p288 = scmp.le.s32.totalorder 1, %s13
    %p289 = scmp.lt.s32.totalorder %s13, 5
    %p290 = pnand %p288, %p289
    %p291 = pneg %p290
    // Predicated region
    $region45: #{detail_branch_forward.8} parent=5 // pred_check
      _
    $region46: #{detail_branch_forward.8} parent=5 // pred_check_branch
      %293 = sbr.rel (%p290) target = $region48
    $region47: #{detail_branch_forward.8} parent=5 // pred_region
      %s294 = ssub.s32 %s13, 1
      %p295 = scmp.lt.s32.totalorder %s22, 1
      %s296 = scalar_select %p295, %s22, 1
      %s297 = smul.addr %s296, 3
      %s298 = smul.addr %s297, 2
      %s299 = scalar_lea.vmem %s0, %s298
      %p300 = pneg %p51
      %p301 = pneg %p48
      %p302 = scmp.lt.s32.totalorder %s22, 1
      %s303 = scalar_select %p302, %s22, 1
      %s304 = smul.addr %s303, 3
      %s305 = smul.addr %s304, 2
      %s306 = scalar_lea.vmem %s1, %s305
      %p307 = pneg %p77
      %p308 = pneg %p74
      %p309 = scmp.lt.s32.totalorder %s22, 1
      %s310 = scalar_select %p309, %s22, 1
      %s311 = smul.addr %s310, 3
      %s312 = smul.addr %s311, 2
      %s313 = scalar_lea.vmem %s2, %s312
      %p314 = pneg %p103
      %p315 = pneg %p100
      %p316 = scmp.lt.s32.totalorder %s22, 1
      %s317 = scalar_select %p316, %s22, 1
      %s318 = smul.addr %s317, 3
      %s319 = smul.addr %s318, 2
      %s320 = scalar_lea.vmem %s3, %s319
      %p321 = pneg %p129
      %p322 = pneg %p126
      %p323 = pneg %p150
      %p324 = pneg %p147
      %p325 = pneg %p171
      %p326 = pneg %p168
      %p327 = scmp.lt.s32.totalorder %s23, 1
      %s328 = scalar_select %p327, %s23, 1
      %s329 = scalar_lea.vmem %s6, %s328
      %p330 = pneg %p197
      %p331 = pneg %p194
      %p332 = pneg %p225
      %p333 = pneg %p222
      %p334 = scmp.lt.s32.totalorder %s22, 1
      %s335 = scalar_select %p334, %s22, 1
      %p336 = scmp.lt.s32.totalorder %s23, 1
      %s337 = scalar_select %p336, %s23, 1
      %s338 = smul.addr %s335, 2
      %s339 = sadd.s32 %s337, %s338
      %s340 = smul.addr %s339, 8
      %s341 = scalar_lea.vmem %s7, %s340
      %p342 = scmp.lt.s32.totalorder %s22, 1
      %s343 = scalar_select %p342, %s22, 1
      %s344 = smul.addr %s343, 3
      %s345 = smul.addr %s344, 2
      %s346 = scalar_lea.vmem %s0, %s345
      %p347 = scmp.lt.s32.totalorder %s22, 1
      %s348 = scalar_select %p347, %s22, 1
      %s349 = smul.addr %s348, 3
      %s350 = smul.addr %s349, 2
      %s351 = scalar_lea.vmem %s1, %s350
      %p352 = scmp.lt.s32.totalorder %s22, 1
      %s353 = scalar_select %p352, %s22, 1
      %s354 = smul.addr %s353, 3
      %s355 = smul.addr %s354, 2
      %s356 = scalar_lea.vmem %s2, %s355
      %p357 = scmp.lt.s32.totalorder %s22, 1
      %s358 = scalar_select %p357, %s22, 1
      %s359 = smul.addr %s358, 3
      %s360 = smul.addr %s359, 2
      %s361 = scalar_lea.vmem %s3, %s360
      %p362 = scmp.lt.s32.totalorder %s23, 1
      %s363 = scalar_select %p362, %s23, 1
      %s364 = scalar_lea.vmem %s6, %s363
      %p365 = scmp.lt.s32.totalorder %s22, 1
      %s366 = scalar_select %p365, %s22, 1
      %p367 = scmp.lt.s32.totalorder %s23, 1
      %s368 = scalar_select %p367, %s23, 1
      %s369 = smul.addr %s366, 2
      %s370 = sadd.s32 %s368, %s369
      %s371 = smul.addr %s370, 8
      %s372 = scalar_lea.vmem %s7, %s371
      %s374 = smul.u32 %s23, 128
      %s375 = sshra.s32 %s374, 7
      %s376 = sand.u32 %s374, 127
      %s377 = smul.addr %s375, 2
      %s378 = scalar_lea.vmem %s346, %s377
      %v379 = vld [vmem:[%s378] sm:$0xf]
      %s380 = smul.addr %s375, 2
      %s381 = scalar_lea.vmem %s351, %s380
      %v382 = vld [vmem:[%s381] sm:$0xf]
      %s383 = smul.addr %s375, 2
      %s384 = scalar_lea.vmem %s356, %s383
      %v385 = vld [vmem:[%s384] sm:$0xf]
      %s386 = smul.addr %s375, 2
      %s387 = scalar_lea.vmem %s361, %s386
      %v388 = vld [vmem:[%s387] sm:$0xf]
      %389 = vst [vmem:[#allocation2] sm:$0x3] %v388
      %s391 = scalar_lea.vmem [#allocation1], 1
      %392 = vst [vmem:[%s391] ss:$2 sm:$0xff] %v385
      %v393 = vld.sshfl [vmem:[#allocation1] sm:$0xff pattern:$0x75643120]
      %395 = vrot.lane.b32.xlu0 %v393, 127
      %v396 = vpop.permute.xlu0 %395
      %v397 = vrot.slane %v396, 4
      %vm398 = vcmask 1039360
      %v399 = vsel %vm398, %v396, %v397
      %401 = vst [vmem:[#allocation2] sm:$0xc] %v399
      %403 = vst [vmem:[#allocation1] ss:$2 sm:$0xff] %v388
      %v404 = vld.sshfl [vmem:[#allocation1] sm:$0xff pattern:$0x75643120]
      %406 = vrot.lane.b32.xlu0 %v404, 127
      %v407 = vpop.permute.xlu0 %406
      %v408 = vrot.slane %v407, 4
      %v409 = vsel %vm398, %v407, %v408
      %411 = vst [vmem:[#allocation2 + $0x4] sm:$0x3] %v409
      %s413 = scalar_lea.vmem [#allocation1], 1
      %414 = vst [vmem:[%s413] ss:$2 sm:$0xff] %v382
      %v415 = vld.sshfl [vmem:[#allocation1] sm:$0xff pattern:$0x75643120]
      %417 = vrot.lane.b32.xlu0 %v415, 119
      %v418 = vpop.permute.xlu0 %417
      %v419 = vrot.slane %v418, 4
      %vm420 = vcmask 973824
      %v421 = vsel %vm420, %v418, %v419
      %423 = vst [vmem:[#allocation2 + $0x4] sm:$0xc] %v421
      %425 = vst [vmem:[#allocation1] ss:$2 sm:$0xff] %v379
      %v426 = vld.sshfl [vmem:[#allocation1] sm:$0xff pattern:$0x75643120]
      %428 = vrot.lane.b32.xlu0 %v426, 118
      %v429 = vpop.permute.xlu0 %428
      %v430 = vrot.slane %v429, 4
      %vm431 = vcmask 965632
      %v432 = vsel %vm431, %v429, %v430
      %434 = vst [vmem:[#allocation2 + $0x8] sm:$0x3] %v432
      %s435 = scalar_lea.vmem [#allocation1], 1
      %436 = vst [vmem:[%s435] ss:$2 sm:$0xff] %v382
      %v437 = vld.sshfl [vmem:[#allocation1] sm:$0xff pattern:$0x75643120]
      %439 = vrot.lane.b32.xlu0 %v437, 118
      %v440 = vpop.permute.xlu0 %439
      %v441 = vrot.slane %v440, 4
      %v442 = vsel %vm431, %v440, %v441
      %444 = vst [vmem:[#allocation2 + $0x8] sm:$0xc] %v442
      %445 = vst [vmem:[#allocation1] ss:$2 sm:$0xff] %v388
      %v446 = vld.sshfl [vmem:[#allocation1] sm:$0xff pattern:$0x75643120]
      %448 = vrot.lane.b32.xlu0 %v446, 119
      %v449 = vpop.permute.xlu0 %448
      %v450 = vrot.slane %v449, 4
      %v451 = vsel %vm420, %v449, %v450
      %453 = vst [vmem:[#allocation2 + $0xc] sm:$0x3] %v451
      %s454 = scalar_lea.vmem [#allocation1], 1
      %455 = vst [vmem:[%s454] ss:$2 sm:$0xff] %v385
      %v456 = vld.sshfl [vmem:[#allocation1] sm:$0xff pattern:$0x75643120]
      %458 = vrot.lane.b32.xlu0 %v456, 118
      %v459 = vpop.permute.xlu0 %458
      %v460 = vrot.slane %v459, 4
      %v461 = vsel %vm431, %v459, %v460
      %463 = vst [vmem:[#allocation2 + $0xc] sm:$0xc] %v461
      %464 = vst [vmem:[#allocation1] ss:$2 sm:$0xff] %v388
      %v465 = vld.sshfl [vmem:[#allocation1] sm:$0xff pattern:$0x75643120]
      %467 = vrot.lane.b32.xlu0 %v465, 118
      %v468 = vpop.permute.xlu0 %467
      %v469 = vrot.slane %v468, 4
      %v470 = vsel %vm431, %v468, %v469
      %472 = vst [vmem:[#allocation2 + $0x10] sm:$0x3] %v470
      %v473 = vld [vmem:[%s4] sm:$0xf]
      %v474 = vld [vmem:[#allocation2] sm:$0xf]
      %v475 = vld [vmem:[#allocation2 + $0x4] sm:$0xf]
      %v476 = vld [vmem:[#allocation2 + $0x8] sm:$0xf]
      %v477 = vld [vmem:[#allocation2 + $0xc] sm:$0xf]
      %v478 = vld [vmem:[#allocation2 + $0x10] sm:$0x3]
      %v479 = vld [vmem:[%s5] sm:$0xff]
      %481 = vset.pattern.permute.xlu0 0
      %482 = vperm.xlu0 %481, %v479
      %v483 = vpop.permute.xlu0 %482
      %v490 = vunpack.c.l.b16 %v474
      %v491 = vunpack.c.l.b16 %v475
      %v492 = vunpack.c.l.b16 %v476
      %v493 = vunpack.c.l.b16 %v477
      %v494 = vunpack.c.l.b16 %v478
      %v495 = vpack.c.b16 %v491, %v490
      %v496 = vpack.c.b16 %v493, %v492
      %v497 = vpack.c.b16 %v494, %v494
      %vm500 = vcmask 293888
      %v502 = vsel %vm500, %v473, 0
      %vm504 = vcmask 1041408
      %v506 = vsel %vm504, %v497, 0
      %508 = vmatpush.bf16.msra.mxu0 0
      %509 = vmatpush.bf16.msra.mxu0 0
      %510 = vmatpush.bf16.msra.mxu0 0
      %511 = vmatpush.bf16.msra.mxu0 0
      %512 = vmatpush.bf16.msra.mxu0 0
      %513 = vmatpush.bf16.msra.mxu0 %v506
      %514 = vmatpush.bf16.msra.mxu0 %v496
      %515 = vmatpush.bf16.msra.mxu0 %v495
      %516 = vmatmul.bf16.gmra.mxu0 %v502
      %v517 = vpop.f32.mrf.mxu0
      %v518 = vadd.f32 %v483, %v517
      %v519 = vpop.f32.mrf.mxu0
      %520 = vdwg.mxu0
      %v521 = vmax.f32 %v518, 0.0
      %v522 = vld [vmem:[%s364] sm:$0x1]
      %v524 = vperm.slane %v522, 0
      %v526 = vmul.f32 %v521, %v524
      %527 = vst [vmem:[%s372] sm:$0xff] %v526
      %p528 = scmp.lt.s32.totalorder %s22, 1
      %s529 = scalar_select %p528, %s22, 1
      %p530 = scmp.lt.s32.totalorder %s23, 1
      %s531 = scalar_select %p530, %s23, 1
      %s532 = smul.addr %s529, 2
      %s533 = sadd.s32 %s531, %s532
      %s534 = smul.addr %s533, 8
      %s535 = scalar_lea.vmem %s7, %s534
      // Predicated region
      $region49: #{detail_branch_forward.8} parent=47 // pred_check
        %p536 = pneg %p222
      $region50: #{detail_branch_forward.8} parent=47 // pred_check_branch
        %538 = sbr.rel (%p536) target = $region52
      $region51: #{detail_branch_forward.8} parent=47 // pred_region
        _
      $region52: #{detail_branch_forward.8} parent=47 // pred_fallthru
        _
    $region48: #{detail_branch_forward.8} parent=5 // pred_fallthru
      _
    %p539 = scmp.le.s32.totalorder 2, %s13
    // Predicated region
    $region53: #{detail_branch_forward.8} parent=5 // pred_check
      %p540 = pneg %p539
    $region54: #{detail_branch_forward.8} parent=5 // pred_check_branch
      %542 = sbr.rel (%p540) target = $region56
    $region55: #{detail_branch_forward.8} parent=5 // pred_region
      %s543 = ssub.s32 %s13, 2
      // Predicated region
      $region57: #{detail_branch_forward.8} parent=55 // pred_check
        %p544 = pneg %p228
      $region58: #{detail_branch_forward.8} parent=55 // pred_check_branch
        %546 = sbr.rel (%p544) target = $region60
      $region59: #{detail_branch_forward.8} parent=55 // pred_region
        %p547 = scmp.lt.s32.totalorder %s24, 1
        %s548 = scalar_select %p547, %s24, 1
        %p549 = scmp.lt.s32.totalorder %s25, 1
        %s550 = scalar_select %p549, %s25, 1
        %s551 = smul.addr %s548, 2
        %s552 = sadd.s32 %s550, %s551
        %s553 = smul.addr %s552, 8
        %s554 = scalar_lea.vmem %s7, %s553
      $region60: #{detail_branch_forward.8} parent=55 // pred_fallthru
        _
    $region56: #{detail_branch_forward.8} parent=5 // pred_fallthru
      _
  $region6: #{detail_branch_forward.8} parent=0 // loop_footer
    %s17 = sadd.s32 1, %s13
  $region7: #{detail_branch_forward.8} parent=0 // loop_footer_branch
    %12 = sbr.rel target = $region3
  $region8: #{detail_branch_forward.8} parent=0 // loop_exit
    _

// kernel: detail_branch_forward.9
$region0: #{detail_branch_forward.9}
  #allocation0 [shape = 'u32[]', space=smem, size = 0x4, offset = 0x4, fixed_abs, tag = 'smem constant byte address 0x4 - core index']
  #allocation1 [shape = 'u32[72,128]{1,0:T(1,128)}', space=vmem, size = 0x9000, scoped, tag = 'internal scratch']
  #allocation2 [shape = 'bf16[72,128]{1,0:T(8,128)(2,1)}', space=vmem, size = 0x4800, scoped, tag = 'scratch operand']
  %s0 = inlined_call_operand.vmem [shape: f32[2,8,256], index: 0, kind: input, shape index: {}]
  %s1 = inlined_call_operand.vmem [shape: bf16[8,72], index: 1, kind: input, shape index: {}]
  %s2 = inlined_call_operand.vmem [shape: f32[8,1], index: 2, kind: input, shape index: {}]
  %s3 = inlined_call_operand.vmem [shape: f32[1,128], index: 3, kind: input, shape index: {}]
  %s4 = inlined_call_operand.vmem [shape: f32[2,8,128], index: 4, kind: output, shape index: {}]
  %s5 = sld [smem:[#allocation0]]
  $region49: #{detail_branch_forward.9} parent=0
    _
  %s7 = ssub.s32 1, %s5
  %s8 = scalar_select 0, %s7, %s5
  loop: start=0, step=1, limit=4
  $region2: #{detail_branch_forward.9} parent=0 // loop_pre_header
    _
  $region3: #{detail_branch_forward.9} parent=0 // loop_header
    %s10 = sphi 0, %s14
    %p11 = scmp.ge.s32.totalorder %s10, 4
    %s17 = sphi 0, %s29
    %s18 = sphi 0, %s25
    %s19 = sphi 0, %s17
    %s20 = sphi 0, %s18
    %s21 = sphi 0, %s19
    %s22 = sphi 0, %s20
    %s32 = sphi 0, %s34
    %s35 = sphi 0, %s32
    %s36 = sphi 0, %s35
    %s52 = sphi 0, %s36
    %s56 = sphi 0, %s56
    %s58 = sphi 0, %s56
    %s59 = sphi 0, %s58
    %s73 = sphi 0, %s59
    %s77 = sphi 0, %s77
    %s79 = sphi 0, %s77
    %s80 = sphi 0, %s79
    %s94 = sphi 0, %s80
    %s100 = sphi 0, %s102
    %s103 = sphi 0, %s100
    %s104 = sphi 0, %s103
    %s120 = sphi 0, %s104
    %s128 = sphi 0, %s130
    %s131 = sphi 0, %s128
    %s132 = sphi 0, %s131
    %s148 = sphi 0, %s132
  $region4: #{detail_branch_forward.9} parent=0 // loop_header_branch
    %13 = sbr.rel (%p11) target = $region8
  $region5: #{detail_branch_forward.9} parent=0 // loop_body
    %s15 = ssub.s32 %s10, 1
    %s16 = ssub.s32 %s10, 2
    %s23 = sadd.s32 1, %s18
    %p24 = scmp.ge.s32.totalorder %s23, 1
    %s25 = scalar_select %p24, 0, %s23
    %s26 = sadd.s32 1, %s17
    %s27 = scalar_select %p24, %s26, %s17
    %p28 = scmp.ge.s32.totalorder %s27, 2
    %s29 = scalar_select %p28, 0, %s27
    %s30 = ssub.s32 %s17, %s29
    %p31 = scmp.eq.s32.totalorder %s30, 0
    %s33 = sadd.s32 %s32, 1
    %s34 = scalar_select %p31, %s32, %s33
    %p37 = pneg %p31
    %p38 = scmp.eq.s32.totalorder %s10, 1
    %p39 = por %p37, %p38
    %p40 = scmp.ne.s32.totalorder %s32, %s35
    %p41 = scmp.eq.s32.totalorder %s10, 0
    %p42 = por %p40, %p41
    %p43 = scmp.ne.s32.totalorder %s32, %s35
    %p44 = scmp.eq.s32.totalorder %s15, 1
    %p45 = por %p43, %p44
    %p46 = scmp.ne.s32.totalorder %s35, %s36
    %p47 = scmp.eq.s32.totalorder %s15, 0
    %p48 = por %p46, %p47
    %p49 = scmp.ne.s32.totalorder %s35, %s36
    %p50 = scmp.eq.s32.totalorder %s16, 1
    %p51 = por %p49, %p50
    %p53 = scmp.ne.s32.totalorder %s36, %s52
    %p54 = scmp.eq.s32.totalorder %s16, 0
    %p55 = por %p53, %p54
    %s57 = sadd.s32 %s56, 1
    %p60 = scmp.eq.s32.totalorder %s10, 1
    %p61 = scmp.ne.s32.totalorder %s56, %s58
    %p62 = scmp.eq.s32.totalorder %s10, 0
    %p63 = por %p61, %p62
    %p64 = scmp.ne.s32.totalorder %s56, %s58
    %p65 = scmp.eq.s32.totalorder %s15, 1
    %p66 = por %p64, %p65
    %p67 = scmp.ne.s32.totalorder %s58, %s59
    %p68 = scmp.eq.s32.totalorder %s15, 0
    %p69 = por %p67, %p68
    %p70 = scmp.ne.s32.totalorder %s58, %s59
    %p71 = scmp.eq.s32.totalorder %s16, 1
    %p72 = por %p70, %p71
    %p74 = scmp.ne.s32.totalorder %s59, %s73
    %p75 = scmp.eq.s32.totalorder %s16, 0
    %p76 = por %p74, %p75
    %s78 = sadd.s32 %s77, 1
    %p81 = scmp.eq.s32.totalorder %s10, 1
    %p82 = scmp.ne.s32.totalorder %s77, %s79
    %p83 = scmp.eq.s32.totalorder %s10, 0
    %p84 = por %p82, %p83
    %p85 = scmp.ne.s32.totalorder %s77, %s79
    %p86 = scmp.eq.s32.totalorder %s15, 1
    %p87 = por %p85, %p86
    %p88 = scmp.ne.s32.totalorder %s79, %s80
    %p89 = scmp.eq.s32.totalorder %s15, 0
    %p90 = por %p88, %p89
    %p91 = scmp.ne.s32.totalorder %s79, %s80
    %p92 = scmp.eq.s32.totalorder %s16, 1
    %p93 = por %p91, %p92
    %p95 = scmp.ne.s32.totalorder %s80, %s94
    %p96 = scmp.eq.s32.totalorder %s16, 0
    %p97 = por %p95, %p96
    %s98 = ssub.s32 %s18, %s25
    %p99 = scmp.eq.s32.totalorder %s98, 0
    %s101 = sadd.s32 %s100, 1
    %s102 = scalar_select %p99, %s100, %s101
    %p105 = pneg %p99
    %p106 = scmp.eq.s32.totalorder %s10, 1
    %p107 = por %p105, %p106
    %p108 = scmp.ne.s32.totalorder %s100, %s103
    %p109 = scmp.eq.s32.totalorder %s10, 0
    %p110 = por %p108, %p109
    %p111 = scmp.ne.s32.totalorder %s100, %s103
    %p112 = scmp.eq.s32.totalorder %s15, 1
    %p113 = por %p111, %p112
    %p114 = scmp.ne.s32.totalorder %s103, %s104
    %p115 = scmp.eq.s32.totalorder %s15, 0
    %p116 = por %p114, %p115
    %p117 = scmp.ne.s32.totalorder %s103, %s104
    %p118 = scmp.eq.s32.totalorder %s16, 1
    %p119 = por %p117, %p118
    %p121 = scmp.ne.s32.totalorder %s104, %s120
    %p122 = scmp.eq.s32.totalorder %s16, 0
    %p123 = por %p121, %p122
    %s124 = ssub.s32 %s17, %s29
    %s125 = ssub.s32 %s18, %s25
    %s126 = sor.u32 %s124, %s125
    %p127 = scmp.eq.s32.totalorder %s126, 0
    %s129 = sadd.s32 %s128, 1
    %s130 = scalar_select %p127, %s128, %s129
    %p133 = pneg %p127
    %p134 = scmp.eq.s32.totalorder %s10, 1
    %p135 = por %p133, %p134
    %p136 = scmp.ne.s32.totalorder %s128, %s131
    %p137 = scmp.eq.s32.totalorder %s10, 0
    %p138 = por %p136, %p137
    %p139 = scmp.ne.s32.totalorder %s128, %s131
    %p140 = scmp.eq.s32.totalorder %s15, 1
    %p141 = por %p139, %p140
    %p142 = scmp.ne.s32.totalorder %s131, %s132
    %p143 = scmp.eq.s32.totalorder %s15, 0
    %p144 = por %p142, %p143
    %p145 = scmp.ne.s32.totalorder %s131, %s132
    %p146 = scmp.eq.s32.totalorder %s16, 1
    %p147 = por %p145, %p146
    %p149 = scmp.ne.s32.totalorder %s132, %s148
    %p150 = scmp.eq.s32.totalorder %s16, 0
    %p151 = por %p149, %p150
    %p152 = scmp.le.s32.totalorder 1, %s10
    %p153 = scmp.lt.s32.totalorder %s10, 3
    %p154 = pnand %p152, %p153
    %p155 = pneg %p154
    // Predicated region
    $region9: #{detail_branch_forward.9} parent=5 // pred_check
      _
    $region10: #{detail_branch_forward.9} parent=5 // pred_check_branch
      %157 = sbr.rel (%p154) target = $region12
    $region11: #{detail_branch_forward.9} parent=5 // pred_region
      %s158 = ssub.s32 %s10, 1
      // Predicated region
      $region13: #{detail_branch_forward.9} parent=11 // pred_check
        %p159 = pneg %p69
      $region14: #{detail_branch_forward.9} parent=11 // pred_check_branch
        %161 = sbr.rel (%p159) target = $region16
      $region15: #{detail_branch_forward.9} parent=11 // pred_region
        _
      $region16: #{detail_branch_forward.9} parent=11 // pred_fallthru
        _
      // Predicated region
      $region17: #{detail_branch_forward.9} parent=11 // pred_check
        %p162 = pneg %p90
      $region18: #{detail_branch_forward.9} parent=11 // pred_check_branch
        %164 = sbr.rel (%p162) target = $region20
      $region19: #{detail_branch_forward.9} parent=11 // pred_region
        _
      $region20: #{detail_branch_forward.9} parent=11 // pred_fallthru
        _
      // Predicated region
      $region21: #{detail_branch_forward.9} parent=11 // pred_check
        %p165 = pneg %p116
      $region22: #{detail_branch_forward.9} parent=11 // pred_check_branch
        %167 = sbr.rel (%p165) target = $region24
      $region23: #{detail_branch_forward.9} parent=11 // pred_region
        %p168 = scmp.lt.s32.totalorder %s20, 0
        %s169 = scalar_select %p168, %s20, 0
        %s170 = scalar_lea.vmem %s3, %s169
      $region24: #{detail_branch_forward.9} parent=11 // pred_fallthru
        _
    $region12: #{detail_branch_forward.9} parent=5 // pred_fallthru
      _
    %p171 = scmp.lt.s32.totalorder %s10, 2
    // Predicated region
    $region25: #{detail_branch_forward.9} parent=5 // pred_check
      %p172 = pneg %p171
    $region26: #{detail_branch_forward.9} parent=5 // pred_check_branch
      %174 = sbr.rel (%p172) target = $region28
    $region27: #{detail_branch_forward.9} parent=5 // pred_region
      // Predicated region
      $region29: #{detail_branch_forward.9} parent=27 // pred_check
        %p175 = pneg %p42
      $region30: #{detail_branch_forward.9} parent=27 // pred_check_branch
        %177 = sbr.rel (%p175) target = $region32
      $region31: #{detail_branch_forward.9} parent=27 // pred_region
        %p178 = scmp.lt.s32.totalorder %s17, 1
        %s179 = scalar_select %p178, %s17, 1
        %s180 = smul.addr %s179, 2
        %s181 = smul.addr %s180, 8
        %s182 = scalar_lea.vmem %s0, %s181
      $region32: #{detail_branch_forward.9} parent=27 // pred_fallthru
        _
    $region28: #{detail_branch_forward.9} parent=5 // pred_fallthru
      _
    %p183 = scmp.le.s32.totalorder 1, %s10
    %p184 = scmp.lt.s32.totalorder %s10, 3
    %p185 = pnand %p183, %p184
    %p186 = pneg %p185
    // Predicated region
    $region33: #{detail_branch_forward.9} parent=5 // pred_check
      _
    $region34: #{detail_branch_forward.9} parent=5 // pred_check_branch
      %188 = sbr.rel (%p185) target = $region36
    $region35: #{detail_branch_forward.9} parent=5 // pred_region
      %s189 = ssub.s32 %s10, 1
      %p190 = scmp.lt.s32.totalorder %s19, 1
      %s191 = scalar_select %p190, %s19, 1
      %s192 = smul.addr %s191, 2
      %s193 = smul.addr %s192, 8
      %s194 = scalar_lea.vmem %s0, %s193
      %p195 = pneg %p48
      %p196 = pneg %p45
      %p197 = pneg %p69
      %p198 = pneg %p66
      %p199 = pneg %p90
      %p200 = pneg %p87
      %p201 = scmp.lt.s32.totalorder %s20, 0
      %s202 = scalar_select %p201, %s20, 0
      %s203 = scalar_lea.vmem %s3, %s202
      %p204 = pneg %p116
      %p205 = pneg %p113
      %p206 = pneg %p144
      %p207 = pneg %p141
      %p208 = scmp.lt.s32.totalorder %s19, 1
      %s209 = scalar_select %p208, %s19, 1
      %p210 = scmp.lt.s32.totalorder %s20, 0
      %s211 = scalar_select %p210, %s20, 0
      %s212 = sadd.s32 %s211, %s209
      %s213 = smul.addr %s212, 8
      %s214 = scalar_lea.vmem %s4, %s213
      %p215 = scmp.lt.s32.totalorder %s19, 1
      %s216 = scalar_select %p215, %s19, 1
      %s217 = smul.addr %s216, 2
      %s218 = smul.addr %s217, 8
      %s219 = scalar_lea.vmem %s0, %s218
      %p220 = scmp.lt.s32.totalorder %s20, 0
      %s221 = scalar_select %p220, %s20, 0
      %s222 = scalar_lea.vmem %s3, %s221
      %p223 = scmp.lt.s32.totalorder %s19, 1
      %s224 = scalar_select %p223, %s19, 1
      %p225 = scmp.lt.s32.totalorder %s20, 0
      %s226 = scalar_select %p225, %s20, 0
      %s227 = sadd.s32 %s226, %s224
      %s228 = smul.addr %s227, 8
      %s229 = scalar_lea.vmem %s4, %s228
      %v231 = vld [vmem:[%s219] sm:$0xff]
      %v232 = vld [vmem:[%s219 + $0x8] sm:$0xff]
      %v233 = vpack.c.bf16 %v232, %v231
      %234 = vst [vmem:[#allocation2] sm:$0xf] %v233
      %236 = vrot.lane.b32.xlu0 %v233, 127
      %v237 = vpop.permute.xlu0 %236
      %v238 = vrot.slane %v237, 4
      %vm239 = vcmask 1039360
      %v240 = vsel %vm239, %v237, %v238
      %242 = vst [vmem:[#allocation2 + $0x4] sm:$0xf] %v240
      %243 = vrot.lane.b32.xlu0 %v233, 126
      %v244 = vpop.permute.xlu0 %243
      %v245 = vrot.slane %v244, 4
      %vm246 = vcmask 1031168
      %v247 = vsel %vm246, %v244, %v245
      %249 = vst [vmem:[#allocation2 + $0x8] sm:$0xf] %v247
      %250 = vrot.lane.b32.xlu0 %v233, 119
      %v251 = vpop.permute.xlu0 %250
      %v252 = vrot.slane %v251, 4
      %vm253 = vcmask 973824
      %v254 = vsel %vm253, %v251, %v252
      %256 = vst [vmem:[#allocation2 + $0xc] sm:$0xf] %v254
      %257 = vrot.lane.b32.xlu0 %v233, 118
      %v258 = vpop.permute.xlu0 %257
      %v259 = vrot.slane %v258, 4
      %vm260 = vcmask 965632
      %v261 = vsel %vm260, %v258, %v259
      %263 = vst [vmem:[#allocation2 + $0x10] sm:$0xf] %v261
      %264 = vrot.lane.b32.xlu0 %v233, 117
      %v265 = vpop.permute.xlu0 %264
      %v266 = vrot.slane %v265, 4
      %vm267 = vcmask 957440
      %v268 = vsel %vm267, %v265, %v266
      %270 = vst [vmem:[#allocation2 + $0x14] sm:$0xf] %v268
      %271 = vrot.lane.b32.xlu0 %v233, 110
      %v272 = vpop.permute.xlu0 %271
      %v273 = vrot.slane %v272, 4
      %vm274 = vcmask 900096
      %v275 = vsel %vm274, %v272, %v273
      %277 = vst [vmem:[#allocation2 + $0x18] sm:$0xf] %v275
      %278 = vrot.lane.b32.xlu0 %v233, 109
      %v279 = vpop.permute.xlu0 %278
      %v280 = vrot.slane %v279, 4
      %vm281 = vcmask 891904
      %v282 = vsel %vm281, %v279, %v280
      %284 = vst [vmem:[#allocation2 + $0x1c] sm:$0xf] %v282
      %285 = vrot.lane.b32.xlu0 %v233, 108
      %v286 = vpop.permute.xlu0 %285
      %v287 = vrot.slane %v286, 4
      %vm288 = vcmask 883712
      %v289 = vsel %vm288, %v286, %v287
      %291 = vst [vmem:[#allocation2 + $0x20] sm:$0xf] %v289
      %v292 = vld [vmem:[%s1] sm:$0xf]
      %v293 = vld [vmem:[#allocation2] sm:$0xf]
      %v294 = vld [vmem:[#allocation2 + $0x4] sm:$0xf]
      %v295 = vld [vmem:[#allocation2 + $0x8] sm:$0xf]
      %v296 = vld [vmem:[#allocation2 + $0xc] sm:$0xf]
      %v297 = vld [vmem:[#allocation2 + $0x10] sm:$0xf]
      %v298 = vld [vmem:[#allocation2 + $0x14] sm:$0xf]
      %v299 = vld [vmem:[#allocation2 + $0x18] sm:$0xf]
      %v300 = vld [vmem:[#allocation2 + $0x1c] sm:$0xf]
      %v301 = vld [vmem:[#allocation2 + $0x20] sm:$0xf]
      %v302 = vld [vmem:[%s2] sm:$0xff]
      %304 = vset.pattern.permute.xlu0 0
      %305 = vperm.xlu0 %304, %v302
      %v306 = vpop.permute.xlu0 %305
      %v317 = vunpack.c.l.b16 %v293
      %v318 = vunpack.c.l.b16 %v294
      %v319 = vunpack.c.l.b16 %v295
      %v320 = vunpack.c.l.b16 %v296
      %v321 = vunpack.c.l.b16 %v297
      %v322 = vunpack.c.l.b16 %v298
      %v323 = vunpack.c.l.b16 %v299
      %v324 = vunpack.c.l.b16 %v300
      %v325 = vunpack.c.l.b16 %v301
      %v326 = vpack.c.b16 %v318, %v317
      %v327 = vpack.c.b16 %v320, %v319
      %v328 = vpack.c.b16 %v322, %v321
      %v329 = vpack.c.b16 %v324, %v323
      %v330 = vpack.c.b16 %v325, %v325
      %vm335 = vcmask 588800
      %v337 = vsel %vm335, %v292, 0
      %vm339 = vcmask 1043456
      %v341 = vsel %vm339, %v330, 0
      %343 = vmatpush.bf16.msra.mxu0 0
      %344 = vmatpush.bf16.msra.mxu0 0
      %345 = vmatpush.bf16.msra.mxu0 0
      %346 = vmatpush.bf16.msra.mxu0 %v341
      %347 = vmatpush.bf16.msra.mxu0 %v329
      %348 = vmatpush.bf16.msra.mxu0 %v328
      %349 = vmatpush.bf16.msra.mxu0 %v327
      %350 = vmatpush.bf16.msra.mxu0 %v326
      %351 = vmatmul.bf16.gmra.mxu0 %v337
      %v352 = vpop.f32.mrf.mxu0
      %v353 = vadd.f32 %v306, %v352
      %v354 = vpop.f32.mrf.mxu0
      %355 = vdwg.mxu0
      %v356 = vmax.f32 %v353, 0.0
      %v357 = vld [vmem:[%s222] sm:$0x1]
      %v359 = vperm.slane %v357, 0
      %v361 = vmul.f32 %v356, %v359
      %362 = vst [vmem:[%s229] sm:$0xff] %v361
      %p363 = scmp.lt.s32.totalorder %s19, 1
      %s364 = scalar_select %p363, %s19, 1
      %p365 = scmp.lt.s32.totalorder %s20, 0
      %s366 = scalar_select %p365, %s20, 0
      %s367 = sadd.s32 %s366, %s364
      %s368 = smul.addr %s367, 8
      %s369 = scalar_lea.vmem %s4, %s368
      // Predicated region
      $region37: #{detail_branch_forward.9} parent=35 // pred_check
        %p370 = pneg %p141
      $region38: #{detail_branch_forward.9} parent=35 // pred_check_branch
        %372 = sbr.rel (%p370) target = $region40
      $region39: #{detail_branch_forward.9} parent=35 // pred_region
        _
      $region40: #{detail_branch_forward.9} parent=35 // pred_fallthru
        _
    $region36: #{detail_branch_forward.9} parent=5 // pred_fallthru
      _
    %p373 = scmp.le.s32.totalorder 2, %s10
    // Predicated region
    $region41: #{detail_branch_forward.9} parent=5 // pred_check
      %p374 = pneg %p373
    $region42: #{detail_branch_forward.9} parent=5 // pred_check_branch
      %376 = sbr.rel (%p374) target = $region44
    $region43: #{detail_branch_forward.9} parent=5 // pred_region
      %s377 = ssub.s32 %s10, 2
      // Predicated region
      $region45: #{detail_branch_forward.9} parent=43 // pred_check
        %p378 = pneg %p147
      $region46: #{detail_branch_forward.9} parent=43 // pred_check_branch
        %380 = sbr.rel (%p378) target = $region48
      $region47: #{detail_branch_forward.9} parent=43 // pred_region
        %p381 = scmp.lt.s32.totalorder %s21, 1
        %s382 = scalar_select %p381, %s21, 1
        %p383 = scmp.lt.s32.totalorder %s22, 0
        %s384 = scalar_select %p383, %s22, 0
        %s385 = sadd.s32 %s384, %s382
        %s386 = smul.addr %s385, 8
        %s387 = scalar_lea.vmem %s4, %s386
      $region48: #{detail_branch_forward.9} parent=43 // pred_fallthru
        _
    $region44: #{detail_branch_forward.9} parent=5 // pred_fallthru
      _
  $region6: #{detail_branch_forward.9} parent=0 // loop_footer
    %s14 = sadd.s32 1, %s10
  $region7: #{detail_branch_forward.9} parent=0 // loop_footer_branch
    %9 = sbr.rel target = $region3
  $region8: #{detail_branch_forward.9} parent=0 // loop_exit
    _

// kernel: detail_branch_forward.11
$region0: #{detail_branch_forward.11}
  #allocation0 [shape = 'u32[]', space=smem, size = 0x4, offset = 0x4, fixed_abs, tag = 'smem constant byte address 0x4 - core index']
  #allocation1 [shape = 'u32[72,128]{1,0:T(1,128)}', space=vmem, size = 0x9000, scoped, tag = 'internal scratch']
  #allocation2 [shape = 'bf16[72,128]{1,0:T(8,128)(2,1)}', space=vmem, size = 0x4800, scoped, tag = 'scratch operand']
  %s0 = inlined_call_operand.vmem [shape: f32[2,8,384], index: 0, kind: input, shape index: {}]
  %s1 = inlined_call_operand.vmem [shape: bf16[8,72], index: 1, kind: input, shape index: {}]
  %s2 = inlined_call_operand.vmem [shape: f32[8,1], index: 2, kind: input, shape index: {}]
  %s3 = inlined_call_operand.vmem [shape: f32[1,256], index: 3, kind: input, shape index: {}]
  %s4 = inlined_call_operand.vmem [shape: f32[2,8,256], index: 4, kind: output, shape index: {}]
  %s5 = sld [smem:[#allocation0]]
  $region49: #{detail_branch_forward.11} parent=0
    _
  %s7 = ssub.s32 1, %s5
  %s8 = scalar_select 0, %s7, %s5
  loop: start=0, step=1, limit=6
  $region2: #{detail_branch_forward.11} parent=0 // loop_pre_header
    _
  $region3: #{detail_branch_forward.11} parent=0 // loop_header
    %s10 = sphi 0, %s14
    %p11 = scmp.ge.s32.totalorder %s10, 6
    %s17 = sphi 0, %s29
    %s18 = sphi 0, %s25
    %s19 = sphi 0, %s17
    %s20 = sphi 0, %s18
    %s21 = sphi 0, %s19
    %s22 = sphi 0, %s20
    %s32 = sphi 0, %s34
    %s35 = sphi 0, %s32
    %s36 = sphi 0, %s35
    %s52 = sphi 0, %s36
    %s56 = sphi 0, %s56
    %s58 = sphi 0, %s56
    %s59 = sphi 0, %s58
    %s73 = sphi 0, %s59
    %s77 = sphi 0, %s77
    %s79 = sphi 0, %s77
    %s80 = sphi 0, %s79
    %s94 = sphi 0, %s80
    %s100 = sphi 0, %s102
    %s103 = sphi 0, %s100
    %s104 = sphi 0, %s103
    %s120 = sphi 0, %s104
    %s128 = sphi 0, %s130
    %s131 = sphi 0, %s128
    %s132 = sphi 0, %s131
    %s148 = sphi 0, %s132
  $region4: #{detail_branch_forward.11} parent=0 // loop_header_branch
    %13 = sbr.rel (%p11) target = $region8
  $region5: #{detail_branch_forward.11} parent=0 // loop_body
    %s15 = ssub.s32 %s10, 1
    %s16 = ssub.s32 %s10, 2
    %s23 = sadd.s32 1, %s18
    %p24 = scmp.ge.s32.totalorder %s23, 2
    %s25 = scalar_select %p24, 0, %s23
    %s26 = sadd.s32 1, %s17
    %s27 = scalar_select %p24, %s26, %s17
    %p28 = scmp.ge.s32.totalorder %s27, 2
    %s29 = scalar_select %p28, 0, %s27
    %s30 = ssub.s32 %s17, %s29
    %p31 = scmp.eq.s32.totalorder %s30, 0
    %s33 = sadd.s32 %s32, 1
    %s34 = scalar_select %p31, %s32, %s33
    %p37 = pneg %p31
    %p38 = scmp.eq.s32.totalorder %s10, 3
    %p39 = por %p37, %p38
    %p40 = scmp.ne.s32.totalorder %s32, %s35
    %p41 = scmp.eq.s32.totalorder %s10, 0
    %p42 = por %p40, %p41
    %p43 = scmp.ne.s32.totalorder %s32, %s35
    %p44 = scmp.eq.s32.totalorder %s15, 3
    %p45 = por %p43, %p44
    %p46 = scmp.ne.s32.totalorder %s35, %s36
    %p47 = scmp.eq.s32.totalorder %s15, 0
    %p48 = por %p46, %p47
    %p49 = scmp.ne.s32.totalorder %s35, %s36
    %p50 = scmp.eq.s32.totalorder %s16, 3
    %p51 = por %p49, %p50
    %p53 = scmp.ne.s32.totalorder %s36, %s52
    %p54 = scmp.eq.s32.totalorder %s16, 0
    %p55 = por %p53, %p54
    %s57 = sadd.s32 %s56, 1
    %p60 = scmp.eq.s32.totalorder %s10, 3
    %p61 = scmp.ne.s32.totalorder %s56, %s58
    %p62 = scmp.eq.s32.totalorder %s10, 0
    %p63 = por %p61, %p62
    %p64 = scmp.ne.s32.totalorder %s56, %s58
    %p65 = scmp.eq.s32.totalorder %s15, 3
    %p66 = por %p64, %p65
    %p67 = scmp.ne.s32.totalorder %s58, %s59
    %p68 = scmp.eq.s32.totalorder %s15, 0
    %p69 = por %p67, %p68
    %p70 = scmp.ne.s32.totalorder %s58, %s59
    %p71 = scmp.eq.s32.totalorder %s16, 3
    %p72 = por %p70, %p71
    %p74 = scmp.ne.s32.totalorder %s59, %s73
    %p75 = scmp.eq.s32.totalorder %s16, 0
    %p76 = por %p74, %p75
    %s78 = sadd.s32 %s77, 1
    %p81 = scmp.eq.s32.totalorder %s10, 3
    %p82 = scmp.ne.s32.totalorder %s77, %s79
    %p83 = scmp.eq.s32.totalorder %s10, 0
    %p84 = por %p82, %p83
    %p85 = scmp.ne.s32.totalorder %s77, %s79
    %p86 = scmp.eq.s32.totalorder %s15, 3
    %p87 = por %p85, %p86
    %p88 = scmp.ne.s32.totalorder %s79, %s80
    %p89 = scmp.eq.s32.totalorder %s15, 0
    %p90 = por %p88, %p89
    %p91 = scmp.ne.s32.totalorder %s79, %s80
    %p92 = scmp.eq.s32.totalorder %s16, 3
    %p93 = por %p91, %p92
    %p95 = scmp.ne.s32.totalorder %s80, %s94
    %p96 = scmp.eq.s32.totalorder %s16, 0
    %p97 = por %p95, %p96
    %s98 = ssub.s32 %s18, %s25
    %p99 = scmp.eq.s32.totalorder %s98, 0
    %s101 = sadd.s32 %s100, 1
    %s102 = scalar_select %p99, %s100, %s101
    %p105 = pneg %p99
    %p106 = scmp.eq.s32.totalorder %s10, 3
    %p107 = por %p105, %p106
    %p108 = scmp.ne.s32.totalorder %s100, %s103
    %p109 = scmp.eq.s32.totalorder %s10, 0
    %p110 = por %p108, %p109
    %p111 = scmp.ne.s32.totalorder %s100, %s103
    %p112 = scmp.eq.s32.totalorder %s15, 3
    %p113 = por %p111, %p112
    %p114 = scmp.ne.s32.totalorder %s103, %s104
    %p115 = scmp.eq.s32.totalorder %s15, 0
    %p116 = por %p114, %p115
    %p117 = scmp.ne.s32.totalorder %s103, %s104
    %p118 = scmp.eq.s32.totalorder %s16, 3
    %p119 = por %p117, %p118
    %p121 = scmp.ne.s32.totalorder %s104, %s120
    %p122 = scmp.eq.s32.totalorder %s16, 0
    %p123 = por %p121, %p122
    %s124 = ssub.s32 %s17, %s29
    %s125 = ssub.s32 %s18, %s25
    %s126 = sor.u32 %s124, %s125
    %p127 = scmp.eq.s32.totalorder %s126, 0
    %s129 = sadd.s32 %s128, 1
    %s130 = scalar_select %p127, %s128, %s129
    %p133 = pneg %p127
    %p134 = scmp.eq.s32.totalorder %s10, 3
    %p135 = por %p133, %p134
    %p136 = scmp.ne.s32.totalorder %s128, %s131
    %p137 = scmp.eq.s32.totalorder %s10, 0
    %p138 = por %p136, %p137
    %p139 = scmp.ne.s32.totalorder %s128, %s131
    %p140 = scmp.eq.s32.totalorder %s15, 3
    %p141 = por %p139, %p140
    %p142 = scmp.ne.s32.totalorder %s131, %s132
    %p143 = scmp.eq.s32.totalorder %s15, 0
    %p144 = por %p142, %p143
    %p145 = scmp.ne.s32.totalorder %s131, %s132
    %p146 = scmp.eq.s32.totalorder %s16, 3
    %p147 = por %p145, %p146
    %p149 = scmp.ne.s32.totalorder %s132, %s148
    %p150 = scmp.eq.s32.totalorder %s16, 0
    %p151 = por %p149, %p150
    %p152 = scmp.le.s32.totalorder 1, %s10
    %p153 = scmp.lt.s32.totalorder %s10, 5
    %p154 = pnand %p152, %p153
    %p155 = pneg %p154
    // Predicated region
    $region9: #{detail_branch_forward.11} parent=5 // pred_check
      _
    $region10: #{detail_branch_forward.11} parent=5 // pred_check_branch
      %157 = sbr.rel (%p154) target = $region12
    $region11: #{detail_branch_forward.11} parent=5 // pred_region
      %s158 = ssub.s32 %s10, 1
      // Predicated region
      $region13: #{detail_branch_forward.11} parent=11 // pred_check
        %p159 = pneg %p69
      $region14: #{detail_branch_forward.11} parent=11 // pred_check_branch
        %161 = sbr.rel (%p159) target = $region16
      $region15: #{detail_branch_forward.11} parent=11 // pred_region
        _
      $region16: #{detail_branch_forward.11} parent=11 // pred_fallthru
        _
      // Predicated region
      $region17: #{detail_branch_forward.11} parent=11 // pred_check
        %p162 = pneg %p90
      $region18: #{detail_branch_forward.11} parent=11 // pred_check_branch
        %164 = sbr.rel (%p162) target = $region20
      $region19: #{detail_branch_forward.11} parent=11 // pred_region
        _
      $region20: #{detail_branch_forward.11} parent=11 // pred_fallthru
        _
    $region12: #{detail_branch_forward.11} parent=5 // pred_fallthru
      _
    %p165 = scmp.lt.s32.totalorder %s10, 4
    // Predicated region
    $region21: #{detail_branch_forward.11} parent=5 // pred_check
      %p166 = pneg %p165
    $region22: #{detail_branch_forward.11} parent=5 // pred_check_branch
      %168 = sbr.rel (%p166) target = $region24
    $region23: #{detail_branch_forward.11} parent=5 // pred_region
      // Predicated region
      $region25: #{detail_branch_forward.11} parent=23 // pred_check
        %p169 = pneg %p42
      $region26: #{detail_branch_forward.11} parent=23 // pred_check_branch
        %171 = sbr.rel (%p169) target = $region28
      $region27: #{detail_branch_forward.11} parent=23 // pred_region
        %p172 = scmp.lt.s32.totalorder %s17, 1
        %s173 = scalar_select %p172, %s17, 1
        %s174 = smul.addr %s173, 3
        %s175 = smul.addr %s174, 8
        %s176 = scalar_lea.vmem %s0, %s175
      $region28: #{detail_branch_forward.11} parent=23 // pred_fallthru
        _
      // Predicated region
      $region29: #{detail_branch_forward.11} parent=23 // pred_check
        %p177 = pneg %p110
      $region30: #{detail_branch_forward.11} parent=23 // pred_check_branch
        %179 = sbr.rel (%p177) target = $region32
      $region31: #{detail_branch_forward.11} parent=23 // pred_region
        %p180 = scmp.lt.s32.totalorder %s18, 1
        %s181 = scalar_select %p180, %s18, 1
        %s182 = scalar_lea.vmem %s3, %s181
      $region32: #{detail_branch_forward.11} parent=23 // pred_fallthru
        _
    $region24: #{detail_branch_forward.11} parent=5 // pred_fallthru
      _
    %p183 = scmp.le.s32.totalorder 1, %s10
    %p184 = scmp.lt.s32.totalorder %s10, 5
    %p185 = pnand %p183, %p184
    %p186 = pneg %p185
    // Predicated region
    $region33: #{detail_branch_forward.11} parent=5 // pred_check
      _
    $region34: #{detail_branch_forward.11} parent=5 // pred_check_branch
      %188 = sbr.rel (%p185) target = $region36
    $region35: #{detail_branch_forward.11} parent=5 // pred_region
      %s189 = ssub.s32 %s10, 1
      %p190 = scmp.lt.s32.totalorder %s19, 1
      %s191 = scalar_select %p190, %s19, 1
      %s192 = smul.addr %s191, 3
      %s193 = smul.addr %s192, 8
      %s194 = scalar_lea.vmem %s0, %s193
      %p195 = pneg %p48
      %p196 = pneg %p45
      %p197 = pneg %p69
      %p198 = pneg %p66
      %p199 = pneg %p90
      %p200 = pneg %p87
      %p201 = scmp.lt.s32.totalorder %s20, 1
      %s202 = scalar_select %p201, %s20, 1
      %s203 = scalar_lea.vmem %s3, %s202
      %p204 = pneg %p116
      %p205 = pneg %p113
      %p206 = pneg %p144
      %p207 = pneg %p141
      %p208 = scmp.lt.s32.totalorder %s19, 1
      %s209 = scalar_select %p208, %s19, 1
      %p210 = scmp.lt.s32.totalorder %s20, 1
      %s211 = scalar_select %p210, %s20, 1
      %s212 = smul.addr %s209, 2
      %s213 = sadd.s32 %s211, %s212
      %s214 = smul.addr %s213, 8
      %s215 = scalar_lea.vmem %s4, %s214
      %p216 = scmp.lt.s32.totalorder %s19, 1
      %s217 = scalar_select %p216, %s19, 1
      %s218 = smul.addr %s217, 3
      %s219 = smul.addr %s218, 8
      %s220 = scalar_lea.vmem %s0, %s219
      %p221 = scmp.lt.s32.totalorder %s20, 1
      %s222 = scalar_select %p221, %s20, 1
      %s223 = scalar_lea.vmem %s3, %s222
      %p224 = scmp.lt.s32.totalorder %s19, 1
      %s225 = scalar_select %p224, %s19, 1
      %p226 = scmp.lt.s32.totalorder %s20, 1
      %s227 = scalar_select %p226, %s20, 1
      %s228 = smul.addr %s225, 2
      %s229 = sadd.s32 %s227, %s228
      %s230 = smul.addr %s229, 8
      %s231 = scalar_lea.vmem %s4, %s230
      %s233 = smul.u32 %s20, 128
      %s234 = sshra.s32 %s233, 7
      %s235 = sand.u32 %s233, 127
      %s236 = smul.addr %s234, 8
      %s237 = scalar_lea.vmem %s220, %s236
      %v238 = vld [vmem:[%s237] sm:$0xff]
      %v239 = vld [vmem:[%s237 + $0x8] sm:$0xff]
      %v240 = vpack.c.bf16 %v239, %v238
      %241 = vst [vmem:[#allocation2] sm:$0xf] %v240
      %243 = vrot.lane.b32.xlu0 %v240, 127
      %v244 = vpop.permute.xlu0 %243
      %v245 = vrot.slane %v244, 4
      %vm246 = vcmask 1039360
      %v247 = vsel %vm246, %v244, %v245
      %249 = vst [vmem:[#allocation2 + $0x4] sm:$0xf] %v247
      %250 = vrot.lane.b32.xlu0 %v240, 126
      %v251 = vpop.permute.xlu0 %250
      %v252 = vrot.slane %v251, 4
      %vm253 = vcmask 1031168
      %v254 = vsel %vm253, %v251, %v252
      %256 = vst [vmem:[#allocation2 + $0x8] sm:$0xf] %v254
      %257 = vrot.lane.b32.xlu0 %v240, 123
      %v258 = vpop.permute.xlu0 %257
      %v259 = vrot.slane %v258, 4
      %vm260 = vcmask 1006592
      %v261 = vsel %vm260, %v258, %v259
      %263 = vst [vmem:[#allocation2 + $0xc] sm:$0xf] %v261
      %264 = vrot.lane.b32.xlu0 %v240, 122
      %v265 = vpop.permute.xlu0 %264
      %v266 = vrot.slane %v265, 4
      %vm267 = vcmask 998400
      %v268 = vsel %vm267, %v265, %v266
      %270 = vst [vmem:[#allocation2 + $0x10] sm:$0xf] %v268
      %271 = vrot.lane.b32.xlu0 %v240, 121
      %v272 = vpop.permute.xlu0 %271
      %v273 = vrot.slane %v272, 4
      %vm274 = vcmask 990208
      %v275 = vsel %vm274, %v272, %v273
      %277 = vst [vmem:[#allocation2 + $0x14] sm:$0xf] %v275
      %278 = vrot.lane.b32.xlu0 %v240, 118
      %v279 = vpop.permute.xlu0 %278
      %v280 = vrot.slane %v279, 4
      %vm281 = vcmask 965632
      %v282 = vsel %vm281, %v279, %v280
      %284 = vst [vmem:[#allocation2 + $0x18] sm:$0xf] %v282
      %285 = vrot.lane.b32.xlu0 %v240, 117
      %v286 = vpop.permute.xlu0 %285
      %v287 = vrot.slane %v286, 4
      %vm288 = vcmask 957440
      %v289 = vsel %vm288, %v286, %v287
      %291 = vst [vmem:[#allocation2 + $0x1c] sm:$0xf] %v289
      %292 = vrot.lane.b32.xlu0 %v240, 116
      %v293 = vpop.permute.xlu0 %292
      %v294 = vrot.slane %v293, 4
      %vm295 = vcmask 949248
      %v296 = vsel %vm295, %v293, %v294
      %298 = vst [vmem:[#allocation2 + $0x20] sm:$0xf] %v296
      %v299 = vld [vmem:[%s1] sm:$0xf]
      %v300 = vld [vmem:[#allocation2] sm:$0xf]
      %v301 = vld [vmem:[#allocation2 + $0x4] sm:$0xf]
      %v302 = vld [vmem:[#allocation2 + $0x8] sm:$0xf]
      %v303 = vld [vmem:[#allocation2 + $0xc] sm:$0xf]
      %v304 = vld [vmem:[#allocation2 + $0x10] sm:$0xf]
      %v305 = vld [vmem:[#allocation2 + $0x14] sm:$0xf]
      %v306 = vld [vmem:[#allocation2 + $0x18] sm:$0xf]
      %v307 = vld [vmem:[#allocation2 + $0x1c] sm:$0xf]
      %v308 = vld [vmem:[#allocation2 + $0x20] sm:$0xf]
      %v309 = vld [vmem:[%s2] sm:$0xff]
      %311 = vset.pattern.permute.xlu0 0
      %312 = vperm.xlu0 %311, %v309
      %v313 = vpop.permute.xlu0 %312
      %v324 = vunpack.c.l.b16 %v300
      %v325 = vunpack.c.l.b16 %v301
      %v326 = vunpack.c.l.b16 %v302
      %v327 = vunpack.c.l.b16 %v303
      %v328 = vunpack.c.l.b16 %v304
      %v329 = vunpack.c.l.b16 %v305
      %v330 = vunpack.c.l.b16 %v306
      %v331 = vunpack.c.l.b16 %v307
      %v332 = vunpack.c.l.b16 %v308
      %v333 = vpack.c.b16 %v325, %v324
      %v334 = vpack.c.b16 %v327, %v326
      %v335 = vpack.c.b16 %v329, %v328
      %v336 = vpack.c.b16 %v331, %v330
      %v337 = vpack.c.b16 %v332, %v332
      %vm342 = vcmask 588800
      %v344 = vsel %vm342, %v299, 0
      %vm346 = vcmask 1043456
      %v348 = vsel %vm346, %v337, 0
      %350 = vmatpush.bf16.msra.mxu0 0
      %351 = vmatpush.bf16.msra.mxu0 0
      %352 = vmatpush.bf16.msra.mxu0 0
      %353 = vmatpush.bf16.msra.mxu0 %v348
      %354 = vmatpush.bf16.msra.mxu0 %v336
      %355 = vmatpush.bf16.msra.mxu0 %v335
      %356 = vmatpush.bf16.msra.mxu0 %v334
      %357 = vmatpush.bf16.msra.mxu0 %v333
      %358 = vmatmul.bf16.gmra.mxu0 %v344
      %v359 = vpop.f32.mrf.mxu0
      %v360 = vadd.f32 %v313, %v359
      %v361 = vpop.f32.mrf.mxu0
      %362 = vdwg.mxu0
      %v363 = vmax.f32 %v360, 0.0
      %v364 = vld [vmem:[%s223] sm:$0x1]
      %v366 = vperm.slane %v364, 0
      %v368 = vmul.f32 %v363, %v366
      %369 = vst [vmem:[%s231] sm:$0xff] %v368
      %p370 = scmp.lt.s32.totalorder %s19, 1
      %s371 = scalar_select %p370, %s19, 1
      %p372 = scmp.lt.s32.totalorder %s20, 1
      %s373 = scalar_select %p372, %s20, 1
      %s374 = smul.addr %s371, 2
      %s375 = sadd.s32 %s373, %s374
      %s376 = smul.addr %s375, 8
      %s377 = scalar_lea.vmem %s4, %s376
      // Predicated region
      $region37: #{detail_branch_forward.11} parent=35 // pred_check
        %p378 = pneg %p141
      $region38: #{detail_branch_forward.11} parent=35 // pred_check_branch
        %380 = sbr.rel (%p378) target = $region40
      $region39: #{detail_branch_forward.11} parent=35 // pred_region
        _
      $region40: #{detail_branch_forward.11} parent=35 // pred_fallthru
        _
    $region36: #{detail_branch_forward.11} parent=5 // pred_fallthru
      _
    %p381 = scmp.le.s32.totalorder 2, %s10
    // Predicated region
    $region41: #{detail_branch_forward.11} parent=5 // pred_check
      %p382 = pneg %p381
    $region42: #{detail_branch_forward.11} parent=5 // pred_check_branch
      %384 = sbr.rel (%p382) target = $region44
    $region43: #{detail_branch_forward.11} parent=5 // pred_region
      %s385 = ssub.s32 %s10, 2
      // Predicated region
      $region45: #{detail_branch_forward.11} parent=43 // pred_check
        %p386 = pneg %p147
      $region46: #{detail_branch_forward.11} parent=43 // pred_check_branch
        %388 = sbr.rel (%p386) target = $region48
      $region47: #{detail_branch_forward.11} parent=43 // pred_region
        %p389 = scmp.lt.s32.totalorder %s21, 1
        %s390 = scalar_select %p389, %s21, 1
        %p391 = scmp.lt.s32.totalorder %s22, 1
        %s392 = scalar_select %p391, %s22, 1
        %s393 = smul.addr %s390, 2
        %s394 = sadd.s32 %s392, %s393
        %s395 = smul.addr %s394, 8
        %s396 = scalar_lea.vmem %s4, %s395
      $region48: #{detail_branch_forward.11} parent=43 // pred_fallthru
        _
    $region44: #{detail_branch_forward.11} parent=5 // pred_fallthru
      _
  $region6: #{detail_branch_forward.11} parent=0 // loop_footer
    %s14 = sadd.s32 1, %s10
  $region7: #{detail_branch_forward.11} parent=0 // loop_footer_branch
    %9 = sbr.rel target = $region3
  $region8: #{detail_branch_forward.11} parent=0 // loop_exit
    _

// kernel: detail_branch_forward.10
$region0: #{detail_branch_forward.10}
  #allocation0 [shape = 'u32[]', space=smem, size = 0x4, offset = 0x4, fixed_abs, tag = 'smem constant byte address 0x4 - core index']
  #allocation1 [shape = 'u32[72,128]{1,0:T(1,128)}', space=vmem, size = 0x9000, scoped, tag = 'internal scratch']
  #allocation2 [shape = 'bf16[72,128]{1,0:T(8,128)(2,1)}', space=vmem, size = 0x4800, scoped, tag = 'scratch operand']
  %s0 = inlined_call_operand.vmem [shape: bf16[2,8,390], index: 0, kind: input, shape index: {}]
  %s1 = inlined_call_operand.vmem [shape: bf16[2,8,390], index: 1, kind: input, shape index: {}]
  %s2 = inlined_call_operand.vmem [shape: bf16[2,8,390], index: 2, kind: input, shape index: {}]
  %s3 = inlined_call_operand.vmem [shape: bf16[2,8,390], index: 3, kind: input, shape index: {}]
  %s4 = inlined_call_operand.vmem [shape: bf16[8,72], index: 4, kind: input, shape index: {}]
  %s5 = inlined_call_operand.vmem [shape: f32[8,1], index: 5, kind: input, shape index: {}]
  %s6 = inlined_call_operand.vmem [shape: f32[1,384], index: 6, kind: input, shape index: {}]
  %s7 = inlined_call_operand.vmem [shape: f32[2,8,384], index: 7, kind: output, shape index: {}]
  %s8 = sld [smem:[#allocation0]]
  $region61: #{detail_branch_forward.10} parent=0
    _
  %s10 = ssub.s32 1, %s8
  %s11 = scalar_select 0, %s10, %s8
  loop: start=0, step=1, limit=8
  $region2: #{detail_branch_forward.10} parent=0 // loop_pre_header
    _
  $region3: #{detail_branch_forward.10} parent=0 // loop_header
    %s13 = sphi 0, %s17
    %p14 = scmp.ge.s32.totalorder %s13, 8
    %s20 = sphi 0, %s32
    %s21 = sphi 0, %s28
    %s22 = sphi 0, %s20
    %s23 = sphi 0, %s21
    %s24 = sphi 0, %s22
    %s25 = sphi 0, %s23
    %s35 = sphi 0, %s37
    %s38 = sphi 0, %s35
    %s39 = sphi 0, %s38
    %s55 = sphi 0, %s39
    %s61 = sphi 0, %s63
    %s64 = sphi 0, %s61
    %s65 = sphi 0, %s64
    %s81 = sphi 0, %s65
    %s87 = sphi 0, %s89
    %s90 = sphi 0, %s87
    %s91 = sphi 0, %s90
    %s107 = sphi 0, %s91
    %s113 = sphi 0, %s115
    %s116 = sphi 0, %s113
    %s117 = sphi 0, %s116
    %s133 = sphi 0, %s117
    %s137 = sphi 0, %s137
    %s139 = sphi 0, %s137
    %s140 = sphi 0, %s139
    %s154 = sphi 0, %s140
    %s158 = sphi 0, %s158
    %s160 = sphi 0, %s158
    %s161 = sphi 0, %s160
    %s175 = sphi 0, %s161
    %s181 = sphi 0, %s183
    %s184 = sphi 0, %s181
    %s185 = sphi 0, %s184
    %s201 = sphi 0, %s185
    %s209 = sphi 0, %s211
    %s212 = sphi 0, %s209
    %s213 = sphi 0, %s212
    %s229 = sphi 0, %s213
  $region4: #{detail_branch_forward.10} parent=0 // loop_header_branch
    %16 = sbr.rel (%p14) target = $region8
  $region5: #{detail_branch_forward.10} parent=0 // loop_body
    %s18 = ssub.s32 %s13, 1
    %s19 = ssub.s32 %s13, 2
    %s26 = sadd.s32 1, %s21
    %p27 = scmp.ge.s32.totalorder %s26, 3
    %s28 = scalar_select %p27, 0, %s26
    %s29 = sadd.s32 1, %s20
    %s30 = scalar_select %p27, %s29, %s20
    %p31 = scmp.ge.s32.totalorder %s30, 2
    %s32 = scalar_select %p31, 0, %s30
    %s33 = ssub.s32 %s20, %s32
    %p34 = scmp.eq.s32.totalorder %s33, 0
    %s36 = sadd.s32 %s35, 1
    %s37 = scalar_select %p34, %s35, %s36
    %p40 = pneg %p34
    %p41 = scmp.eq.s32.totalorder %s13, 5
    %p42 = por %p40, %p41
    %p43 = scmp.ne.s32.totalorder %s35, %s38
    %p44 = scmp.eq.s32.totalorder %s13, 0
    %p45 = por %p43, %p44
    %p46 = scmp.ne.s32.totalorder %s35, %s38
    %p47 = scmp.eq.s32.totalorder %s18, 5
    %p48 = por %p46, %p47
    %p49 = scmp.ne.s32.totalorder %s38, %s39
    %p50 = scmp.eq.s32.totalorder %s18, 0
    %p51 = por %p49, %p50
    %p52 = scmp.ne.s32.totalorder %s38, %s39
    %p53 = scmp.eq.s32.totalorder %s19, 5
    %p54 = por %p52, %p53
    %p56 = scmp.ne.s32.totalorder %s39, %s55
    %p57 = scmp.eq.s32.totalorder %s19, 0
    %p58 = por %p56, %p57
    %s59 = ssub.s32 %s20, %s32
    %p60 = scmp.eq.s32.totalorder %s59, 0
    %s62 = sadd.s32 %s61, 1
    %s63 = scalar_select %p60, %s61, %s62
    %p66 = pneg %p60
    %p67 = scmp.eq.s32.totalorder %s13, 5
    %p68 = por %p66, %p67
    %p69 = scmp.ne.s32.totalorder %s61, %s64
    %p70 = scmp.eq.s32.totalorder %s13, 0
    %p71 = por %p69, %p70
    %p72 = scmp.ne.s32.totalorder %s61, %s64
    %p73 = scmp.eq.s32.totalorder %s18, 5
    %p74 = por %p72, %p73
    %p75 = scmp.ne.s32.totalorder %s64, %s65
    %p76 = scmp.eq.s32.totalorder %s18, 0
    %p77 = por %p75, %p76
    %p78 = scmp.ne.s32.totalorder %s64, %s65
    %p79 = scmp.eq.s32.totalorder %s19, 5
    %p80 = por %p78, %p79
    %p82 = scmp.ne.s32.totalorder %s65, %s81
    %p83 = scmp.eq.s32.totalorder %s19, 0
    %p84 = por %p82, %p83
    %s85 = ssub.s32 %s20, %s32
    %p86 = scmp.eq.s32.totalorder %s85, 0
    %s88 = sadd.s32 %s87, 1
    %s89 = scalar_select %p86, %s87, %s88
    %p92 = pneg %p86
    %p93 = scmp.eq.s32.totalorder %s13, 5
    %p94 = por %p92, %p93
    %p95 = scmp.ne.s32.totalorder %s87, %s90
    %p96 = scmp.eq.s32.totalorder %s13, 0
    %p97 = por %p95, %p96
    %p98 = scmp.ne.s32.totalorder %s87, %s90
    %p99 = scmp.eq.s32.totalorder %s18, 5
    %p100 = por %p98, %p99
    %p101 = scmp.ne.s32.totalorder %s90, %s91
    %p102 = scmp.eq.s32.totalorder %s18, 0
    %p103 = por %p101, %p102
    %p104 = scmp.ne.s32.totalorder %s90, %s91
    %p105 = scmp.eq.s32.totalorder %s19, 5
    %p106 = por %p104, %p105
    %p108 = scmp.ne.s32.totalorder %s91, %s107
    %p109 = scmp.eq.s32.totalorder %s19, 0
    %p110 = por %p108, %p109
    %s111 = ssub.s32 %s20, %s32
    %p112 = scmp.eq.s32.totalorder %s111, 0
    %s114 = sadd.s32 %s113, 1
    %s115 = scalar_select %p112, %s113, %s114
    %p118 = pneg %p112
    %p119 = scmp.eq.s32.totalorder %s13, 5
    %p120 = por %p118, %p119
    %p121 = scmp.ne.s32.totalorder %s113, %s116
    %p122 = scmp.eq.s32.totalorder %s13, 0
    %p123 = por %p121, %p122
    %p124 = scmp.ne.s32.totalorder %s113, %s116
    %p125 = scmp.eq.s32.totalorder %s18, 5
    %p126 = por %p124, %p125
    %p127 = scmp.ne.s32.totalorder %s116, %s117
    %p128 = scmp.eq.s32.totalorder %s18, 0
    %p129 = por %p127, %p128
    %p130 = scmp.ne.s32.totalorder %s116, %s117
    %p131 = scmp.eq.s32.totalorder %s19, 5
    %p132 = por %p130, %p131
    %p134 = scmp.ne.s32.totalorder %s117, %s133
    %p135 = scmp.eq.s32.totalorder %s19, 0
    %p136 = por %p134, %p135
    %s138 = sadd.s32 %s137, 1
    %p141 = scmp.eq.s32.totalorder %s13, 5
    %p142 = scmp.ne.s32.totalorder %s137, %s139
    %p143 = scmp.eq.s32.totalorder %s13, 0
    %p144 = por %p142, %p143
    %p145 = scmp.ne.s32.totalorder %s137, %s139
    %p146 = scmp.eq.s32.totalorder %s18, 5
    %p147 = por %p145, %p146
    %p148 = scmp.ne.s32.totalorder %s139, %s140
    %p149 = scmp.eq.s32.totalorder %s18, 0
    %p150 = por %p148, %p149
    %p151 = scmp.ne.s32.totalorder %s139, %s140
    %p152 = scmp.eq.s32.totalorder %s19, 5
    %p153 = por %p151, %p152
    %p155 = scmp.ne.s32.totalorder %s140, %s154
    %p156 = scmp.eq.s32.totalorder %s19, 0
    %p157 = por %p155, %p156
    %s159 = sadd.s32 %s158, 1
    %p162 = scmp.eq.s32.totalorder %s13, 5
    %p163 = scmp.ne.s32.totalorder %s158, %s160
    %p164 = scmp.eq.s32.totalorder %s13, 0
    %p165 = por %p163, %p164
    %p166 = scmp.ne.s32.totalorder %s158, %s160
    %p167 = scmp.eq.s32.totalorder %s18, 5
    %p168 = por %p166, %p167
    %p169 = scmp.ne.s32.totalorder %s160, %s161
    %p170 = scmp.eq.s32.totalorder %s18, 0
    %p171 = por %p169, %p170
    %p172 = scmp.ne.s32.totalorder %s160, %s161
    %p173 = scmp.eq.s32.totalorder %s19, 5
    %p174 = por %p172, %p173
    %p176 = scmp.ne.s32.totalorder %s161, %s175
    %p177 = scmp.eq.s32.totalorder %s19, 0
    %p178 = por %p176, %p177
    %s179 = ssub.s32 %s21, %s28
    %p180 = scmp.eq.s32.totalorder %s179, 0
    %s182 = sadd.s32 %s181, 1
    %s183 = scalar_select %p180, %s181, %s182
    %p186 = pneg %p180
    %p187 = scmp.eq.s32.totalorder %s13, 5
    %p188 = por %p186, %p187
    %p189 = scmp.ne.s32.totalorder %s181, %s184
    %p190 = scmp.eq.s32.totalorder %s13, 0
    %p191 = por %p189, %p190
    %p192 = scmp.ne.s32.totalorder %s181, %s184
    %p193 = scmp.eq.s32.totalorder %s18, 5
    %p194 = por %p192, %p193
    %p195 = scmp.ne.s32.totalorder %s184, %s185
    %p196 = scmp.eq.s32.totalorder %s18, 0
    %p197 = por %p195, %p196
    %p198 = scmp.ne.s32.totalorder %s184, %s185
    %p199 = scmp.eq.s32.totalorder %s19, 5
    %p200 = por %p198, %p199
    %p202 = scmp.ne.s32.totalorder %s185, %s201
    %p203 = scmp.eq.s32.totalorder %s19, 0
    %p204 = por %p202, %p203
    %s205 = ssub.s32 %s20, %s32
    %s206 = ssub.s32 %s21, %s28
    %s207 = sor.u32 %s205, %s206
    %p208 = scmp.eq.s32.totalorder %s207, 0
    %s210 = sadd.s32 %s209, 1
    %s211 = scalar_select %p208, %s209, %s210
    %p214 = pneg %p208
    %p215 = scmp.eq.s32.totalorder %s13, 5
    %p216 = por %p214, %p215
    %p217 = scmp.ne.s32.totalorder %s209, %s212
    %p218 = scmp.eq.s32.totalorder %s13, 0
    %p219 = por %p217, %p218
    %p220 = scmp.ne.s32.totalorder %s209, %s212
    %p221 = scmp.eq.s32.totalorder %s18, 5
    %p222 = por %p220, %p221
    %p223 = scmp.ne.s32.totalorder %s212, %s213
    %p224 = scmp.eq.s32.totalorder %s18, 0
    %p225 = por %p223, %p224
    %p226 = scmp.ne.s32.totalorder %s212, %s213
    %p227 = scmp.eq.s32.totalorder %s19, 5
    %p228 = por %p226, %p227
    %p230 = scmp.ne.s32.totalorder %s213, %s229
    %p231 = scmp.eq.s32.totalorder %s19, 0
    %p232 = por %p230, %p231
    %p233 = scmp.le.s32.totalorder 1, %s13
    %p234 = scmp.lt.s32.totalorder %s13, 7
    %p235 = pnand %p233, %p234
    %p236 = pneg %p235
    // Predicated region
    $region9: #{detail_branch_forward.10} parent=5 // pred_check
      _
    $region10: #{detail_branch_forward.10} parent=5 // pred_check_branch
      %238 = sbr.rel (%p235) target = $region12
    $region11: #{detail_branch_forward.10} parent=5 // pred_region
      %s239 = ssub.s32 %s13, 1
      // Predicated region
      $region13: #{detail_branch_forward.10} parent=11 // pred_check
        %p240 = pneg %p150
      $region14: #{detail_branch_forward.10} parent=11 // pred_check_branch
        %242 = sbr.rel (%p240) target = $region16
      $region15: #{detail_branch_forward.10} parent=11 // pred_region
        _
      $region16: #{detail_branch_forward.10} parent=11 // pred_fallthru
        _
      // Predicated region
      $region17: #{detail_branch_forward.10} parent=11 // pred_check
        %p243 = pneg %p171
      $region18: #{detail_branch_forward.10} parent=11 // pred_check_branch
        %245 = sbr.rel (%p243) target = $region20
      $region19: #{detail_branch_forward.10} parent=11 // pred_region
        _
      $region20: #{detail_branch_forward.10} parent=11 // pred_fallthru
        _
    $region12: #{detail_branch_forward.10} parent=5 // pred_fallthru
      _
    %p246 = scmp.lt.s32.totalorder %s13, 6
    // Predicated region
    $region21: #{detail_branch_forward.10} parent=5 // pred_check
      %p247 = pneg %p246
    $region22: #{detail_branch_forward.10} parent=5 // pred_check_branch
      %249 = sbr.rel (%p247) target = $region24
    $region23: #{detail_branch_forward.10} parent=5 // pred_region
      // Predicated region
      $region25: #{detail_branch_forward.10} parent=23 // pred_check
        %p250 = pneg %p45
      $region26: #{detail_branch_forward.10} parent=23 // pred_check_branch
        %252 = sbr.rel (%p250) target = $region28
      $region27: #{detail_branch_forward.10} parent=23 // pred_region
        %p253 = scmp.lt.s32.totalorder %s20, 1
        %s254 = scalar_select %p253, %s20, 1
        %s255 = smul.addr %s254, 4
        %s256 = smul.addr %s255, 4
        %s257 = scalar_lea.vmem %s0, %s256
      $region28: #{detail_branch_forward.10} parent=23 // pred_fallthru
        _
      // Predicated region
      $region29: #{detail_branch_forward.10} parent=23 // pred_check
        %p258 = pneg %p71
      $region30: #{detail_branch_forward.10} parent=23 // pred_check_branch
        %260 = sbr.rel (%p258) target = $region32
      $region31: #{detail_branch_forward.10} parent=23 // pred_region
        %p261 = scmp.lt.s32.totalorder %s20, 1
        %s262 = scalar_select %p261, %s20, 1
        %s263 = smul.addr %s262, 4
        %s264 = smul.addr %s263, 4
        %s265 = scalar_lea.vmem %s1, %s264
      $region32: #{detail_branch_forward.10} parent=23 // pred_fallthru
        _
      // Predicated region
      $region33: #{detail_branch_forward.10} parent=23 // pred_check
        %p266 = pneg %p97
      $region34: #{detail_branch_forward.10} parent=23 // pred_check_branch
        %268 = sbr.rel (%p266) target = $region36
      $region35: #{detail_branch_forward.10} parent=23 // pred_region
        %p269 = scmp.lt.s32.totalorder %s20, 1
        %s270 = scalar_select %p269, %s20, 1
        %s271 = smul.addr %s270, 4
        %s272 = smul.addr %s271, 4
        %s273 = scalar_lea.vmem %s2, %s272
      $region36: #{detail_branch_forward.10} parent=23 // pred_fallthru
        _
      // Predicated region
      $region37: #{detail_branch_forward.10} parent=23 // pred_check
        %p274 = pneg %p123
      $region38: #{detail_branch_forward.10} parent=23 // pred_check_branch
        %276 = sbr.rel (%p274) target = $region40
      $region39: #{detail_branch_forward.10} parent=23 // pred_region
        %p277 = scmp.lt.s32.totalorder %s20, 1
        %s278 = scalar_select %p277, %s20, 1
        %s279 = smul.addr %s278, 4
        %s280 = smul.addr %s279, 4
        %s281 = scalar_lea.vmem %s3, %s280
      $region40: #{detail_branch_forward.10} parent=23 // pred_fallthru
        _
      // Predicated region
      $region41: #{detail_branch_forward.10} parent=23 // pred_check
        %p282 = pneg %p191
      $region42: #{detail_branch_forward.10} parent=23 // pred_check_branch
        %284 = sbr.rel (%p282) target = $region44
      $region43: #{detail_branch_forward.10} parent=23 // pred_region
        %p285 = scmp.lt.s32.totalorder %s21, 2
        %s286 = scalar_select %p285, %s21, 2
        %s287 = scalar_lea.vmem %s6, %s286
      $region44: #{detail_branch_forward.10} parent=23 // pred_fallthru
        _
    $region24: #{detail_branch_forward.10} parent=5 // pred_fallthru
      _
    %p288 = scmp.le.s32.totalorder 1, %s13
    %p289 = scmp.lt.s32.totalorder %s13, 7
    %p290 = pnand %p288, %p289
    %p291 = pneg %p290
    // Predicated region
    $region45: #{detail_branch_forward.10} parent=5 // pred_check
      _
    $region46: #{detail_branch_forward.10} parent=5 // pred_check_branch
      %293 = sbr.rel (%p290) target = $region48
    $region47: #{detail_branch_forward.10} parent=5 // pred_region
      %s294 = ssub.s32 %s13, 1
      %p295 = scmp.lt.s32.totalorder %s22, 1
      %s296 = scalar_select %p295, %s22, 1
      %s297 = smul.addr %s296, 4
      %s298 = smul.addr %s297, 4
      %s299 = scalar_lea.vmem %s0, %s298
      %p300 = pneg %p51
      %p301 = pneg %p48
      %p302 = scmp.lt.s32.totalorder %s22, 1
      %s303 = scalar_select %p302, %s22, 1
      %s304 = smul.addr %s303, 4
      %s305 = smul.addr %s304, 4
      %s306 = scalar_lea.vmem %s1, %s305
      %p307 = pneg %p77
      %p308 = pneg %p74
      %p309 = scmp.lt.s32.totalorder %s22, 1
      %s310 = scalar_select %p309, %s22, 1
      %s311 = smul.addr %s310, 4
      %s312 = smul.addr %s311, 4
      %s313 = scalar_lea.vmem %s2, %s312
      %p314 = pneg %p103
      %p315 = pneg %p100
      %p316 = scmp.lt.s32.totalorder %s22, 1
      %s317 = scalar_select %p316, %s22, 1
      %s318 = smul.addr %s317, 4
      %s319 = smul.addr %s318, 4
      %s320 = scalar_lea.vmem %s3, %s319
      %p321 = pneg %p129
      %p322 = pneg %p126
      %p323 = pneg %p150
      %p324 = pneg %p147
      %p325 = pneg %p171
      %p326 = pneg %p168
      %p327 = scmp.lt.s32.totalorder %s23, 2
      %s328 = scalar_select %p327, %s23, 2
      %s329 = scalar_lea.vmem %s6, %s328
      %p330 = pneg %p197
      %p331 = pneg %p194
      %p332 = pneg %p225
      %p333 = pneg %p222
      %p334 = scmp.lt.s32.totalorder %s22, 1
      %s335 = scalar_select %p334, %s22, 1
      %p336 = scmp.lt.s32.totalorder %s23, 2
      %s337 = scalar_select %p336, %s23, 2
      %s338 = smul.addr %s335, 3
      %s339 = sadd.s32 %s337, %s338
      %s340 = smul.addr %s339, 8
      %s341 = scalar_lea.vmem %s7, %s340
      %p342 = scmp.lt.s32.totalorder %s22, 1
      %s343 = scalar_select %p342, %s22, 1
      %s344 = smul.addr %s343, 4
      %s345 = smul.addr %s344, 4
      %s346 = scalar_lea.vmem %s0, %s345
      %p347 = scmp.lt.s32.totalorder %s22, 1
      %s348 = scalar_select %p347, %s22, 1
      %s349 = smul.addr %s348, 4
      %s350 = smul.addr %s349, 4
      %s351 = scalar_lea.vmem %s1, %s350
      %p352 = scmp.lt.s32.totalorder %s22, 1
      %s353 = scalar_select %p352, %s22, 1
      %s354 = smul.addr %s353, 4
      %s355 = smul.addr %s354, 4
      %s356 = scalar_lea.vmem %s2, %s355
      %p357 = scmp.lt.s32.totalorder %s22, 1
      %s358 = scalar_select %p357, %s22, 1
      %s359 = smul.addr %s358, 4
      %s360 = smul.addr %s359, 4
      %s361 = scalar_lea.vmem %s3, %s360
      %p362 = scmp.lt.s32.totalorder %s23, 2
      %s363 = scalar_select %p362, %s23, 2
      %s364 = scalar_lea.vmem %s6, %s363
      %p365 = scmp.lt.s32.totalorder %s22, 1
      %s366 = scalar_select %p365, %s22, 1
      %p367 = scmp.lt.s32.totalorder %s23, 2
      %s368 = scalar_select %p367, %s23, 2
      %s369 = smul.addr %s366, 3
      %s370 = sadd.s32 %s368, %s369
      %s371 = smul.addr %s370, 8
      %s372 = scalar_lea.vmem %s7, %s371
      %s374 = smul.u32 %s23, 128
      %s375 = sshra.s32 %s374, 7
      %s376 = sand.u32 %s374, 127
      %s377 = smul.addr %s375, 4
      %s378 = scalar_lea.vmem %s346, %s377
      %v379 = vld [vmem:[%s378] sm:$0xff]
      %s380 = smul.addr %s375, 4
      %s381 = scalar_lea.vmem %s351, %s380
      %v382 = vld [vmem:[%s381] sm:$0xff]
      %s383 = smul.addr %s375, 4
      %s384 = scalar_lea.vmem %s356, %s383
      %v385 = vld [vmem:[%s384] sm:$0xff]
      %s386 = smul.addr %s375, 4
      %s387 = scalar_lea.vmem %s361, %s386
      %v388 = vld [vmem:[%s387] sm:$0xff]
      %389 = vst [vmem:[#allocation2] sm:$0xf] %v388
      %391 = vrot.lane.b32.xlu0 %v385, 127
      %v392 = vpop.permute.xlu0 %391
      %v393 = vrot.slane %v392, 4
      %vm394 = vcmask 1039360
      %v395 = vsel %vm394, %v392, %v393
      %397 = vst [vmem:[#allocation2 + $0x4] sm:$0xf] %v395
      %399 = vrot.lane.b32.xlu0 %v388, 127
      %v400 = vpop.permute.xlu0 %399
      %v401 = vrot.slane %v400, 4
      %v402 = vsel %vm394, %v400, %v401
      %404 = vst [vmem:[#allocation2 + $0x8] sm:$0xf] %v402
      %406 = vrot.lane.b32.xlu0 %v382, 123
      %v407 = vpop.permute.xlu0 %406
      %v408 = vrot.slane %v407, 4
      %vm409 = vcmask 1006592
      %v410 = vsel %vm409, %v407, %v408
      %412 = vst [vmem:[#allocation2 + $0xc] sm:$0xf] %v410
      %414 = vrot.lane.b32.xlu0 %v379, 122
      %v415 = vpop.permute.xlu0 %414
      %v416 = vrot.slane %v415, 4
      %vm417 = vcmask 998400
      %v418 = vsel %vm417, %v415, %v416
      %420 = vst [vmem:[#allocation2 + $0x10] sm:$0xf] %v418
      %421 = vrot.lane.b32.xlu0 %v382, 122
      %v422 = vpop.permute.xlu0 %421
      %v423 = vrot.slane %v422, 4
      %v424 = vsel %vm417, %v422, %v423
      %426 = vst [vmem:[#allocation2 + $0x14] sm:$0xf] %v424
      %427 = vrot.lane.b32.xlu0 %v388, 123
      %v428 = vpop.permute.xlu0 %427
      %v429 = vrot.slane %v428, 4
      %v430 = vsel %vm409, %v428, %v429
      %432 = vst [vmem:[#allocation2 + $0x18] sm:$0xf] %v430
      %433 = vrot.lane.b32.xlu0 %v385, 122
      %v434 = vpop.permute.xlu0 %433
      %v435 = vrot.slane %v434, 4
      %v436 = vsel %vm417, %v434, %v435
      %438 = vst [vmem:[#allocation2 + $0x1c] sm:$0xf] %v436
      %439 = vrot.lane.b32.xlu0 %v388, 122
      %v440 = vpop.permute.xlu0 %439
      %v441 = vrot.slane %v440, 4
      %v442 = vsel %vm417, %v440, %v441
      %444 = vst [vmem:[#allocation2 + $0x20] sm:$0xf] %v442
      %v445 = vld [vmem:[%s4] sm:$0xf]
      %v446 = vld [vmem:[#allocation2] sm:$0xf]
      %v447 = vld [vmem:[#allocation2 + $0x4] sm:$0xf]
      %v448 = vld [vmem:[#allocation2 + $0x8] sm:$0xf]
      %v449 = vld [vmem:[#allocation2 + $0xc] sm:$0xf]
      %v450 = vld [vmem:[#allocation2 + $0x10] sm:$0xf]
      %v451 = vld [vmem:[#allocation2 + $0x14] sm:$0xf]
      %v452 = vld [vmem:[#allocation2 + $0x18] sm:$0xf]
      %v453 = vld [vmem:[#allocation2 + $0x1c] sm:$0xf]
      %v454 = vld [vmem:[#allocation2 + $0x20] sm:$0xf]
      %v455 = vld [vmem:[%s5] sm:$0xff]
      %457 = vset.pattern.permute.xlu0 0
      %458 = vperm.xlu0 %457, %v455
      %v459 = vpop.permute.xlu0 %458
      %v470 = vunpack.c.l.b16 %v446
      %v471 = vunpack.c.l.b16 %v447
      %v472 = vunpack.c.l.b16 %v448
      %v473 = vunpack.c.l.b16 %v449
      %v474 = vunpack.c.l.b16 %v450
      %v475 = vunpack.c.l.b16 %v451
      %v476 = vunpack.c.l.b16 %v452
      %v477 = vunpack.c.l.b16 %v453
      %v478 = vunpack.c.l.b16 %v454
      %v479 = vpack.c.b16 %v471, %v470
      %v480 = vpack.c.b16 %v473, %v472
      %v481 = vpack.c.b16 %v475, %v474
      %v482 = vpack.c.b16 %v477, %v476
      %v483 = vpack.c.b16 %v478, %v478
      %vm488 = vcmask 588800
      %v490 = vsel %vm488, %v445, 0
      %vm492 = vcmask 1043456
      %v494 = vsel %vm492, %v483, 0
      %496 = vmatpush.bf16.msra.mxu0 0
      %497 = vmatpush.bf16.msra.mxu0 0
      %498 = vmatpush.bf16.msra.mxu0 0
      %499 = vmatpush.bf16.msra.mxu0 %v494
      %500 = vmatpush.bf16.msra.mxu0 %v482
      %501 = vmatpush.bf16.msra.mxu0 %v481
      %502 = vmatpush.bf16.msra.mxu0 %v480
      %503 = vmatpush.bf16.msra.mxu0 %v479
      %504 = vmatmul.bf16.gmra.mxu0 %v490
      %v505 = vpop.f32.mrf.mxu0
      %v506 = vadd.f32 %v459, %v505
      %v507 = vpop.f32.mrf.mxu0
      %508 = vdwg.mxu0
      %v509 = vmax.f32 %v506, 0.0
      %v510 = vld [vmem:[%s364] sm:$0x1]
      %v512 = vperm.slane %v510, 0
      %v514 = vmul.f32 %v509, %v512
      %515 = vst [vmem:[%s372] sm:$0xff] %v514
      %p516 = scmp.lt.s32.totalorder %s22, 1
      %s517 = scalar_select %p516, %s22, 1
      %p518 = scmp.lt.s32.totalorder %s23, 2
      %s519 = scalar_select %p518, %s23, 2
      %s520 = smul.addr %s517, 3
      %s521 = sadd.s32 %s519, %s520
      %s522 = smul.addr %s521, 8
      %s523 = scalar_lea.vmem %s7, %s522
      // Predicated region
      $region49: #{detail_branch_forward.10} parent=47 // pred_check
        %p524 = pneg %p222
      $region50: #{detail_branch_forward.10} parent=47 // pred_check_branch
        %526 = sbr.rel (%p524) target = $region52
      $region51: #{detail_branch_forward.10} parent=47 // pred_region
        _
      $region52: #{detail_branch_forward.10} parent=47 // pred_fallthru
        _
    $region48: #{detail_branch_forward.10} parent=5 // pred_fallthru
      _
    %p527 = scmp.le.s32.totalorder 2, %s13
    // Predicated region
    $region53: #{detail_branch_forward.10} parent=5 // pred_check
      %p528 = pneg %p527
    $region54: #{detail_branch_forward.10} parent=5 // pred_check_branch
      %530 = sbr.rel (%p528) target = $region56
    $region55: #{detail_branch_forward.10} parent=5 // pred_region
      %s531 = ssub.s32 %s13, 2
      // Predicated region
      $region57: #{detail_branch_forward.10} parent=55 // pred_check
        %p532 = pneg %p228
      $region58: #{detail_branch_forward.10} parent=55 // pred_check_branch
        %534 = sbr.rel (%p532) target = $region60
      $region59: #{detail_branch_forward.10} parent=55 // pred_region
        %p535 = scmp.lt.s32.totalorder %s24, 1
        %s536 = scalar_select %p535, %s24, 1
        %p537 = scmp.lt.s32.totalorder %s25, 2
        %s538 = scalar_select %p537, %s25, 2
        %s539 = smul.addr %s536, 3
        %s540 = sadd.s32 %s538, %s539
        %s541 = smul.addr %s540, 8
        %s542 = scalar_lea.vmem %s7, %s541
      $region60: #{detail_branch_forward.10} parent=55 // pred_fallthru
        _
    $region56: #{detail_branch_forward.10} parent=5 // pred_fallthru
      _
  $region6: #{detail_branch_forward.10} parent=0 // loop_footer
    %s17 = sadd.s32 1, %s13
  $region7: #{detail_branch_forward.10} parent=0 // loop_footer_branch
    %12 = sbr.rel target = $region3
  $region8: #{detail_branch_forward.10} parent=0 // loop_exit
    _

// kernel: detail_branch_forward.12
$region0: #{detail_branch_forward.12}
  #allocation0 [shape = 'u32[]', space=smem, size = 0x4, offset = 0x4, fixed_abs, tag = 'smem constant byte address 0x4 - core index']
  #allocation1 [shape = 'u32[72,128]{1,0:T(1,128)}', space=vmem, size = 0x9000, scoped, tag = 'internal scratch']
  #allocation2 [shape = 'bf16[72,128]{1,0:T(8,128)(2,1)}', space=vmem, size = 0x4800, scoped, tag = 'scratch operand']
  %s0 = inlined_call_operand.vmem [shape: f32[2,8,256], index: 0, kind: input, shape index: {}]
  %s1 = inlined_call_operand.vmem [shape: bf16[8,72], index: 1, kind: input, shape index: {}]
  %s2 = inlined_call_operand.vmem [shape: f32[8,1], index: 2, kind: input, shape index: {}]
  %s3 = inlined_call_operand.vmem [shape: f32[1,128], index: 3, kind: input, shape index: {}]
  %s4 = inlined_call_operand.vmem [shape: f32[2,8,128], index: 4, kind: output, shape index: {}]
  %s5 = sld [smem:[#allocation0]]
  $region49: #{detail_branch_forward.12} parent=0
    _
  %s7 = ssub.s32 1, %s5
  %s8 = scalar_select 0, %s7, %s5
  loop: start=0, step=1, limit=4
  $region2: #{detail_branch_forward.12} parent=0 // loop_pre_header
    _
  $region3: #{detail_branch_forward.12} parent=0 // loop_header
    %s10 = sphi 0, %s14
    %p11 = scmp.ge.s32.totalorder %s10, 4
    %s17 = sphi 0, %s29
    %s18 = sphi 0, %s25
    %s19 = sphi 0, %s17
    %s20 = sphi 0, %s18
    %s21 = sphi 0, %s19
    %s22 = sphi 0, %s20
    %s32 = sphi 0, %s34
    %s35 = sphi 0, %s32
    %s36 = sphi 0, %s35
    %s52 = sphi 0, %s36
    %s56 = sphi 0, %s56
    %s58 = sphi 0, %s56
    %s59 = sphi 0, %s58
    %s73 = sphi 0, %s59
    %s77 = sphi 0, %s77
    %s79 = sphi 0, %s77
    %s80 = sphi 0, %s79
    %s94 = sphi 0, %s80
    %s100 = sphi 0, %s102
    %s103 = sphi 0, %s100
    %s104 = sphi 0, %s103
    %s120 = sphi 0, %s104
    %s128 = sphi 0, %s130
    %s131 = sphi 0, %s128
    %s132 = sphi 0, %s131
    %s148 = sphi 0, %s132
  $region4: #{detail_branch_forward.12} parent=0 // loop_header_branch
    %13 = sbr.rel (%p11) target = $region8
  $region5: #{detail_branch_forward.12} parent=0 // loop_body
    %s15 = ssub.s32 %s10, 1
    %s16 = ssub.s32 %s10, 2
    %s23 = sadd.s32 1, %s18
    %p24 = scmp.ge.s32.totalorder %s23, 1
    %s25 = scalar_select %p24, 0, %s23
    %s26 = sadd.s32 1, %s17
    %s27 = scalar_select %p24, %s26, %s17
    %p28 = scmp.ge.s32.totalorder %s27, 2
    %s29 = scalar_select %p28, 0, %s27
    %s30 = ssub.s32 %s17, %s29
    %p31 = scmp.eq.s32.totalorder %s30, 0
    %s33 = sadd.s32 %s32, 1
    %s34 = scalar_select %p31, %s32, %s33
    %p37 = pneg %p31
    %p38 = scmp.eq.s32.totalorder %s10, 1
    %p39 = por %p37, %p38
    %p40 = scmp.ne.s32.totalorder %s32, %s35
    %p41 = scmp.eq.s32.totalorder %s10, 0
    %p42 = por %p40, %p41
    %p43 = scmp.ne.s32.totalorder %s32, %s35
    %p44 = scmp.eq.s32.totalorder %s15, 1
    %p45 = por %p43, %p44
    %p46 = scmp.ne.s32.totalorder %s35, %s36
    %p47 = scmp.eq.s32.totalorder %s15, 0
    %p48 = por %p46, %p47
    %p49 = scmp.ne.s32.totalorder %s35, %s36
    %p50 = scmp.eq.s32.totalorder %s16, 1
    %p51 = por %p49, %p50
    %p53 = scmp.ne.s32.totalorder %s36, %s52
    %p54 = scmp.eq.s32.totalorder %s16, 0
    %p55 = por %p53, %p54
    %s57 = sadd.s32 %s56, 1
    %p60 = scmp.eq.s32.totalorder %s10, 1
    %p61 = scmp.ne.s32.totalorder %s56, %s58
    %p62 = scmp.eq.s32.totalorder %s10, 0
    %p63 = por %p61, %p62
    %p64 = scmp.ne.s32.totalorder %s56, %s58
    %p65 = scmp.eq.s32.totalorder %s15, 1
    %p66 = por %p64, %p65
    %p67 = scmp.ne.s32.totalorder %s58, %s59
    %p68 = scmp.eq.s32.totalorder %s15, 0
    %p69 = por %p67, %p68
    %p70 = scmp.ne.s32.totalorder %s58, %s59
    %p71 = scmp.eq.s32.totalorder %s16, 1
    %p72 = por %p70, %p71
    %p74 = scmp.ne.s32.totalorder %s59, %s73
    %p75 = scmp.eq.s32.totalorder %s16, 0
    %p76 = por %p74, %p75
    %s78 = sadd.s32 %s77, 1
    %p81 = scmp.eq.s32.totalorder %s10, 1
    %p82 = scmp.ne.s32.totalorder %s77, %s79
    %p83 = scmp.eq.s32.totalorder %s10, 0
    %p84 = por %p82, %p83
    %p85 = scmp.ne.s32.totalorder %s77, %s79
    %p86 = scmp.eq.s32.totalorder %s15, 1
    %p87 = por %p85, %p86
    %p88 = scmp.ne.s32.totalorder %s79, %s80
    %p89 = scmp.eq.s32.totalorder %s15, 0
    %p90 = por %p88, %p89
    %p91 = scmp.ne.s32.totalorder %s79, %s80
    %p92 = scmp.eq.s32.totalorder %s16, 1
    %p93 = por %p91, %p92
    %p95 = scmp.ne.s32.totalorder %s80, %s94
    %p96 = scmp.eq.s32.totalorder %s16, 0
    %p97 = por %p95, %p96
    %s98 = ssub.s32 %s18, %s25
    %p99 = scmp.eq.s32.totalorder %s98, 0
    %s101 = sadd.s32 %s100, 1
    %s102 = scalar_select %p99, %s100, %s101
    %p105 = pneg %p99
    %p106 = scmp.eq.s32.totalorder %s10, 1
    %p107 = por %p105, %p106
    %p108 = scmp.ne.s32.totalorder %s100, %s103
    %p109 = scmp.eq.s32.totalorder %s10, 0
    %p110 = por %p108, %p109
    %p111 = scmp.ne.s32.totalorder %s100, %s103
    %p112 = scmp.eq.s32.totalorder %s15, 1
    %p113 = por %p111, %p112
    %p114 = scmp.ne.s32.totalorder %s103, %s104
    %p115 = scmp.eq.s32.totalorder %s15, 0
    %p116 = por %p114, %p115
    %p117 = scmp.ne.s32.totalorder %s103, %s104
    %p118 = scmp.eq.s32.totalorder %s16, 1
    %p119 = por %p117, %p118
    %p121 = scmp.ne.s32.totalorder %s104, %s120
    %p122 = scmp.eq.s32.totalorder %s16, 0
    %p123 = por %p121, %p122
    %s124 = ssub.s32 %s17, %s29
    %s125 = ssub.s32 %s18, %s25
    %s126 = sor.u32 %s124, %s125
    %p127 = scmp.eq.s32.totalorder %s126, 0
    %s129 = sadd.s32 %s128, 1
    %s130 = scalar_select %p127, %s128, %s129
    %p133 = pneg %p127
    %p134 = scmp.eq.s32.totalorder %s10, 1
    %p135 = por %p133, %p134
    %p136 = scmp.ne.s32.totalorder %s128, %s131
    %p137 = scmp.eq.s32.totalorder %s10, 0
    %p138 = por %p136, %p137
    %p139 = scmp.ne.s32.totalorder %s128, %s131
    %p140 = scmp.eq.s32.totalorder %s15, 1
    %p141 = por %p139, %p140
    %p142 = scmp.ne.s32.totalorder %s131, %s132
    %p143 = scmp.eq.s32.totalorder %s15, 0
    %p144 = por %p142, %p143
    %p145 = scmp.ne.s32.totalorder %s131, %s132
    %p146 = scmp.eq.s32.totalorder %s16, 1
    %p147 = por %p145, %p146
    %p149 = scmp.ne.s32.totalorder %s132, %s148
    %p150 = scmp.eq.s32.totalorder %s16, 0
    %p151 = por %p149, %p150
    %p152 = scmp.le.s32.totalorder 1, %s10
    %p153 = scmp.lt.s32.totalorder %s10, 3
    %p154 = pnand %p152, %p153
    %p155 = pneg %p154
    // Predicated region
    $region9: #{detail_branch_forward.12} parent=5 // pred_check
      _
    $region10: #{detail_branch_forward.12} parent=5 // pred_check_branch
      %157 = sbr.rel (%p154) target = $region12
    $region11: #{detail_branch_forward.12} parent=5 // pred_region
      %s158 = ssub.s32 %s10, 1
      // Predicated region
      $region13: #{detail_branch_forward.12} parent=11 // pred_check
        %p159 = pneg %p69
      $region14: #{detail_branch_forward.12} parent=11 // pred_check_branch
        %161 = sbr.rel (%p159) target = $region16
      $region15: #{detail_branch_forward.12} parent=11 // pred_region
        _
      $region16: #{detail_branch_forward.12} parent=11 // pred_fallthru
        _
      // Predicated region
      $region17: #{detail_branch_forward.12} parent=11 // pred_check
        %p162 = pneg %p90
      $region18: #{detail_branch_forward.12} parent=11 // pred_check_branch
        %164 = sbr.rel (%p162) target = $region20
      $region19: #{detail_branch_forward.12} parent=11 // pred_region
        _
      $region20: #{detail_branch_forward.12} parent=11 // pred_fallthru
        _
      // Predicated region
      $region21: #{detail_branch_forward.12} parent=11 // pred_check
        %p165 = pneg %p116
      $region22: #{detail_branch_forward.12} parent=11 // pred_check_branch
        %167 = sbr.rel (%p165) target = $region24
      $region23: #{detail_branch_forward.12} parent=11 // pred_region
        %p168 = scmp.lt.s32.totalorder %s20, 0
        %s169 = scalar_select %p168, %s20, 0
        %s170 = scalar_lea.vmem %s3, %s169
      $region24: #{detail_branch_forward.12} parent=11 // pred_fallthru
        _
    $region12: #{detail_branch_forward.12} parent=5 // pred_fallthru
      _
    %p171 = scmp.lt.s32.totalorder %s10, 2
    // Predicated region
    $region25: #{detail_branch_forward.12} parent=5 // pred_check
      %p172 = pneg %p171
    $region26: #{detail_branch_forward.12} parent=5 // pred_check_branch
      %174 = sbr.rel (%p172) target = $region28
    $region27: #{detail_branch_forward.12} parent=5 // pred_region
      // Predicated region
      $region29: #{detail_branch_forward.12} parent=27 // pred_check
        %p175 = pneg %p42
      $region30: #{detail_branch_forward.12} parent=27 // pred_check_branch
        %177 = sbr.rel (%p175) target = $region32
      $region31: #{detail_branch_forward.12} parent=27 // pred_region
        %p178 = scmp.lt.s32.totalorder %s17, 1
        %s179 = scalar_select %p178, %s17, 1
        %s180 = smul.addr %s179, 2
        %s181 = smul.addr %s180, 8
        %s182 = scalar_lea.vmem %s0, %s181
      $region32: #{detail_branch_forward.12} parent=27 // pred_fallthru
        _
    $region28: #{detail_branch_forward.12} parent=5 // pred_fallthru
      _
    %p183 = scmp.le.s32.totalorder 1, %s10
    %p184 = scmp.lt.s32.totalorder %s10, 3
    %p185 = pnand %p183, %p184
    %p186 = pneg %p185
    // Predicated region
    $region33: #{detail_branch_forward.12} parent=5 // pred_check
      _
    $region34: #{detail_branch_forward.12} parent=5 // pred_check_branch
      %188 = sbr.rel (%p185) target = $region36
    $region35: #{detail_branch_forward.12} parent=5 // pred_region
      %s189 = ssub.s32 %s10, 1
      %p190 = scmp.lt.s32.totalorder %s19, 1
      %s191 = scalar_select %p190, %s19, 1
      %s192 = smul.addr %s191, 2
      %s193 = smul.addr %s192, 8
      %s194 = scalar_lea.vmem %s0, %s193
      %p195 = pneg %p48
      %p196 = pneg %p45
      %p197 = pneg %p69
      %p198 = pneg %p66
      %p199 = pneg %p90
      %p200 = pneg %p87
      %p201 = scmp.lt.s32.totalorder %s20, 0
      %s202 = scalar_select %p201, %s20, 0
      %s203 = scalar_lea.vmem %s3, %s202
      %p204 = pneg %p116
      %p205 = pneg %p113
      %p206 = pneg %p144
      %p207 = pneg %p141
      %p208 = scmp.lt.s32.totalorder %s19, 1
      %s209 = scalar_select %p208, %s19, 1
      %p210 = scmp.lt.s32.totalorder %s20, 0
      %s211 = scalar_select %p210, %s20, 0
      %s212 = sadd.s32 %s211, %s209
      %s213 = smul.addr %s212, 8
      %s214 = scalar_lea.vmem %s4, %s213
      %p215 = scmp.lt.s32.totalorder %s19, 1
      %s216 = scalar_select %p215, %s19, 1
      %s217 = smul.addr %s216, 2
      %s218 = smul.addr %s217, 8
      %s219 = scalar_lea.vmem %s0, %s218
      %p220 = scmp.lt.s32.totalorder %s20, 0
      %s221 = scalar_select %p220, %s20, 0
      %s222 = scalar_lea.vmem %s3, %s221
      %p223 = scmp.lt.s32.totalorder %s19, 1
      %s224 = scalar_select %p223, %s19, 1
      %p225 = scmp.lt.s32.totalorder %s20, 0
      %s226 = scalar_select %p225, %s20, 0
      %s227 = sadd.s32 %s226, %s224
      %s228 = smul.addr %s227, 8
      %s229 = scalar_lea.vmem %s4, %s228
      %v231 = vld [vmem:[%s219] sm:$0xff]
      %v232 = vld [vmem:[%s219 + $0x8] sm:$0xff]
      %v233 = vpack.c.bf16 %v232, %v231
      %234 = vst [vmem:[#allocation2] sm:$0xf] %v233
      %236 = vrot.lane.b32.xlu0 %v233, 127
      %v237 = vpop.permute.xlu0 %236
      %v238 = vrot.slane %v237, 4
      %vm239 = vcmask 1039360
      %v240 = vsel %vm239, %v237, %v238
      %242 = vst [vmem:[#allocation2 + $0x4] sm:$0xf] %v240
      %243 = vrot.lane.b32.xlu0 %v233, 126
      %v244 = vpop.permute.xlu0 %243
      %v245 = vrot.slane %v244, 4
      %vm246 = vcmask 1031168
      %v247 = vsel %vm246, %v244, %v245
      %249 = vst [vmem:[#allocation2 + $0x8] sm:$0xf] %v247
      %250 = vrot.lane.b32.xlu0 %v233, 123
      %v251 = vpop.permute.xlu0 %250
      %v252 = vrot.slane %v251, 4
      %vm253 = vcmask 1006592
      %v254 = vsel %vm253, %v251, %v252
      %256 = vst [vmem:[#allocation2 + $0xc] sm:$0xf] %v254
      %257 = vrot.lane.b32.xlu0 %v233, 122
      %v258 = vpop.permute.xlu0 %257
      %v259 = vrot.slane %v258, 4
      %vm260 = vcmask 998400
      %v261 = vsel %vm260, %v258, %v259
      %263 = vst [vmem:[#allocation2 + $0x10] sm:$0xf] %v261
      %264 = vrot.lane.b32.xlu0 %v233, 121
      %v265 = vpop.permute.xlu0 %264
      %v266 = vrot.slane %v265, 4
      %vm267 = vcmask 990208
      %v268 = vsel %vm267, %v265, %v266
      %270 = vst [vmem:[#allocation2 + $0x14] sm:$0xf] %v268
      %271 = vrot.lane.b32.xlu0 %v233, 118
      %v272 = vpop.permute.xlu0 %271
      %v273 = vrot.slane %v272, 4
      %vm274 = vcmask 965632
      %v275 = vsel %vm274, %v272, %v273
      %277 = vst [vmem:[#allocation2 + $0x18] sm:$0xf] %v275
      %278 = vrot.lane.b32.xlu0 %v233, 117
      %v279 = vpop.permute.xlu0 %278
      %v280 = vrot.slane %v279, 4
      %vm281 = vcmask 957440
      %v282 = vsel %vm281, %v279, %v280
      %284 = vst [vmem:[#allocation2 + $0x1c] sm:$0xf] %v282
      %285 = vrot.lane.b32.xlu0 %v233, 116
      %v286 = vpop.permute.xlu0 %285
      %v287 = vrot.slane %v286, 4
      %vm288 = vcmask 949248
      %v289 = vsel %vm288, %v286, %v287
      %291 = vst [vmem:[#allocation2 + $0x20] sm:$0xf] %v289
      %v292 = vld [vmem:[%s1] sm:$0xf]
      %v293 = vld [vmem:[#allocation2] sm:$0xf]
      %v294 = vld [vmem:[#allocation2 + $0x4] sm:$0xf]
      %v295 = vld [vmem:[#allocation2 + $0x8] sm:$0xf]
      %v296 = vld [vmem:[#allocation2 + $0xc] sm:$0xf]
      %v297 = vld [vmem:[#allocation2 + $0x10] sm:$0xf]
      %v298 = vld [vmem:[#allocation2 + $0x14] sm:$0xf]
      %v299 = vld [vmem:[#allocation2 + $0x18] sm:$0xf]
      %v300 = vld [vmem:[#allocation2 + $0x1c] sm:$0xf]
      %v301 = vld [vmem:[#allocation2 + $0x20] sm:$0xf]
      %v302 = vld [vmem:[%s2] sm:$0xff]
      %304 = vset.pattern.permute.xlu0 0
      %305 = vperm.xlu0 %304, %v302
      %v306 = vpop.permute.xlu0 %305
      %v317 = vunpack.c.l.b16 %v293
      %v318 = vunpack.c.l.b16 %v294
      %v319 = vunpack.c.l.b16 %v295
      %v320 = vunpack.c.l.b16 %v296
      %v321 = vunpack.c.l.b16 %v297
      %v322 = vunpack.c.l.b16 %v298
      %v323 = vunpack.c.l.b16 %v299
      %v324 = vunpack.c.l.b16 %v300
      %v325 = vunpack.c.l.b16 %v301
      %v326 = vpack.c.b16 %v318, %v317
      %v327 = vpack.c.b16 %v320, %v319
      %v328 = vpack.c.b16 %v322, %v321
      %v329 = vpack.c.b16 %v324, %v323
      %v330 = vpack.c.b16 %v325, %v325
      %vm335 = vcmask 588800
      %v337 = vsel %vm335, %v292, 0
      %vm339 = vcmask 1043456
      %v341 = vsel %vm339, %v330, 0
      %343 = vmatpush.bf16.msra.mxu0 0
      %344 = vmatpush.bf16.msra.mxu0 0
      %345 = vmatpush.bf16.msra.mxu0 0
      %346 = vmatpush.bf16.msra.mxu0 %v341
      %347 = vmatpush.bf16.msra.mxu0 %v329
      %348 = vmatpush.bf16.msra.mxu0 %v328
      %349 = vmatpush.bf16.msra.mxu0 %v327
      %350 = vmatpush.bf16.msra.mxu0 %v326
      %351 = vmatmul.bf16.gmra.mxu0 %v337
      %v352 = vpop.f32.mrf.mxu0
      %v353 = vadd.f32 %v306, %v352
      %v354 = vpop.f32.mrf.mxu0
      %355 = vdwg.mxu0
      %v356 = vmax.f32 %v353, 0.0
      %v357 = vld [vmem:[%s222] sm:$0x1]
      %v359 = vperm.slane %v357, 0
      %v361 = vmul.f32 %v356, %v359
      %362 = vst [vmem:[%s229] sm:$0xff] %v361
      %p363 = scmp.lt.s32.totalorder %s19, 1
      %s364 = scalar_select %p363, %s19, 1
      %p365 = scmp.lt.s32.totalorder %s20, 0
      %s366 = scalar_select %p365, %s20, 0
      %s367 = sadd.s32 %s366, %s364
      %s368 = smul.addr %s367, 8
      %s369 = scalar_lea.vmem %s4, %s368
      // Predicated region
      $region37: #{detail_branch_forward.12} parent=35 // pred_check
        %p370 = pneg %p141
      $region38: #{detail_branch_forward.12} parent=35 // pred_check_branch
        %372 = sbr.rel (%p370) target = $region40
      $region39: #{detail_branch_forward.12} parent=35 // pred_region
        _
      $region40: #{detail_branch_forward.12} parent=35 // pred_fallthru
        _
    $region36: #{detail_branch_forward.12} parent=5 // pred_fallthru
      _
    %p373 = scmp.le.s32.totalorder 2, %s10
    // Predicated region
    $region41: #{detail_branch_forward.12} parent=5 // pred_check
      %p374 = pneg %p373
    $region42: #{detail_branch_forward.12} parent=5 // pred_check_branch
      %376 = sbr.rel (%p374) target = $region44
    $region43: #{detail_branch_forward.12} parent=5 // pred_region
      %s377 = ssub.s32 %s10, 2
      // Predicated region
      $region45: #{detail_branch_forward.12} parent=43 // pred_check
        %p378 = pneg %p147
      $region46: #{detail_branch_forward.12} parent=43 // pred_check_branch
        %380 = sbr.rel (%p378) target = $region48
      $region47: #{detail_branch_forward.12} parent=43 // pred_region
        %p381 = scmp.lt.s32.totalorder %s21, 1
        %s382 = scalar_select %p381, %s21, 1
        %p383 = scmp.lt.s32.totalorder %s22, 0
        %s384 = scalar_select %p383, %s22, 0
        %s385 = sadd.s32 %s384, %s382
        %s386 = smul.addr %s385, 8
        %s387 = scalar_lea.vmem %s4, %s386
      $region48: #{detail_branch_forward.12} parent=43 // pred_fallthru
        _
    $region44: #{detail_branch_forward.12} parent=5 // pred_fallthru
      _
  $region6: #{detail_branch_forward.12} parent=0 // loop_footer
    %s14 = sadd.s32 1, %s10
  $region7: #{detail_branch_forward.12} parent=0 // loop_footer_branch
    %9 = sbr.rel target = $region3
  $region8: #{detail_branch_forward.12} parent=0 // loop_exit
    _

// kernel: detail_branch_forward.14
$region0: #{detail_branch_forward.14}
  #allocation0 [shape = 'u32[]', space=smem, size = 0x4, offset = 0x4, fixed_abs, tag = 'smem constant byte address 0x4 - core index']
  #allocation1 [shape = 'u32[72,128]{1,0:T(1,128)}', space=vmem, size = 0x9000, scoped, tag = 'internal scratch']
  #allocation2 [shape = 'bf16[144,128]{1,0:T(8,128)(2,1)}', space=vmem, size = 0x9000, scoped, tag = 'scratch operand']
  %s0 = inlined_call_operand.vmem [shape: bf16[2,16,384], index: 0, kind: input, shape index: {}]
  %s1 = inlined_call_operand.vmem [shape: bf16[16,144], index: 1, kind: input, shape index: {}]
  %s2 = inlined_call_operand.vmem [shape: f32[16,1], index: 2, kind: input, shape index: {}]
  %s3 = inlined_call_operand.vmem [shape: f32[1,256], index: 3, kind: input, shape index: {}]
  %s4 = inlined_call_operand.vmem [shape: bf16[2,16,256], index: 4, kind: output, shape index: {}]
  %s5 = sld [smem:[#allocation0]]
  $region86: #{detail_branch_forward.14} parent=0
    _
  %s7 = ssub.s32 1, %s5
  %s8 = scalar_select 0, %s7, %s5
  $region1: #{detail_branch_forward.14} parent=0
    #allocation3 [shape = 'u8[8192]{0}', space=vmem, size = 0x2000, scoped, tag = 'output window, operand 0']
    loop: start=0, step=1, limit=6
    $region2: #{detail_branch_forward.14} parent=1 // loop_pre_header
      _
    $region3: #{detail_branch_forward.14} parent=1 // loop_header
      %s10 = sphi 0, %s14
      %p11 = scmp.ge.s32.totalorder %s10, 6
      %s17 = sphi 0, %s29
      %s18 = sphi 0, %s25
      %s19 = sphi 0, %s17
      %s20 = sphi 0, %s18
      %s21 = sphi 0, %s19
      %s22 = sphi 0, %s20
      %s32 = sphi 0, %s34
      %s35 = sphi 0, %s32
      %s36 = sphi 0, %s35
      %s52 = sphi 0, %s36
      %s56 = sphi 0, %s56
      %s58 = sphi 0, %s56
      %s59 = sphi 0, %s58
      %s73 = sphi 0, %s59
      %s77 = sphi 0, %s77
      %s79 = sphi 0, %s77
      %s80 = sphi 0, %s79
      %s94 = sphi 0, %s80
      %s100 = sphi 0, %s102
      %s103 = sphi 0, %s100
      %s104 = sphi 0, %s103
      %s120 = sphi 0, %s104
      %s128 = sphi 0, %s130
      %s131 = sphi 0, %s128
      %s132 = sphi 0, %s131
      %s148 = sphi 0, %s132
    $region4: #{detail_branch_forward.14} parent=1 // loop_header_branch
      %13 = sbr.rel (%p11) target = $region8
    $region5: #{detail_branch_forward.14} parent=1 // loop_body
      %s15 = ssub.s32 %s10, 1
      %s16 = ssub.s32 %s10, 2
      %s23 = sadd.s32 1, %s18
      %p24 = scmp.ge.s32.totalorder %s23, 2
      %s25 = scalar_select %p24, 0, %s23
      %s26 = sadd.s32 1, %s17
      %s27 = scalar_select %p24, %s26, %s17
      %p28 = scmp.ge.s32.totalorder %s27, 2
      %s29 = scalar_select %p28, 0, %s27
      %s30 = ssub.s32 %s17, %s29
      %p31 = scmp.eq.s32.totalorder %s30, 0
      %s33 = sadd.s32 %s32, 1
      %s34 = scalar_select %p31, %s32, %s33
      %p37 = pneg %p31
      %p38 = scmp.eq.s32.totalorder %s10, 3
      %p39 = por %p37, %p38
      %p40 = scmp.ne.s32.totalorder %s32, %s35
      %p41 = scmp.eq.s32.totalorder %s10, 0
      %p42 = por %p40, %p41
      %p43 = scmp.ne.s32.totalorder %s32, %s35
      %p44 = scmp.eq.s32.totalorder %s15, 3
      %p45 = por %p43, %p44
      %p46 = scmp.ne.s32.totalorder %s35, %s36
      %p47 = scmp.eq.s32.totalorder %s15, 0
      %p48 = por %p46, %p47
      %p49 = scmp.ne.s32.totalorder %s35, %s36
      %p50 = scmp.eq.s32.totalorder %s16, 3
      %p51 = por %p49, %p50
      %p53 = scmp.ne.s32.totalorder %s36, %s52
      %p54 = scmp.eq.s32.totalorder %s16, 0
      %p55 = por %p53, %p54
      %s57 = sadd.s32 %s56, 1
      %p60 = scmp.eq.s32.totalorder %s10, 3
      %p61 = scmp.ne.s32.totalorder %s56, %s58
      %p62 = scmp.eq.s32.totalorder %s10, 0
      %p63 = por %p61, %p62
      %p64 = scmp.ne.s32.totalorder %s56, %s58
      %p65 = scmp.eq.s32.totalorder %s15, 3
      %p66 = por %p64, %p65
      %p67 = scmp.ne.s32.totalorder %s58, %s59
      %p68 = scmp.eq.s32.totalorder %s15, 0
      %p69 = por %p67, %p68
      %p70 = scmp.ne.s32.totalorder %s58, %s59
      %p71 = scmp.eq.s32.totalorder %s16, 3
      %p72 = por %p70, %p71
      %p74 = scmp.ne.s32.totalorder %s59, %s73
      %p75 = scmp.eq.s32.totalorder %s16, 0
      %p76 = por %p74, %p75
      %s78 = sadd.s32 %s77, 1
      %p81 = scmp.eq.s32.totalorder %s10, 3
      %p82 = scmp.ne.s32.totalorder %s77, %s79
      %p83 = scmp.eq.s32.totalorder %s10, 0
      %p84 = por %p82, %p83
      %p85 = scmp.ne.s32.totalorder %s77, %s79
      %p86 = scmp.eq.s32.totalorder %s15, 3
      %p87 = por %p85, %p86
      %p88 = scmp.ne.s32.totalorder %s79, %s80
      %p89 = scmp.eq.s32.totalorder %s15, 0
      %p90 = por %p88, %p89
      %p91 = scmp.ne.s32.totalorder %s79, %s80
      %p92 = scmp.eq.s32.totalorder %s16, 3
      %p93 = por %p91, %p92
      %p95 = scmp.ne.s32.totalorder %s80, %s94
      %p96 = scmp.eq.s32.totalorder %s16, 0
      %p97 = por %p95, %p96
      %s98 = ssub.s32 %s18, %s25
      %p99 = scmp.eq.s32.totalorder %s98, 0
      %s101 = sadd.s32 %s100, 1
      %s102 = scalar_select %p99, %s100, %s101
      %p105 = pneg %p99
      %p106 = scmp.eq.s32.totalorder %s10, 3
      %p107 = por %p105, %p106
      %p108 = scmp.ne.s32.totalorder %s100, %s103
      %p109 = scmp.eq.s32.totalorder %s10, 0
      %p110 = por %p108, %p109
      %p111 = scmp.ne.s32.totalorder %s100, %s103
      %p112 = scmp.eq.s32.totalorder %s15, 3
      %p113 = por %p111, %p112
      %p114 = scmp.ne.s32.totalorder %s103, %s104
      %p115 = scmp.eq.s32.totalorder %s15, 0
      %p116 = por %p114, %p115
      %p117 = scmp.ne.s32.totalorder %s103, %s104
      %p118 = scmp.eq.s32.totalorder %s16, 3
      %p119 = por %p117, %p118
      %p121 = scmp.ne.s32.totalorder %s104, %s120
      %p122 = scmp.eq.s32.totalorder %s16, 0
      %p123 = por %p121, %p122
      %s124 = ssub.s32 %s17, %s29
      %s125 = ssub.s32 %s18, %s25
      %s126 = sor.u32 %s124, %s125
      %p127 = scmp.eq.s32.totalorder %s126, 0
      %s129 = sadd.s32 %s128, 1
      %s130 = scalar_select %p127, %s128, %s129
      %p133 = pneg %p127
      %p134 = scmp.eq.s32.totalorder %s10, 3
      %p135 = por %p133, %p134
      %p136 = scmp.ne.s32.totalorder %s128, %s131
      %p137 = scmp.eq.s32.totalorder %s10, 0
      %p138 = por %p136, %p137
      %p139 = scmp.ne.s32.totalorder %s128, %s131
      %p140 = scmp.eq.s32.totalorder %s15, 3
      %p141 = por %p139, %p140
      %p142 = scmp.ne.s32.totalorder %s131, %s132
      %p143 = scmp.eq.s32.totalorder %s15, 0
      %p144 = por %p142, %p143
      %p145 = scmp.ne.s32.totalorder %s131, %s132
      %p146 = scmp.eq.s32.totalorder %s16, 3
      %p147 = por %p145, %p146
      %p149 = scmp.ne.s32.totalorder %s132, %s148
      %p150 = scmp.eq.s32.totalorder %s16, 0
      %p151 = por %p149, %p150
      %p152 = scmp.le.s32.totalorder 1, %s10
      %p153 = scmp.lt.s32.totalorder %s10, 5
      %p154 = pnand %p152, %p153
      %p155 = pneg %p154
      // Predicated region
      $region9: #{detail_branch_forward.14} parent=5 // pred_check
        _
      $region10: #{detail_branch_forward.14} parent=5 // pred_check_branch
        %157 = sbr.rel (%p154) target = $region12
      $region11: #{detail_branch_forward.14} parent=5 // pred_region
        %s158 = ssub.s32 %s10, 1
        // Predicated region
        $region13: #{detail_branch_forward.14} parent=11 // pred_check
          %p159 = pneg %p69
        $region14: #{detail_branch_forward.14} parent=11 // pred_check_branch
          %161 = sbr.rel (%p159) target = $region16
        $region15: #{detail_branch_forward.14} parent=11 // pred_region
          _
        $region16: #{detail_branch_forward.14} parent=11 // pred_fallthru
          _
        // Predicated region
        $region17: #{detail_branch_forward.14} parent=11 // pred_check
          %p162 = pneg %p90
        $region18: #{detail_branch_forward.14} parent=11 // pred_check_branch
          %164 = sbr.rel (%p162) target = $region20
        $region19: #{detail_branch_forward.14} parent=11 // pred_region
          _
        $region20: #{detail_branch_forward.14} parent=11 // pred_fallthru
          _
      $region12: #{detail_branch_forward.14} parent=5 // pred_fallthru
        _
      %p165 = scmp.lt.s32.totalorder %s10, 4
      // Predicated region
      $region21: #{detail_branch_forward.14} parent=5 // pred_check
        %p166 = pneg %p165
      $region22: #{detail_branch_forward.14} parent=5 // pred_check_branch
        %168 = sbr.rel (%p166) target = $region24
      $region23: #{detail_branch_forward.14} parent=5 // pred_region
        // Predicated region
        $region25: #{detail_branch_forward.14} parent=23 // pred_check
          %p169 = pneg %p42
        $region26: #{detail_branch_forward.14} parent=23 // pred_check_branch
          %171 = sbr.rel (%p169) target = $region28
        $region27: #{detail_branch_forward.14} parent=23 // pred_region
          %p172 = scmp.lt.s32.totalorder %s17, 1
          %s173 = scalar_select %p172, %s17, 1
          %s174 = smul.addr %s173, 6
          %s175 = smul.addr %s174, 4
          %s176 = scalar_lea.vmem %s0, %s175
        $region28: #{detail_branch_forward.14} parent=23 // pred_fallthru
          _
        // Predicated region
        $region29: #{detail_branch_forward.14} parent=23 // pred_check
          %p177 = pneg %p110
        $region30: #{detail_branch_forward.14} parent=23 // pred_check_branch
          %179 = sbr.rel (%p177) target = $region32
        $region31: #{detail_branch_forward.14} parent=23 // pred_region
          %p180 = scmp.lt.s32.totalorder %s18, 1
          %s181 = scalar_select %p180, %s18, 1
          %s182 = scalar_lea.vmem %s3, %s181
        $region32: #{detail_branch_forward.14} parent=23 // pred_fallthru
          _
      $region24: #{detail_branch_forward.14} parent=5 // pred_fallthru
        _
      %p183 = scmp.le.s32.totalorder 1, %s10
      %p184 = scmp.lt.s32.totalorder %s10, 5
      %p185 = pnand %p183, %p184
      %p186 = pneg %p185
      // Predicated region
      $region33: #{detail_branch_forward.14} parent=5 // pred_check
        _
      $region34: #{detail_branch_forward.14} parent=5 // pred_check_branch
        %188 = sbr.rel (%p185) target = $region36
      $region35: #{detail_branch_forward.14} parent=5 // pred_region
        %s189 = ssub.s32 %s10, 1
        %p190 = scmp.lt.s32.totalorder %s19, 1
        %s191 = scalar_select %p190, %s19, 1
        %s192 = smul.addr %s191, 6
        %s193 = smul.addr %s192, 4
        %s194 = scalar_lea.vmem %s0, %s193
        %p195 = pneg %p48
        %p196 = pneg %p45
        %p197 = pneg %p69
        %p198 = pneg %p66
        %p199 = pneg %p90
        %p200 = pneg %p87
        %p201 = scmp.lt.s32.totalorder %s20, 1
        %s202 = scalar_select %p201, %s20, 1
        %s203 = scalar_lea.vmem %s3, %s202
        %p204 = pneg %p116
        %p205 = pneg %p113
        %p206 = pneg %p144
        %p207 = pneg %p141
        %s208 = sand.u32 %s131, 1
        %s209 = sand.u32 %s131, 1
        %s210 = smul.addr %s209, 8
        %s211 = scalar_lea.vmem [#allocation3], %s210
        %p212 = scmp.lt.s32.totalorder %s19, 1
        %s213 = scalar_select %p212, %s19, 1
        %s214 = smul.addr %s213, 6
        %s215 = smul.addr %s214, 4
        %s216 = scalar_lea.vmem %s0, %s215
        %p217 = scmp.lt.s32.totalorder %s20, 1
        %s218 = scalar_select %p217, %s20, 1
        %s219 = scalar_lea.vmem %s3, %s218
        %s221 = smul.u32 %s20, 128
        %s222 = sshra.s32 %s221, 7
        %s223 = sand.u32 %s221, 127
        %s224 = smul.addr %s222, 4
        %s225 = scalar_lea.vmem %s216, %s224
        %v226 = vld [vmem:[%s225] sm:$0xff]
        %v227 = vld [vmem:[%s225 + $0xc] sm:$0xff]
        %228 = vst [vmem:[#allocation2] sm:$0xf] %v226
        %229 = vst [vmem:[#allocation2 + $0x4] sm:$0xf] %v227
        %232 = vrot.lane.b32.xlu0 %v226, 127
        %v233 = vpop.permute.xlu0 %232
        %234 = vrot.lane.b32.xlu0 %v227, 127
        %v235 = vpop.permute.xlu0 %234
        %v236 = vrot.slane %v233, 4
        %v237 = vrot.slane %v235, 4
        %vm238 = vcmask 1039360
        %v239 = vsel %vm238, %v233, %v236
        %v240 = vsel %vm238, %v235, %v237
        %243 = vst [vmem:[#allocation2 + $0x8] sm:$0xf] %v239
        %244 = vst [vmem:[#allocation2 + $0xc] sm:$0xf] %v240
        %245 = vrot.lane.b32.xlu0 %v226, 126
        %v246 = vpop.permute.xlu0 %245
        %247 = vrot.lane.b32.xlu0 %v227, 126
        %v248 = vpop.permute.xlu0 %247
        %v249 = vrot.slane %v246, 4
        %v250 = vrot.slane %v248, 4
        %vm251 = vcmask 1031168
        %v252 = vsel %vm251, %v246, %v249
        %v253 = vsel %vm251, %v248, %v250
        %256 = vst [vmem:[#allocation2 + $0x10] sm:$0xf] %v252
        %257 = vst [vmem:[#allocation2 + $0x14] sm:$0xf] %v253
        %258 = vrot.lane.b32.xlu0 %v226, 125
        %v259 = vpop.permute.xlu0 %258
        %260 = vrot.lane.b32.xlu0 %v227, 125
        %v261 = vpop.permute.xlu0 %260
        %v262 = vrot.slane %v259, 4
        %v263 = vrot.slane %v261, 4
        %vm264 = vcmask 1022976
        %v265 = vsel %vm264, %v259, %v262
        %v266 = vsel %vm264, %v261, %v263
        %269 = vst [vmem:[#allocation2 + $0x18] sm:$0xf] %v265
        %270 = vst [vmem:[#allocation2 + $0x1c] sm:$0xf] %v266
        %271 = vrot.lane.b32.xlu0 %v226, 124
        %v272 = vpop.permute.xlu0 %271
        %273 = vrot.lane.b32.xlu0 %v227, 124
        %v274 = vpop.permute.xlu0 %273
        %v275 = vrot.slane %v272, 4
        %v276 = vrot.slane %v274, 4
        %vm277 = vcmask 1014784
        %v278 = vsel %vm277, %v272, %v275
        %v279 = vsel %vm277, %v274, %v276
        %282 = vst [vmem:[#allocation2 + $0x20] sm:$0xf] %v278
        %283 = vst [vmem:[#allocation2 + $0x24] sm:$0xf] %v279
        %284 = vrot.lane.b32.xlu0 %v226, 123
        %v285 = vpop.permute.xlu0 %284
        %286 = vrot.lane.b32.xlu0 %v227, 123
        %v287 = vpop.permute.xlu0 %286
        %v288 = vrot.slane %v285, 4
        %v289 = vrot.slane %v287, 4
        %vm290 = vcmask 1006592
        %v291 = vsel %vm290, %v285, %v288
        %v292 = vsel %vm290, %v287, %v289
        %295 = vst [vmem:[#allocation2 + $0x28] sm:$0xf] %v291
        %296 = vst [vmem:[#allocation2 + $0x2c] sm:$0xf] %v292
        %297 = vrot.lane.b32.xlu0 %v226, 122
        %v298 = vpop.permute.xlu0 %297
        %299 = vrot.lane.b32.xlu0 %v227, 122
        %v300 = vpop.permute.xlu0 %299
        %v301 = vrot.slane %v298, 4
        %v302 = vrot.slane %v300, 4
        %vm303 = vcmask 998400
        %v304 = vsel %vm303, %v298, %v301
        %v305 = vsel %vm303, %v300, %v302
        %308 = vst [vmem:[#allocation2 + $0x30] sm:$0xf] %v304
        %309 = vst [vmem:[#allocation2 + $0x34] sm:$0xf] %v305
        %310 = vrot.lane.b32.xlu0 %v226, 121
        %v311 = vpop.permute.xlu0 %310
        %312 = vrot.lane.b32.xlu0 %v227, 121
        %v313 = vpop.permute.xlu0 %312
        %v314 = vrot.slane %v311, 4
        %v315 = vrot.slane %v313, 4
        %vm316 = vcmask 990208
        %v317 = vsel %vm316, %v311, %v314
        %v318 = vsel %vm316, %v313, %v315
        %321 = vst [vmem:[#allocation2 + $0x38] sm:$0xf] %v317
        %322 = vst [vmem:[#allocation2 + $0x3c] sm:$0xf] %v318
        %323 = vrot.lane.b32.xlu0 %v226, 120
        %v324 = vpop.permute.xlu0 %323
        %325 = vrot.lane.b32.xlu0 %v227, 120
        %v326 = vpop.permute.xlu0 %325
        %v327 = vrot.slane %v324, 4
        %v328 = vrot.slane %v326, 4
        %vm329 = vcmask 982016
        %v330 = vsel %vm329, %v324, %v327
        %v331 = vsel %vm329, %v326, %v328
        %334 = vst [vmem:[#allocation2 + $0x40] sm:$0xf] %v330
        %335 = vst [vmem:[#allocation2 + $0x44] sm:$0xf] %v331
        %v336 = vld [vmem:[%s1] sm:$0xff]
        %v337 = vld [vmem:[%s1 + $0x8] sm:$0xff]
        %v338 = vld [vmem:[#allocation2] sm:$0xf]
        %v339 = vld [vmem:[#allocation2 + $0x4] sm:$0xf]
        %v340 = vld [vmem:[#allocation2 + $0x8] sm:$0xf]
        %v341 = vld [vmem:[#allocation2 + $0xc] sm:$0xf]
        %v342 = vld [vmem:[#allocation2 + $0x10] sm:$0xf]
        %v343 = vld [vmem:[#allocation2 + $0x14] sm:$0xf]
        %v344 = vld [vmem:[#allocation2 + $0x18] sm:$0xf]
        %v345 = vld [vmem:[#allocation2 + $0x1c] sm:$0xf]
        %v346 = vld [vmem:[#allocation2 + $0x20] sm:$0xf]
        %v347 = vld [vmem:[#allocation2 + $0x24] sm:$0xf]
        %v348 = vld [vmem:[#allocation2 + $0x28] sm:$0xf]
        %v349 = vld [vmem:[#allocation2 + $0x2c] sm:$0xf]
        %v350 = vld [vmem:[#allocation2 + $0x30] sm:$0xf]
        %v351 = vld [vmem:[#allocation2 + $0x34] sm:$0xf]
        %v352 = vld [vmem:[#allocation2 + $0x38] sm:$0xf]
        %v353 = vld [vmem:[#allocation2 + $0x3c] sm:$0xf]
        %v354 = vld [vmem:[#allocation2 + $0x40] sm:$0xf]
        %v355 = vld [vmem:[#allocation2 + $0x44] sm:$0xf]
        %v356 = vld [vmem:[%s2] sm:$0xff]
        %v357 = vld [vmem:[%s2 + $0x8] sm:$0xff]
        %359 = vset.pattern.permute.xlu0 0
        %360 = vperm.xlu0 %359, %v356
        %v361 = vpop.permute.xlu0 %360
        %364 = vset.pattern.permute.xlu0 0
        %365 = vperm.xlu0 %364, %v357
        %v366 = vpop.permute.xlu0 %365
        %v370 = vunpack.c.l.b16 %v336
        %v371 = vunpack.c.h.b16 %v336
        %v372 = vunpack.c.l.b16 %v337
        %v373 = vunpack.c.h.b16 %v337
        %v374 = vpack.c.b16 %v372, %v370
        %v375 = vpack.c.b16 %v373, %v371
        %v395 = vunpack.c.l.b16 %v338
        %v396 = vunpack.c.l.b16 %v339
        %v397 = vunpack.c.l.b16 %v340
        %v398 = vunpack.c.l.b16 %v341
        %v399 = vunpack.c.l.b16 %v342
        %v400 = vunpack.c.l.b16 %v343
        %v401 = vunpack.c.l.b16 %v344
        %v402 = vunpack.c.l.b16 %v345
        %v403 = vunpack.c.l.b16 %v346
        %v404 = vunpack.c.l.b16 %v347
        %v405 = vunpack.c.l.b16 %v348
        %v406 = vunpack.c.l.b16 %v349
        %v407 = vunpack.c.l.b16 %v350
        %v408 = vunpack.c.l.b16 %v351
        %v409 = vunpack.c.l.b16 %v352
        %v410 = vunpack.c.l.b16 %v353
        %v411 = vunpack.c.l.b16 %v354
        %v412 = vunpack.c.l.b16 %v355
        %v413 = vpack.c.b16 %v396, %v395
        %v414 = vpack.c.b16 %v398, %v397
        %v415 = vpack.c.b16 %v400, %v399
        %v416 = vpack.c.b16 %v402, %v401
        %v417 = vpack.c.b16 %v404, %v403
        %v418 = vpack.c.b16 %v406, %v405
        %v419 = vpack.c.b16 %v408, %v407
        %v420 = vpack.c.b16 %v410, %v409
        %v421 = vpack.c.b16 %v412, %v411
        %vm431 = vcmask 130048
        %v433 = vsel %vm431, %v375, 0
        %435 = vmatpush.bf16.msra.mxu0 %v420
        %436 = vmatpush.bf16.msra.mxu0 %v419
        %437 = vmatpush.bf16.msra.mxu0 %v418
        %438 = vmatpush.bf16.msra.mxu0 %v417
        %439 = vmatpush.bf16.msra.mxu0 %v416
        %440 = vmatpush.bf16.msra.mxu0 %v415
        %441 = vmatpush.bf16.msra.mxu0 %v414
        %442 = vmatpush.bf16.msra.mxu0 %v413
        %443 = vmatmul.bf16.gmra.mxu0 %v374
        %v444 = vpop.f32.mrf.mxu0
        %v445 = vadd.f32 %v361, %v444
        %v446 = vpop.f32.mrf.mxu0
        %v447 = vadd.f32 %v366, %v446
        %448 = vdwg.mxu0
        %449 = vmatpush.bf16.msra.mxu0 0
        %450 = vmatpush.bf16.msra.mxu0 0
        %451 = vmatpush.bf16.msra.mxu0 0
        %452 = vmatpush.bf16.msra.mxu0 0
        %453 = vmatpush.bf16.msra.mxu0 0
        %454 = vmatpush.bf16.msra.mxu0 0
        %455 = vmatpush.bf16.msra.mxu0 0
        %456 = vmatpush.bf16.msra.mxu0 %v421
        %457 = vmatmul.bf16.gmra.mxu0 %v433
        %v458 = vpop.f32.mrf.mxu0
        %v459 = vadd.f32 %v445, %v458
        %v460 = vpop.f32.mrf.mxu0
        %v461 = vadd.f32 %v447, %v460
        %462 = vdwg.mxu0
        %v463 = vmax.f32 %v459, 0.0
        %v464 = vmax.f32 %v461, 0.0
        %v465 = vld [vmem:[%s219] sm:$0x1]
        %v467 = vperm.slane %v465, 0
        %v469 = vmul.f32 %v463, %v467
        %v470 = vmul.f32 %v464, %v467
        %v471 = vpack.c.bf16 %v469, %v469
        %v472 = vpack.c.bf16 %v470, %v470
        %473 = vst [vmem:[%s211] sm:$0xf] %v471
        %474 = vst [vmem:[%s211 + $0x4] sm:$0xf] %v472
        %s475 = sand.u32 %s131, 1
        %s476 = sand.u32 %s131, 1
        %s477 = smul.addr %s476, 8
        %s478 = scalar_lea.vmem [#allocation3], %s477
        // Predicated region
        $region37: #{detail_branch_forward.14} parent=35 // pred_check
          %p479 = pneg %p141
        $region38: #{detail_branch_forward.14} parent=35 // pred_check_branch
          %481 = sbr.rel (%p479) target = $region40
        $region39: #{detail_branch_forward.14} parent=35 // pred_region
          %s482 = smul.addr %s19, 4
          %s483 = sadd.s32 %s20, %s482
          %s484 = smul.addr %s483, 4
          %s485 = scalar_lea.vmem %s4, %s484
          // Predicated region
          $region41: #{detail_branch_forward.14} parent=39 // pred_check
            _
          $region42: #{detail_branch_forward.14} parent=39 // pred_check_branch
            %487 = sbr.rel (0) target = $region44
          $region43: #{detail_branch_forward.14} parent=39 // pred_region
            // Predicated region
            $region45: #{detail_branch_forward.14} parent=43 // pred_check
              _
            $region46: #{detail_branch_forward.14} parent=43 // pred_check_branch
              %489 = sbr.rel target = $region48
            $region47: #{detail_branch_forward.14} parent=43 // pred_region
              // Predicated region
              $region60: #{detail_branch_forward.14} parent=47 // pred_check
                _
              $region61: #{detail_branch_forward.14} parent=47 // pred_check_branch
                %507 = sbr.rel (0) target = $region63
              $region62: #{detail_branch_forward.14} parent=47 // pred_region
                loop: start=0, step=1, limit=1
                $region64: #{detail_branch_forward.14} parent=62 // loop_pre_header
                  _
                $region65: #{detail_branch_forward.14} parent=62 // loop_header
                  %s509 = sphi 0, %s513
                  %p510 = scmp.ge.s32.totalorder %s509, 1
                  %s514 = sphi %s478, %s478
                  %s515 = sphi %s485, %s485
                $region66: #{detail_branch_forward.14} parent=62 // loop_header_branch
                  %512 = sbr.rel (%p510) target = $region70
                $region67: #{detail_branch_forward.14} parent=62 // loop_body
                  _
                $region68: #{detail_branch_forward.14} parent=62 // loop_footer
                  %s513 = sadd.s32 1, %s509
                $region69: #{detail_branch_forward.14} parent=62 // loop_footer_branch
                  %508 = sbr.rel target = $region65
                $region70: #{detail_branch_forward.14} parent=62 // loop_exit
                  _
                %s517 = ssub.s32 16, 1
                loop: start=0, step=1, limit=1
                $region71: #{detail_branch_forward.14} parent=62 // loop_pre_header
                  _
                $region72: #{detail_branch_forward.14} parent=62 // loop_header
                  %s519 = sphi 0, %s523
                  %p520 = scmp.ge.s32.totalorder %s519, 1
                  %s524 = sphi %s478, %s478
                  %s525 = sphi %s485, %s485
                $region73: #{detail_branch_forward.14} parent=62 // loop_header_branch
                  %522 = sbr.rel (%p520) target = $region77
                $region74: #{detail_branch_forward.14} parent=62 // loop_body
                  %v526 = vld [vmem:[%s524] sm:%s517]
                  %527 = vst [vmem:[%s525] sm:%s517] %v526
                  %v528 = vld [vmem:[%s524 + $0x4] sm:%s517]
                  %529 = vst [vmem:[%s525 + $0x8] sm:%s517] %v528
                $region75: #{detail_branch_forward.14} parent=62 // loop_footer
                  %s523 = sadd.s32 1, %s519
                $region76: #{detail_branch_forward.14} parent=62 // loop_footer_branch
                  %518 = sbr.rel target = $region72
                $region77: #{detail_branch_forward.14} parent=62 // loop_exit
                  _
              $region63: #{detail_branch_forward.14} parent=47 // pred_fallthru
                _
            $region48: #{detail_branch_forward.14} parent=43 // pred_fallthru
              _
            // Predicated region
            $region49: #{detail_branch_forward.14} parent=43 // pred_check
              _
            $region50: #{detail_branch_forward.14} parent=43 // pred_check_branch
              %491 = sbr.rel (0) target = $region52
            $region51: #{detail_branch_forward.14} parent=43 // pred_region
              %s493 = ssub.s32 16, 1
              loop: start=0, step=1, limit=1
              $region53: #{detail_branch_forward.14} parent=51 // loop_pre_header
                _
              $region54: #{detail_branch_forward.14} parent=51 // loop_header
                %s495 = sphi 0, %s499
                %p496 = scmp.ge.s32.totalorder %s495, 1
                %s500 = sphi %s478, %s478
                %s501 = sphi %s485, %s485
              $region55: #{detail_branch_forward.14} parent=51 // loop_header_branch
                %498 = sbr.rel (%p496) target = $region59
              $region56: #{detail_branch_forward.14} parent=51 // loop_body
                %v502 = vld [vmem:[%s500] sm:%s493]
                %503 = vst [vmem:[%s501] sm:%s493] %v502
                %v504 = vld [vmem:[%s500 + $0x4] sm:%s493]
                %505 = vst [vmem:[%s501 + $0x8] sm:%s493] %v504
              $region57: #{detail_branch_forward.14} parent=51 // loop_footer
                %s499 = sadd.s32 1, %s495
              $region58: #{detail_branch_forward.14} parent=51 // loop_footer_branch
                %494 = sbr.rel target = $region54
              $region59: #{detail_branch_forward.14} parent=51 // loop_exit
                _
            $region52: #{detail_branch_forward.14} parent=43 // pred_fallthru
              _
          $region44: #{detail_branch_forward.14} parent=39 // pred_fallthru
            _
          %530 = vnop
        $region40: #{detail_branch_forward.14} parent=35 // pred_fallthru
          _
      $region36: #{detail_branch_forward.14} parent=5 // pred_fallthru
        _
      %p531 = scmp.le.s32.totalorder 2, %s10
      // Predicated region
      $region78: #{detail_branch_forward.14} parent=5 // pred_check
        %p532 = pneg %p531
      $region79: #{detail_branch_forward.14} parent=5 // pred_check_branch
        %534 = sbr.rel (%p532) target = $region81
      $region80: #{detail_branch_forward.14} parent=5 // pred_region
        %s535 = ssub.s32 %s10, 2
        // Predicated region
        $region82: #{detail_branch_forward.14} parent=80 // pred_check
          %p536 = pneg %p147
        $region83: #{detail_branch_forward.14} parent=80 // pred_check_branch
          %538 = sbr.rel (%p536) target = $region85
        $region84: #{detail_branch_forward.14} parent=80 // pred_region
          %s539 = sand.u32 %s132, 1
          %s540 = sand.u32 %s132, 1
          %s541 = smul.addr %s540, 8
          %s542 = scalar_lea.vmem [#allocation3], %s541
        $region85: #{detail_branch_forward.14} parent=80 // pred_fallthru
          _
      $region81: #{detail_branch_forward.14} parent=5 // pred_fallthru
        _
    $region6: #{detail_branch_forward.14} parent=1 // loop_footer
      %s14 = sadd.s32 1, %s10
    $region7: #{detail_branch_forward.14} parent=1 // loop_footer_branch
      %9 = sbr.rel target = $region3
    $region8: #{detail_branch_forward.14} parent=1 // loop_exit
      _

// kernel: detail_branch_forward.15
$region0: #{detail_branch_forward.15}
  #allocation0 [shape = 'u32[]', space=smem, size = 0x4, offset = 0x4, fixed_abs, tag = 'smem constant byte address 0x4 - core index']
  #allocation1 [shape = 'u32[72,128]{1,0:T(1,128)}', space=vmem, size = 0x9000, scoped, tag = 'internal scratch']
  #allocation2 [shape = 'bf16[144,128]{1,0:T(8,128)(2,1)}', space=vmem, size = 0x9000, scoped, tag = 'scratch operand']
  %s0 = inlined_call_operand.vmem [shape: bf16[2,16,256], index: 0, kind: input, shape index: {}]
  %s1 = inlined_call_operand.vmem [shape: bf16[16,144], index: 1, kind: input, shape index: {}]
  %s2 = inlined_call_operand.vmem [shape: f32[16,1], index: 2, kind: input, shape index: {}]
  %s3 = inlined_call_operand.vmem [shape: f32[1,128], index: 3, kind: input, shape index: {}]
  %s4 = inlined_call_operand.vmem [shape: bf16[2,16,128], index: 4, kind: output, shape index: {}]
  %s5 = sld [smem:[#allocation0]]
  $region49: #{detail_branch_forward.15} parent=0
    _
  %s7 = ssub.s32 1, %s5
  %s8 = scalar_select 0, %s7, %s5
  loop: start=0, step=1, limit=4
  $region2: #{detail_branch_forward.15} parent=0 // loop_pre_header
    _
  $region3: #{detail_branch_forward.15} parent=0 // loop_header
    %s10 = sphi 0, %s14
    %p11 = scmp.ge.s32.totalorder %s10, 4
    %s17 = sphi 0, %s29
    %s18 = sphi 0, %s25
    %s19 = sphi 0, %s17
    %s20 = sphi 0, %s18
    %s21 = sphi 0, %s19
    %s22 = sphi 0, %s20
    %s32 = sphi 0, %s34
    %s35 = sphi 0, %s32
    %s36 = sphi 0, %s35
    %s52 = sphi 0, %s36
    %s56 = sphi 0, %s56
    %s58 = sphi 0, %s56
    %s59 = sphi 0, %s58
    %s73 = sphi 0, %s59
    %s77 = sphi 0, %s77
    %s79 = sphi 0, %s77
    %s80 = sphi 0, %s79
    %s94 = sphi 0, %s80
    %s100 = sphi 0, %s102
    %s103 = sphi 0, %s100
    %s104 = sphi 0, %s103
    %s120 = sphi 0, %s104
    %s128 = sphi 0, %s130
    %s131 = sphi 0, %s128
    %s132 = sphi 0, %s131
    %s148 = sphi 0, %s132
  $region4: #{detail_branch_forward.15} parent=0 // loop_header_branch
    %13 = sbr.rel (%p11) target = $region8
  $region5: #{detail_branch_forward.15} parent=0 // loop_body
    %s15 = ssub.s32 %s10, 1
    %s16 = ssub.s32 %s10, 2
    %s23 = sadd.s32 1, %s18
    %p24 = scmp.ge.s32.totalorder %s23, 1
    %s25 = scalar_select %p24, 0, %s23
    %s26 = sadd.s32 1, %s17
    %s27 = scalar_select %p24, %s26, %s17
    %p28 = scmp.ge.s32.totalorder %s27, 2
    %s29 = scalar_select %p28, 0, %s27
    %s30 = ssub.s32 %s17, %s29
    %p31 = scmp.eq.s32.totalorder %s30, 0
    %s33 = sadd.s32 %s32, 1
    %s34 = scalar_select %p31, %s32, %s33
    %p37 = pneg %p31
    %p38 = scmp.eq.s32.totalorder %s10, 1
    %p39 = por %p37, %p38
    %p40 = scmp.ne.s32.totalorder %s32, %s35
    %p41 = scmp.eq.s32.totalorder %s10, 0
    %p42 = por %p40, %p41
    %p43 = scmp.ne.s32.totalorder %s32, %s35
    %p44 = scmp.eq.s32.totalorder %s15, 1
    %p45 = por %p43, %p44
    %p46 = scmp.ne.s32.totalorder %s35, %s36
    %p47 = scmp.eq.s32.totalorder %s15, 0
    %p48 = por %p46, %p47
    %p49 = scmp.ne.s32.totalorder %s35, %s36
    %p50 = scmp.eq.s32.totalorder %s16, 1
    %p51 = por %p49, %p50
    %p53 = scmp.ne.s32.totalorder %s36, %s52
    %p54 = scmp.eq.s32.totalorder %s16, 0
    %p55 = por %p53, %p54
    %s57 = sadd.s32 %s56, 1
    %p60 = scmp.eq.s32.totalorder %s10, 1
    %p61 = scmp.ne.s32.totalorder %s56, %s58
    %p62 = scmp.eq.s32.totalorder %s10, 0
    %p63 = por %p61, %p62
    %p64 = scmp.ne.s32.totalorder %s56, %s58
    %p65 = scmp.eq.s32.totalorder %s15, 1
    %p66 = por %p64, %p65
    %p67 = scmp.ne.s32.totalorder %s58, %s59
    %p68 = scmp.eq.s32.totalorder %s15, 0
    %p69 = por %p67, %p68
    %p70 = scmp.ne.s32.totalorder %s58, %s59
    %p71 = scmp.eq.s32.totalorder %s16, 1
    %p72 = por %p70, %p71
    %p74 = scmp.ne.s32.totalorder %s59, %s73
    %p75 = scmp.eq.s32.totalorder %s16, 0
    %p76 = por %p74, %p75
    %s78 = sadd.s32 %s77, 1
    %p81 = scmp.eq.s32.totalorder %s10, 1
    %p82 = scmp.ne.s32.totalorder %s77, %s79
    %p83 = scmp.eq.s32.totalorder %s10, 0
    %p84 = por %p82, %p83
    %p85 = scmp.ne.s32.totalorder %s77, %s79
    %p86 = scmp.eq.s32.totalorder %s15, 1
    %p87 = por %p85, %p86
    %p88 = scmp.ne.s32.totalorder %s79, %s80
    %p89 = scmp.eq.s32.totalorder %s15, 0
    %p90 = por %p88, %p89
    %p91 = scmp.ne.s32.totalorder %s79, %s80
    %p92 = scmp.eq.s32.totalorder %s16, 1
    %p93 = por %p91, %p92
    %p95 = scmp.ne.s32.totalorder %s80, %s94
    %p96 = scmp.eq.s32.totalorder %s16, 0
    %p97 = por %p95, %p96
    %s98 = ssub.s32 %s18, %s25
    %p99 = scmp.eq.s32.totalorder %s98, 0
    %s101 = sadd.s32 %s100, 1
    %s102 = scalar_select %p99, %s100, %s101
    %p105 = pneg %p99
    %p106 = scmp.eq.s32.totalorder %s10, 1
    %p107 = por %p105, %p106
    %p108 = scmp.ne.s32.totalorder %s100, %s103
    %p109 = scmp.eq.s32.totalorder %s10, 0
    %p110 = por %p108, %p109
    %p111 = scmp.ne.s32.totalorder %s100, %s103
    %p112 = scmp.eq.s32.totalorder %s15, 1
    %p113 = por %p111, %p112
    %p114 = scmp.ne.s32.totalorder %s103, %s104
    %p115 = scmp.eq.s32.totalorder %s15, 0
    %p116 = por %p114, %p115
    %p117 = scmp.ne.s32.totalorder %s103, %s104
    %p118 = scmp.eq.s32.totalorder %s16, 1
    %p119 = por %p117, %p118
    %p121 = scmp.ne.s32.totalorder %s104, %s120
    %p122 = scmp.eq.s32.totalorder %s16, 0
    %p123 = por %p121, %p122
    %s124 = ssub.s32 %s17, %s29
    %s125 = ssub.s32 %s18, %s25
    %s126 = sor.u32 %s124, %s125
    %p127 = scmp.eq.s32.totalorder %s126, 0
    %s129 = sadd.s32 %s128, 1
    %s130 = scalar_select %p127, %s128, %s129
    %p133 = pneg %p127
    %p134 = scmp.eq.s32.totalorder %s10, 1
    %p135 = por %p133, %p134
    %p136 = scmp.ne.s32.totalorder %s128, %s131
    %p137 = scmp.eq.s32.totalorder %s10, 0
    %p138 = por %p136, %p137
    %p139 = scmp.ne.s32.totalorder %s128, %s131
    %p140 = scmp.eq.s32.totalorder %s15, 1
    %p141 = por %p139, %p140
    %p142 = scmp.ne.s32.totalorder %s131, %s132
    %p143 = scmp.eq.s32.totalorder %s15, 0
    %p144 = por %p142, %p143
    %p145 = scmp.ne.s32.totalorder %s131, %s132
    %p146 = scmp.eq.s32.totalorder %s16, 1
    %p147 = por %p145, %p146
    %p149 = scmp.ne.s32.totalorder %s132, %s148
    %p150 = scmp.eq.s32.totalorder %s16, 0
    %p151 = por %p149, %p150
    %p152 = scmp.le.s32.totalorder 1, %s10
    %p153 = scmp.lt.s32.totalorder %s10, 3
    %p154 = pnand %p152, %p153
    %p155 = pneg %p154
    // Predicated region
    $region9: #{detail_branch_forward.15} parent=5 // pred_check
      _
    $region10: #{detail_branch_forward.15} parent=5 // pred_check_branch
      %157 = sbr.rel (%p154) target = $region12
    $region11: #{detail_branch_forward.15} parent=5 // pred_region
      %s158 = ssub.s32 %s10, 1
      // Predicated region
      $region13: #{detail_branch_forward.15} parent=11 // pred_check
        %p159 = pneg %p69
      $region14: #{detail_branch_forward.15} parent=11 // pred_check_branch
        %161 = sbr.rel (%p159) target = $region16
      $region15: #{detail_branch_forward.15} parent=11 // pred_region
        _
      $region16: #{detail_branch_forward.15} parent=11 // pred_fallthru
        _
      // Predicated region
      $region17: #{detail_branch_forward.15} parent=11 // pred_check
        %p162 = pneg %p90
      $region18: #{detail_branch_forward.15} parent=11 // pred_check_branch
        %164 = sbr.rel (%p162) target = $region20
      $region19: #{detail_branch_forward.15} parent=11 // pred_region
        _
      $region20: #{detail_branch_forward.15} parent=11 // pred_fallthru
        _
      // Predicated region
      $region21: #{detail_branch_forward.15} parent=11 // pred_check
        %p165 = pneg %p116
      $region22: #{detail_branch_forward.15} parent=11 // pred_check_branch
        %167 = sbr.rel (%p165) target = $region24
      $region23: #{detail_branch_forward.15} parent=11 // pred_region
        %p168 = scmp.lt.s32.totalorder %s20, 0
        %s169 = scalar_select %p168, %s20, 0
        %s170 = scalar_lea.vmem %s3, %s169
      $region24: #{detail_branch_forward.15} parent=11 // pred_fallthru
        _
    $region12: #{detail_branch_forward.15} parent=5 // pred_fallthru
      _
    %p171 = scmp.lt.s32.totalorder %s10, 2
    // Predicated region
    $region25: #{detail_branch_forward.15} parent=5 // pred_check
      %p172 = pneg %p171
    $region26: #{detail_branch_forward.15} parent=5 // pred_check_branch
      %174 = sbr.rel (%p172) target = $region28
    $region27: #{detail_branch_forward.15} parent=5 // pred_region
      // Predicated region
      $region29: #{detail_branch_forward.15} parent=27 // pred_check
        %p175 = pneg %p42
      $region30: #{detail_branch_forward.15} parent=27 // pred_check_branch
        %177 = sbr.rel (%p175) target = $region32
      $region31: #{detail_branch_forward.15} parent=27 // pred_region
        %p178 = scmp.lt.s32.totalorder %s17, 1
        %s179 = scalar_select %p178, %s17, 1
        %s180 = smul.addr %s179, 4
        %s181 = smul.addr %s180, 4
        %s182 = scalar_lea.vmem %s0, %s181
      $region32: #{detail_branch_forward.15} parent=27 // pred_fallthru
        _
    $region28: #{detail_branch_forward.15} parent=5 // pred_fallthru
      _
    %p183 = scmp.le.s32.totalorder 1, %s10
    %p184 = scmp.lt.s32.totalorder %s10, 3
    %p185 = pnand %p183, %p184
    %p186 = pneg %p185
    // Predicated region
    $region33: #{detail_branch_forward.15} parent=5 // pred_check
      _
    $region34: #{detail_branch_forward.15} parent=5 // pred_check_branch
      %188 = sbr.rel (%p185) target = $region36
    $region35: #{detail_branch_forward.15} parent=5 // pred_region
      %s189 = ssub.s32 %s10, 1
      %p190 = scmp.lt.s32.totalorder %s19, 1
      %s191 = scalar_select %p190, %s19, 1
      %s192 = smul.addr %s191, 4
      %s193 = smul.addr %s192, 4
      %s194 = scalar_lea.vmem %s0, %s193
      %p195 = pneg %p48
      %p196 = pneg %p45
      %p197 = pneg %p69
      %p198 = pneg %p66
      %p199 = pneg %p90
      %p200 = pneg %p87
      %p201 = scmp.lt.s32.totalorder %s20, 0
      %s202 = scalar_select %p201, %s20, 0
      %s203 = scalar_lea.vmem %s3, %s202
      %p204 = pneg %p116
      %p205 = pneg %p113
      %p206 = pneg %p144
      %p207 = pneg %p141
      %p208 = scmp.lt.s32.totalorder %s19, 1
      %s209 = scalar_select %p208, %s19, 1
      %p210 = scmp.lt.s32.totalorder %s20, 0
      %s211 = scalar_select %p210, %s20, 0
      %s212 = smul.addr %s209, 2
      %s213 = sadd.s32 %s211, %s212
      %s214 = smul.addr %s213, 4
      %s215 = scalar_lea.vmem %s4, %s214
      %p216 = scmp.lt.s32.totalorder %s19, 1
      %s217 = scalar_select %p216, %s19, 1
      %s218 = smul.addr %s217, 4
      %s219 = smul.addr %s218, 4
      %s220 = scalar_lea.vmem %s0, %s219
      %p221 = scmp.lt.s32.totalorder %s20, 0
      %s222 = scalar_select %p221, %s20, 0
      %s223 = scalar_lea.vmem %s3, %s222
      %p224 = scmp.lt.s32.totalorder %s19, 1
      %s225 = scalar_select %p224, %s19, 1
      %p226 = scmp.lt.s32.totalorder %s20, 0
      %s227 = scalar_select %p226, %s20, 0
      %s228 = smul.addr %s225, 2
      %s229 = sadd.s32 %s227, %s228
      %s230 = smul.addr %s229, 4
      %s231 = scalar_lea.vmem %s4, %s230
      %v233 = vld [vmem:[%s220] sm:$0xff]
      %v234 = vld [vmem:[%s220 + $0x8] sm:$0xff]
      %235 = vst [vmem:[#allocation2] sm:$0xf] %v233
      %236 = vst [vmem:[#allocation2 + $0x4] sm:$0xf] %v234
      %239 = vrot.lane.b32.xlu0 %v233, 127
      %v240 = vpop.permute.xlu0 %239
      %241 = vrot.lane.b32.xlu0 %v234, 127
      %v242 = vpop.permute.xlu0 %241
      %v243 = vrot.slane %v240, 4
      %v244 = vrot.slane %v242, 4
      %vm245 = vcmask 1039360
      %v246 = vsel %vm245, %v240, %v243
      %v247 = vsel %vm245, %v242, %v244
      %250 = vst [vmem:[#allocation2 + $0x8] sm:$0xf] %v246
      %251 = vst [vmem:[#allocation2 + $0xc] sm:$0xf] %v247
      %252 = vrot.lane.b32.xlu0 %v233, 126
      %v253 = vpop.permute.xlu0 %252
      %254 = vrot.lane.b32.xlu0 %v234, 126
      %v255 = vpop.permute.xlu0 %254
      %v256 = vrot.slane %v253, 4
      %v257 = vrot.slane %v255, 4
      %vm258 = vcmask 1031168
      %v259 = vsel %vm258, %v253, %v256
      %v260 = vsel %vm258, %v255, %v257
      %263 = vst [vmem:[#allocation2 + $0x10] sm:$0xf] %v259
      %264 = vst [vmem:[#allocation2 + $0x14] sm:$0xf] %v260
      %265 = vrot.lane.b32.xlu0 %v233, 125
      %v266 = vpop.permute.xlu0 %265
      %267 = vrot.lane.b32.xlu0 %v234, 125
      %v268 = vpop.permute.xlu0 %267
      %v269 = vrot.slane %v266, 4
      %v270 = vrot.slane %v268, 4
      %vm271 = vcmask 1022976
      %v272 = vsel %vm271, %v266, %v269
      %v273 = vsel %vm271, %v268, %v270
      %276 = vst [vmem:[#allocation2 + $0x18] sm:$0xf] %v272
      %277 = vst [vmem:[#allocation2 + $0x1c] sm:$0xf] %v273
      %278 = vrot.lane.b32.xlu0 %v233, 124
      %v279 = vpop.permute.xlu0 %278
      %280 = vrot.lane.b32.xlu0 %v234, 124
      %v281 = vpop.permute.xlu0 %280
      %v282 = vrot.slane %v279, 4
      %v283 = vrot.slane %v281, 4
      %vm284 = vcmask 1014784
      %v285 = vsel %vm284, %v279, %v282
      %v286 = vsel %vm284, %v281, %v283
      %289 = vst [vmem:[#allocation2 + $0x20] sm:$0xf] %v285
      %290 = vst [vmem:[#allocation2 + $0x24] sm:$0xf] %v286
      %291 = vrot.lane.b32.xlu0 %v233, 123
      %v292 = vpop.permute.xlu0 %291
      %293 = vrot.lane.b32.xlu0 %v234, 123
      %v294 = vpop.permute.xlu0 %293
      %v295 = vrot.slane %v292, 4
      %v296 = vrot.slane %v294, 4
      %vm297 = vcmask 1006592
      %v298 = vsel %vm297, %v292, %v295
      %v299 = vsel %vm297, %v294, %v296
      %302 = vst [vmem:[#allocation2 + $0x28] sm:$0xf] %v298
      %303 = vst [vmem:[#allocation2 + $0x2c] sm:$0xf] %v299
      %304 = vrot.lane.b32.xlu0 %v233, 122
      %v305 = vpop.permute.xlu0 %304
      %306 = vrot.lane.b32.xlu0 %v234, 122
      %v307 = vpop.permute.xlu0 %306
      %v308 = vrot.slane %v305, 4
      %v309 = vrot.slane %v307, 4
      %vm310 = vcmask 998400
      %v311 = vsel %vm310, %v305, %v308
      %v312 = vsel %vm310, %v307, %v309
      %315 = vst [vmem:[#allocation2 + $0x30] sm:$0xf] %v311
      %316 = vst [vmem:[#allocation2 + $0x34] sm:$0xf] %v312
      %317 = vrot.lane.b32.xlu0 %v233, 121
      %v318 = vpop.permute.xlu0 %317
      %319 = vrot.lane.b32.xlu0 %v234, 121
      %v320 = vpop.permute.xlu0 %319
      %v321 = vrot.slane %v318, 4
      %v322 = vrot.slane %v320, 4
      %vm323 = vcmask 990208
      %v324 = vsel %vm323, %v318, %v321
      %v325 = vsel %vm323, %v320, %v322
      %328 = vst [vmem:[#allocation2 + $0x38] sm:$0xf] %v324
      %329 = vst [vmem:[#allocation2 + $0x3c] sm:$0xf] %v325
      %330 = vrot.lane.b32.xlu0 %v233, 120
      %v331 = vpop.permute.xlu0 %330
      %332 = vrot.lane.b32.xlu0 %v234, 120
      %v333 = vpop.permute.xlu0 %332
      %v334 = vrot.slane %v331, 4
      %v335 = vrot.slane %v333, 4
      %vm336 = vcmask 982016
      %v337 = vsel %vm336, %v331, %v334
      %v338 = vsel %vm336, %v333, %v335
      %341 = vst [vmem:[#allocation2 + $0x40] sm:$0xf] %v337
      %342 = vst [vmem:[#allocation2 + $0x44] sm:$0xf] %v338
      %v343 = vld [vmem:[%s1] sm:$0xff]
      %v344 = vld [vmem:[%s1 + $0x8] sm:$0xff]
      %v345 = vld [vmem:[#allocation2] sm:$0xf]
      %v346 = vld [vmem:[#allocation2 + $0x4] sm:$0xf]
      %v347 = vld [vmem:[#allocation2 + $0x8] sm:$0xf]
      %v348 = vld [vmem:[#allocation2 + $0xc] sm:$0xf]
      %v349 = vld [vmem:[#allocation2 + $0x10] sm:$0xf]
      %v350 = vld [vmem:[#allocation2 + $0x14] sm:$0xf]
      %v351 = vld [vmem:[#allocation2 + $0x18] sm:$0xf]
      %v352 = vld [vmem:[#allocation2 + $0x1c] sm:$0xf]
      %v353 = vld [vmem:[#allocation2 + $0x20] sm:$0xf]
      %v354 = vld [vmem:[#allocation2 + $0x24] sm:$0xf]
      %v355 = vld [vmem:[#allocation2 + $0x28] sm:$0xf]
      %v356 = vld [vmem:[#allocation2 + $0x2c] sm:$0xf]
      %v357 = vld [vmem:[#allocation2 + $0x30] sm:$0xf]
      %v358 = vld [vmem:[#allocation2 + $0x34] sm:$0xf]
      %v359 = vld [vmem:[#allocation2 + $0x38] sm:$0xf]
      %v360 = vld [vmem:[#allocation2 + $0x3c] sm:$0xf]
      %v361 = vld [vmem:[#allocation2 + $0x40] sm:$0xf]
      %v362 = vld [vmem:[#allocation2 + $0x44] sm:$0xf]
      %v363 = vld [vmem:[%s2] sm:$0xff]
      %v364 = vld [vmem:[%s2 + $0x8] sm:$0xff]
      %366 = vset.pattern.permute.xlu0 0
      %367 = vperm.xlu0 %366, %v363
      %v368 = vpop.permute.xlu0 %367
      %371 = vset.pattern.permute.xlu0 0
      %372 = vperm.xlu0 %371, %v364
      %v373 = vpop.permute.xlu0 %372
      %v377 = vunpack.c.l.b16 %v343
      %v378 = vunpack.c.h.b16 %v343
      %v379 = vunpack.c.l.b16 %v344
      %v380 = vunpack.c.h.b16 %v344
      %v381 = vpack.c.b16 %v379, %v377
      %v382 = vpack.c.b16 %v380, %v378
      %v402 = vunpack.c.l.b16 %v345
      %v403 = vunpack.c.l.b16 %v346
      %v404 = vunpack.c.l.b16 %v347
      %v405 = vunpack.c.l.b16 %v348
      %v406 = vunpack.c.l.b16 %v349
      %v407 = vunpack.c.l.b16 %v350
      %v408 = vunpack.c.l.b16 %v351
      %v409 = vunpack.c.l.b16 %v352
      %v410 = vunpack.c.l.b16 %v353
      %v411 = vunpack.c.l.b16 %v354
      %v412 = vunpack.c.l.b16 %v355
      %v413 = vunpack.c.l.b16 %v356
      %v414 = vunpack.c.l.b16 %v357
      %v415 = vunpack.c.l.b16 %v358
      %v416 = vunpack.c.l.b16 %v359
      %v417 = vunpack.c.l.b16 %v360
      %v418 = vunpack.c.l.b16 %v361
      %v419 = vunpack.c.l.b16 %v362
      %v420 = vpack.c.b16 %v403, %v402
      %v421 = vpack.c.b16 %v405, %v404
      %v422 = vpack.c.b16 %v407, %v406
      %v423 = vpack.c.b16 %v409, %v408
      %v424 = vpack.c.b16 %v411, %v410
      %v425 = vpack.c.b16 %v413, %v412
      %v426 = vpack.c.b16 %v415, %v414
      %v427 = vpack.c.b16 %v417, %v416
      %v428 = vpack.c.b16 %v419, %v418
      %vm438 = vcmask 130048
      %v440 = vsel %vm438, %v382, 0
      %442 = vmatpush.bf16.msra.mxu0 %v427
      %443 = vmatpush.bf16.msra.mxu0 %v426
      %444 = vmatpush.bf16.msra.mxu0 %v425
      %445 = vmatpush.bf16.msra.mxu0 %v424
      %446 = vmatpush.bf16.msra.mxu0 %v423
      %447 = vmatpush.bf16.msra.mxu0 %v422
      %448 = vmatpush.bf16.msra.mxu0 %v421
      %449 = vmatpush.bf16.msra.mxu0 %v420
      %450 = vmatmul.bf16.gmra.mxu0 %v381
      %v451 = vpop.f32.mrf.mxu0
      %v452 = vadd.f32 %v368, %v451
      %v453 = vpop.f32.mrf.mxu0
      %v454 = vadd.f32 %v373, %v453
      %455 = vdwg.mxu0
      %456 = vmatpush.bf16.msra.mxu0 0
      %457 = vmatpush.bf16.msra.mxu0 0
      %458 = vmatpush.bf16.msra.mxu0 0
      %459 = vmatpush.bf16.msra.mxu0 0
      %460 = vmatpush.bf16.msra.mxu0 0
      %461 = vmatpush.bf16.msra.mxu0 0
      %462 = vmatpush.bf16.msra.mxu0 0
      %463 = vmatpush.bf16.msra.mxu0 %v428
      %464 = vmatmul.bf16.gmra.mxu0 %v440
      %v465 = vpop.f32.mrf.mxu0
      %v466 = vadd.f32 %v452, %v465
      %v467 = vpop.f32.mrf.mxu0
      %v468 = vadd.f32 %v454, %v467
      %469 = vdwg.mxu0
      %v470 = vmax.f32 %v466, 0.0
      %v471 = vmax.f32 %v468, 0.0
      %v472 = vld [vmem:[%s223] sm:$0x1]
      %v474 = vperm.slane %v472, 0
      %v476 = vmul.f32 %v470, %v474
      %v477 = vmul.f32 %v471, %v474
      %v478 = vpack.c.bf16 %v476, %v476
      %v479 = vpack.c.bf16 %v477, %v477
      %480 = vst [vmem:[%s231] sm:$0xf] %v478
      %481 = vst [vmem:[%s231 + $0x4] sm:$0xf] %v479
      %p482 = scmp.lt.s32.totalorder %s19, 1
      %s483 = scalar_select %p482, %s19, 1
      %p484 = scmp.lt.s32.totalorder %s20, 0
      %s485 = scalar_select %p484, %s20, 0
      %s486 = smul.addr %s483, 2
      %s487 = sadd.s32 %s485, %s486
      %s488 = smul.addr %s487, 4
      %s489 = scalar_lea.vmem %s4, %s488
      // Predicated region
      $region37: #{detail_branch_forward.15} parent=35 // pred_check
        %p490 = pneg %p141
      $region38: #{detail_branch_forward.15} parent=35 // pred_check_branch
        %492 = sbr.rel (%p490) target = $region40
      $region39: #{detail_branch_forward.15} parent=35 // pred_region
        _
      $region40: #{detail_branch_forward.15} parent=35 // pred_fallthru
        _
    $region36: #{detail_branch_forward.15} parent=5 // pred_fallthru
      _
    %p493 = scmp.le.s32.totalorder 2, %s10
    // Predicated region
    $region41: #{detail_branch_forward.15} parent=5 // pred_check
      %p494 = pneg %p493
    $region42: #{detail_branch_forward.15} parent=5 // pred_check_branch
      %496 = sbr.rel (%p494) target = $region44
    $region43: #{detail_branch_forward.15} parent=5 // pred_region
      %s497 = ssub.s32 %s10, 2
      // Predicated region
      $region45: #{detail_branch_forward.15} parent=43 // pred_check
        %p498 = pneg %p147
      $region46: #{detail_branch_forward.15} parent=43 // pred_check_branch
        %500 = sbr.rel (%p498) target = $region48
      $region47: #{detail_branch_forward.15} parent=43 // pred_region
        %p501 = scmp.lt.s32.totalorder %s21, 1
        %s502 = scalar_select %p501, %s21, 1
        %p503 = scmp.lt.s32.totalorder %s22, 0
        %s504 = scalar_select %p503, %s22, 0
        %s505 = smul.addr %s502, 2
        %s506 = sadd.s32 %s504, %s505
        %s507 = smul.addr %s506, 4
        %s508 = scalar_lea.vmem %s4, %s507
      $region48: #{detail_branch_forward.15} parent=43 // pred_fallthru
        _
    $region44: #{detail_branch_forward.15} parent=5 // pred_fallthru
      _
  $region6: #{detail_branch_forward.15} parent=0 // loop_footer
    %s14 = sadd.s32 1, %s10
  $region7: #{detail_branch_forward.15} parent=0 // loop_footer_branch
    %9 = sbr.rel target = $region3
  $region8: #{detail_branch_forward.15} parent=0 // loop_exit
    _

// kernel: detail_branch_forward.13
$region0: #{detail_branch_forward.13}
  #allocation0 [shape = 'u32[]', space=smem, size = 0x4, offset = 0x4, fixed_abs, tag = 'smem constant byte address 0x4 - core index']
  #allocation1 [shape = 'u32[72,128]{1,0:T(1,128)}', space=vmem, size = 0x9000, scoped, tag = 'internal scratch']
  #allocation2 [shape = 'bf16[72,128]{1,0:T(8,128)(2,1)}', space=vmem, size = 0x4800, scoped, tag = 'scratch operand']
  %s0 = inlined_call_operand.vmem [shape: bf16[2,8,388], index: 0, kind: input, shape index: {}]
  %s1 = inlined_call_operand.vmem [shape: bf16[2,8,388], index: 1, kind: input, shape index: {}]
  %s2 = inlined_call_operand.vmem [shape: bf16[2,8,388], index: 2, kind: input, shape index: {}]
  %s3 = inlined_call_operand.vmem [shape: bf16[2,8,388], index: 3, kind: input, shape index: {}]
  %s4 = inlined_call_operand.vmem [shape: bf16[16,72], index: 4, kind: input, shape index: {}]
  %s5 = inlined_call_operand.vmem [shape: f32[16,1], index: 5, kind: input, shape index: {}]
  %s6 = inlined_call_operand.vmem [shape: f32[1,384], index: 6, kind: input, shape index: {}]
  %s7 = inlined_call_operand.vmem [shape: bf16[2,16,384], index: 7, kind: output, shape index: {}]
  %s8 = sld [smem:[#allocation0]]
  $region98: #{detail_branch_forward.13} parent=0
    _
  %s10 = ssub.s32 1, %s8
  %s11 = scalar_select 0, %s10, %s8
  $region1: #{detail_branch_forward.13} parent=0
    #allocation3 [shape = 'u8[8192]{0}', space=vmem, size = 0x2000, scoped, tag = 'output window, operand 0']
    loop: start=0, step=1, limit=8
    $region2: #{detail_branch_forward.13} parent=1 // loop_pre_header
      _
    $region3: #{detail_branch_forward.13} parent=1 // loop_header
      %s13 = sphi 0, %s17
      %p14 = scmp.ge.s32.totalorder %s13, 8
      %s20 = sphi 0, %s32
      %s21 = sphi 0, %s28
      %s22 = sphi 0, %s20
      %s23 = sphi 0, %s21
      %s24 = sphi 0, %s22
      %s25 = sphi 0, %s23
      %s35 = sphi 0, %s37
      %s38 = sphi 0, %s35
      %s39 = sphi 0, %s38
      %s55 = sphi 0, %s39
      %s61 = sphi 0, %s63
      %s64 = sphi 0, %s61
      %s65 = sphi 0, %s64
      %s81 = sphi 0, %s65
      %s87 = sphi 0, %s89
      %s90 = sphi 0, %s87
      %s91 = sphi 0, %s90
      %s107 = sphi 0, %s91
      %s113 = sphi 0, %s115
      %s116 = sphi 0, %s113
      %s117 = sphi 0, %s116
      %s133 = sphi 0, %s117
      %s137 = sphi 0, %s137
      %s139 = sphi 0, %s137
      %s140 = sphi 0, %s139
      %s154 = sphi 0, %s140
      %s158 = sphi 0, %s158
      %s160 = sphi 0, %s158
      %s161 = sphi 0, %s160
      %s175 = sphi 0, %s161
      %s181 = sphi 0, %s183
      %s184 = sphi 0, %s181
      %s185 = sphi 0, %s184
      %s201 = sphi 0, %s185
      %s209 = sphi 0, %s211
      %s212 = sphi 0, %s209
      %s213 = sphi 0, %s212
      %s229 = sphi 0, %s213
    $region4: #{detail_branch_forward.13} parent=1 // loop_header_branch
      %16 = sbr.rel (%p14) target = $region8
    $region5: #{detail_branch_forward.13} parent=1 // loop_body
      %s18 = ssub.s32 %s13, 1
      %s19 = ssub.s32 %s13, 2
      %s26 = sadd.s32 1, %s21
      %p27 = scmp.ge.s32.totalorder %s26, 3
      %s28 = scalar_select %p27, 0, %s26
      %s29 = sadd.s32 1, %s20
      %s30 = scalar_select %p27, %s29, %s20
      %p31 = scmp.ge.s32.totalorder %s30, 2
      %s32 = scalar_select %p31, 0, %s30
      %s33 = ssub.s32 %s20, %s32
      %p34 = scmp.eq.s32.totalorder %s33, 0
      %s36 = sadd.s32 %s35, 1
      %s37 = scalar_select %p34, %s35, %s36
      %p40 = pneg %p34
      %p41 = scmp.eq.s32.totalorder %s13, 5
      %p42 = por %p40, %p41
      %p43 = scmp.ne.s32.totalorder %s35, %s38
      %p44 = scmp.eq.s32.totalorder %s13, 0
      %p45 = por %p43, %p44
      %p46 = scmp.ne.s32.totalorder %s35, %s38
      %p47 = scmp.eq.s32.totalorder %s18, 5
      %p48 = por %p46, %p47
      %p49 = scmp.ne.s32.totalorder %s38, %s39
      %p50 = scmp.eq.s32.totalorder %s18, 0
      %p51 = por %p49, %p50
      %p52 = scmp.ne.s32.totalorder %s38, %s39
      %p53 = scmp.eq.s32.totalorder %s19, 5
      %p54 = por %p52, %p53
      %p56 = scmp.ne.s32.totalorder %s39, %s55
      %p57 = scmp.eq.s32.totalorder %s19, 0
      %p58 = por %p56, %p57
      %s59 = ssub.s32 %s20, %s32
      %p60 = scmp.eq.s32.totalorder %s59, 0
      %s62 = sadd.s32 %s61, 1
      %s63 = scalar_select %p60, %s61, %s62
      %p66 = pneg %p60
      %p67 = scmp.eq.s32.totalorder %s13, 5
      %p68 = por %p66, %p67
      %p69 = scmp.ne.s32.totalorder %s61, %s64
      %p70 = scmp.eq.s32.totalorder %s13, 0
      %p71 = por %p69, %p70
      %p72 = scmp.ne.s32.totalorder %s61, %s64
      %p73 = scmp.eq.s32.totalorder %s18, 5
      %p74 = por %p72, %p73
      %p75 = scmp.ne.s32.totalorder %s64, %s65
      %p76 = scmp.eq.s32.totalorder %s18, 0
      %p77 = por %p75, %p76
      %p78 = scmp.ne.s32.totalorder %s64, %s65
      %p79 = scmp.eq.s32.totalorder %s19, 5
      %p80 = por %p78, %p79
      %p82 = scmp.ne.s32.totalorder %s65, %s81
      %p83 = scmp.eq.s32.totalorder %s19, 0
      %p84 = por %p82, %p83
      %s85 = ssub.s32 %s20, %s32
      %p86 = scmp.eq.s32.totalorder %s85, 0
      %s88 = sadd.s32 %s87, 1
      %s89 = scalar_select %p86, %s87, %s88
      %p92 = pneg %p86
      %p93 = scmp.eq.s32.totalorder %s13, 5
      %p94 = por %p92, %p93
      %p95 = scmp.ne.s32.totalorder %s87, %s90
      %p96 = scmp.eq.s32.totalorder %s13, 0
      %p97 = por %p95, %p96
      %p98 = scmp.ne.s32.totalorder %s87, %s90
      %p99 = scmp.eq.s32.totalorder %s18, 5
      %p100 = por %p98, %p99
      %p101 = scmp.ne.s32.totalorder %s90, %s91
      %p102 = scmp.eq.s32.totalorder %s18, 0
      %p103 = por %p101, %p102
      %p104 = scmp.ne.s32.totalorder %s90, %s91
      %p105 = scmp.eq.s32.totalorder %s19, 5
      %p106 = por %p104, %p105
      %p108 = scmp.ne.s32.totalorder %s91, %s107
      %p109 = scmp.eq.s32.totalorder %s19, 0
      %p110 = por %p108, %p109
      %s111 = ssub.s32 %s20, %s32
      %p112 = scmp.eq.s32.totalorder %s111, 0
      %s114 = sadd.s32 %s113, 1
      %s115 = scalar_select %p112, %s113, %s114
      %p118 = pneg %p112
      %p119 = scmp.eq.s32.totalorder %s13, 5
      %p120 = por %p118, %p119
      %p121 = scmp.ne.s32.totalorder %s113, %s116
      %p122 = scmp.eq.s32.totalorder %s13, 0
      %p123 = por %p121, %p122
      %p124 = scmp.ne.s32.totalorder %s113, %s116
      %p125 = scmp.eq.s32.totalorder %s18, 5
      %p126 = por %p124, %p125
      %p127 = scmp.ne.s32.totalorder %s116, %s117
      %p128 = scmp.eq.s32.totalorder %s18, 0
      %p129 = por %p127, %p128
      %p130 = scmp.ne.s32.totalorder %s116, %s117
      %p131 = scmp.eq.s32.totalorder %s19, 5
      %p132 = por %p130, %p131
      %p134 = scmp.ne.s32.totalorder %s117, %s133
      %p135 = scmp.eq.s32.totalorder %s19, 0
      %p136 = por %p134, %p135
      %s138 = sadd.s32 %s137, 1
      %p141 = scmp.eq.s32.totalorder %s13, 5
      %p142 = scmp.ne.s32.totalorder %s137, %s139
      %p143 = scmp.eq.s32.totalorder %s13, 0
      %p144 = por %p142, %p143
      %p145 = scmp.ne.s32.totalorder %s137, %s139
      %p146 = scmp.eq.s32.totalorder %s18, 5
      %p147 = por %p145, %p146
      %p148 = scmp.ne.s32.totalorder %s139, %s140
      %p149 = scmp.eq.s32.totalorder %s18, 0
      %p150 = por %p148, %p149
      %p151 = scmp.ne.s32.totalorder %s139, %s140
      %p152 = scmp.eq.s32.totalorder %s19, 5
      %p153 = por %p151, %p152
      %p155 = scmp.ne.s32.totalorder %s140, %s154
      %p156 = scmp.eq.s32.totalorder %s19, 0
      %p157 = por %p155, %p156
      %s159 = sadd.s32 %s158, 1
      %p162 = scmp.eq.s32.totalorder %s13, 5
      %p163 = scmp.ne.s32.totalorder %s158, %s160
      %p164 = scmp.eq.s32.totalorder %s13, 0
      %p165 = por %p163, %p164
      %p166 = scmp.ne.s32.totalorder %s158, %s160
      %p167 = scmp.eq.s32.totalorder %s18, 5
      %p168 = por %p166, %p167
      %p169 = scmp.ne.s32.totalorder %s160, %s161
      %p170 = scmp.eq.s32.totalorder %s18, 0
      %p171 = por %p169, %p170
      %p172 = scmp.ne.s32.totalorder %s160, %s161
      %p173 = scmp.eq.s32.totalorder %s19, 5
      %p174 = por %p172, %p173
      %p176 = scmp.ne.s32.totalorder %s161, %s175
      %p177 = scmp.eq.s32.totalorder %s19, 0
      %p178 = por %p176, %p177
      %s179 = ssub.s32 %s21, %s28
      %p180 = scmp.eq.s32.totalorder %s179, 0
      %s182 = sadd.s32 %s181, 1
      %s183 = scalar_select %p180, %s181, %s182
      %p186 = pneg %p180
      %p187 = scmp.eq.s32.totalorder %s13, 5
      %p188 = por %p186, %p187
      %p189 = scmp.ne.s32.totalorder %s181, %s184
      %p190 = scmp.eq.s32.totalorder %s13, 0
      %p191 = por %p189, %p190
      %p192 = scmp.ne.s32.totalorder %s181, %s184
      %p193 = scmp.eq.s32.totalorder %s18, 5
      %p194 = por %p192, %p193
      %p195 = scmp.ne.s32.totalorder %s184, %s185
      %p196 = scmp.eq.s32.totalorder %s18, 0
      %p197 = por %p195, %p196
      %p198 = scmp.ne.s32.totalorder %s184, %s185
      %p199 = scmp.eq.s32.totalorder %s19, 5
      %p200 = por %p198, %p199
      %p202 = scmp.ne.s32.totalorder %s185, %s201
      %p203 = scmp.eq.s32.totalorder %s19, 0
      %p204 = por %p202, %p203
      %s205 = ssub.s32 %s20, %s32
      %s206 = ssub.s32 %s21, %s28
      %s207 = sor.u32 %s205, %s206
      %p208 = scmp.eq.s32.totalorder %s207, 0
      %s210 = sadd.s32 %s209, 1
      %s211 = scalar_select %p208, %s209, %s210
      %p214 = pneg %p208
      %p215 = scmp.eq.s32.totalorder %s13, 5
      %p216 = por %p214, %p215
      %p217 = scmp.ne.s32.totalorder %s209, %s212
      %p218 = scmp.eq.s32.totalorder %s13, 0
      %p219 = por %p217, %p218
      %p220 = scmp.ne.s32.totalorder %s209, %s212
      %p221 = scmp.eq.s32.totalorder %s18, 5
      %p222 = por %p220, %p221
      %p223 = scmp.ne.s32.totalorder %s212, %s213
      %p224 = scmp.eq.s32.totalorder %s18, 0
      %p225 = por %p223, %p224
      %p226 = scmp.ne.s32.totalorder %s212, %s213
      %p227 = scmp.eq.s32.totalorder %s19, 5
      %p228 = por %p226, %p227
      %p230 = scmp.ne.s32.totalorder %s213, %s229
      %p231 = scmp.eq.s32.totalorder %s19, 0
      %p232 = por %p230, %p231
      %p233 = scmp.le.s32.totalorder 1, %s13
      %p234 = scmp.lt.s32.totalorder %s13, 7
      %p235 = pnand %p233, %p234
      %p236 = pneg %p235
      // Predicated region
      $region9: #{detail_branch_forward.13} parent=5 // pred_check
        _
      $region10: #{detail_branch_forward.13} parent=5 // pred_check_branch
        %238 = sbr.rel (%p235) target = $region12
      $region11: #{detail_branch_forward.13} parent=5 // pred_region
        %s239 = ssub.s32 %s13, 1
        // Predicated region
        $region13: #{detail_branch_forward.13} parent=11 // pred_check
          %p240 = pneg %p150
        $region14: #{detail_branch_forward.13} parent=11 // pred_check_branch
          %242 = sbr.rel (%p240) target = $region16
        $region15: #{detail_branch_forward.13} parent=11 // pred_region
          _
        $region16: #{detail_branch_forward.13} parent=11 // pred_fallthru
          _
        // Predicated region
        $region17: #{detail_branch_forward.13} parent=11 // pred_check
          %p243 = pneg %p171
        $region18: #{detail_branch_forward.13} parent=11 // pred_check_branch
          %245 = sbr.rel (%p243) target = $region20
        $region19: #{detail_branch_forward.13} parent=11 // pred_region
          _
        $region20: #{detail_branch_forward.13} parent=11 // pred_fallthru
          _
      $region12: #{detail_branch_forward.13} parent=5 // pred_fallthru
        _
      %p246 = scmp.lt.s32.totalorder %s13, 6
      // Predicated region
      $region21: #{detail_branch_forward.13} parent=5 // pred_check
        %p247 = pneg %p246
      $region22: #{detail_branch_forward.13} parent=5 // pred_check_branch
        %249 = sbr.rel (%p247) target = $region24
      $region23: #{detail_branch_forward.13} parent=5 // pred_region
        // Predicated region
        $region25: #{detail_branch_forward.13} parent=23 // pred_check
          %p250 = pneg %p45
        $region26: #{detail_branch_forward.13} parent=23 // pred_check_branch
          %252 = sbr.rel (%p250) target = $region28
        $region27: #{detail_branch_forward.13} parent=23 // pred_region
          %p253 = scmp.lt.s32.totalorder %s20, 1
          %s254 = scalar_select %p253, %s20, 1
          %s255 = smul.addr %s254, 4
          %s256 = smul.addr %s255, 4
          %s257 = scalar_lea.vmem %s0, %s256
        $region28: #{detail_branch_forward.13} parent=23 // pred_fallthru
          _
        // Predicated region
        $region29: #{detail_branch_forward.13} parent=23 // pred_check
          %p258 = pneg %p71
        $region30: #{detail_branch_forward.13} parent=23 // pred_check_branch
          %260 = sbr.rel (%p258) target = $region32
        $region31: #{detail_branch_forward.13} parent=23 // pred_region
          %p261 = scmp.lt.s32.totalorder %s20, 1
          %s262 = scalar_select %p261, %s20, 1
          %s263 = smul.addr %s262, 4
          %s264 = smul.addr %s263, 4
          %s265 = scalar_lea.vmem %s1, %s264
        $region32: #{detail_branch_forward.13} parent=23 // pred_fallthru
          _
        // Predicated region
        $region33: #{detail_branch_forward.13} parent=23 // pred_check
          %p266 = pneg %p97
        $region34: #{detail_branch_forward.13} parent=23 // pred_check_branch
          %268 = sbr.rel (%p266) target = $region36
        $region35: #{detail_branch_forward.13} parent=23 // pred_region
          %p269 = scmp.lt.s32.totalorder %s20, 1
          %s270 = scalar_select %p269, %s20, 1
          %s271 = smul.addr %s270, 4
          %s272 = smul.addr %s271, 4
          %s273 = scalar_lea.vmem %s2, %s272
        $region36: #{detail_branch_forward.13} parent=23 // pred_fallthru
          _
        // Predicated region
        $region37: #{detail_branch_forward.13} parent=23 // pred_check
          %p274 = pneg %p123
        $region38: #{detail_branch_forward.13} parent=23 // pred_check_branch
          %276 = sbr.rel (%p274) target = $region40
        $region39: #{detail_branch_forward.13} parent=23 // pred_region
          %p277 = scmp.lt.s32.totalorder %s20, 1
          %s278 = scalar_select %p277, %s20, 1
          %s279 = smul.addr %s278, 4
          %s280 = smul.addr %s279, 4
          %s281 = scalar_lea.vmem %s3, %s280
        $region40: #{detail_branch_forward.13} parent=23 // pred_fallthru
          _
        // Predicated region
        $region41: #{detail_branch_forward.13} parent=23 // pred_check
          %p282 = pneg %p191
        $region42: #{detail_branch_forward.13} parent=23 // pred_check_branch
          %284 = sbr.rel (%p282) target = $region44
        $region43: #{detail_branch_forward.13} parent=23 // pred_region
          %p285 = scmp.lt.s32.totalorder %s21, 2
          %s286 = scalar_select %p285, %s21, 2
          %s287 = scalar_lea.vmem %s6, %s286
        $region44: #{detail_branch_forward.13} parent=23 // pred_fallthru
          _
      $region24: #{detail_branch_forward.13} parent=5 // pred_fallthru
        _
      %p288 = scmp.le.s32.totalorder 1, %s13
      %p289 = scmp.lt.s32.totalorder %s13, 7
      %p290 = pnand %p288, %p289
      %p291 = pneg %p290
      // Predicated region
      $region45: #{detail_branch_forward.13} parent=5 // pred_check
        _
      $region46: #{detail_branch_forward.13} parent=5 // pred_check_branch
        %293 = sbr.rel (%p290) target = $region48
      $region47: #{detail_branch_forward.13} parent=5 // pred_region
        %s294 = ssub.s32 %s13, 1
        %p295 = scmp.lt.s32.totalorder %s22, 1
        %s296 = scalar_select %p295, %s22, 1
        %s297 = smul.addr %s296, 4
        %s298 = smul.addr %s297, 4
        %s299 = scalar_lea.vmem %s0, %s298
        %p300 = pneg %p51
        %p301 = pneg %p48
        %p302 = scmp.lt.s32.totalorder %s22, 1
        %s303 = scalar_select %p302, %s22, 1
        %s304 = smul.addr %s303, 4
        %s305 = smul.addr %s304, 4
        %s306 = scalar_lea.vmem %s1, %s305
        %p307 = pneg %p77
        %p308 = pneg %p74
        %p309 = scmp.lt.s32.totalorder %s22, 1
        %s310 = scalar_select %p309, %s22, 1
        %s311 = smul.addr %s310, 4
        %s312 = smul.addr %s311, 4
        %s313 = scalar_lea.vmem %s2, %s312
        %p314 = pneg %p103
        %p315 = pneg %p100
        %p316 = scmp.lt.s32.totalorder %s22, 1
        %s317 = scalar_select %p316, %s22, 1
        %s318 = smul.addr %s317, 4
        %s319 = smul.addr %s318, 4
        %s320 = scalar_lea.vmem %s3, %s319
        %p321 = pneg %p129
        %p322 = pneg %p126
        %p323 = pneg %p150
        %p324 = pneg %p147
        %p325 = pneg %p171
        %p326 = pneg %p168
        %p327 = scmp.lt.s32.totalorder %s23, 2
        %s328 = scalar_select %p327, %s23, 2
        %s329 = scalar_lea.vmem %s6, %s328
        %p330 = pneg %p197
        %p331 = pneg %p194
        %p332 = pneg %p225
        %p333 = pneg %p222
        %s334 = sand.u32 %s212, 1
        %s335 = sand.u32 %s212, 1
        %s336 = smul.addr %s335, 8
        %s337 = scalar_lea.vmem [#allocation3], %s336
        %p338 = scmp.lt.s32.totalorder %s22, 1
        %s339 = scalar_select %p338, %s22, 1
        %s340 = smul.addr %s339, 4
        %s341 = smul.addr %s340, 4
        %s342 = scalar_lea.vmem %s0, %s341
        %p343 = scmp.lt.s32.totalorder %s22, 1
        %s344 = scalar_select %p343, %s22, 1
        %s345 = smul.addr %s344, 4
        %s346 = smul.addr %s345, 4
        %s347 = scalar_lea.vmem %s1, %s346
        %p348 = scmp.lt.s32.totalorder %s22, 1
        %s349 = scalar_select %p348, %s22, 1
        %s350 = smul.addr %s349, 4
        %s351 = smul.addr %s350, 4
        %s352 = scalar_lea.vmem %s2, %s351
        %p353 = scmp.lt.s32.totalorder %s22, 1
        %s354 = scalar_select %p353, %s22, 1
        %s355 = smul.addr %s354, 4
        %s356 = smul.addr %s355, 4
        %s357 = scalar_lea.vmem %s3, %s356
        %p358 = scmp.lt.s32.totalorder %s23, 2
        %s359 = scalar_select %p358, %s23, 2
        %s360 = scalar_lea.vmem %s6, %s359
        %s362 = smul.u32 %s23, 128
        %s363 = sshra.s32 %s362, 7
        %s364 = sand.u32 %s362, 127
        %s365 = smul.addr %s363, 4
        %s366 = scalar_lea.vmem %s342, %s365
        %v367 = vld [vmem:[%s366] sm:$0xff]
        %s368 = smul.addr %s363, 4
        %s369 = scalar_lea.vmem %s347, %s368
        %v370 = vld [vmem:[%s369] sm:$0xff]
        %s371 = smul.addr %s363, 4
        %s372 = scalar_lea.vmem %s352, %s371
        %v373 = vld [vmem:[%s372] sm:$0xff]
        %s374 = smul.addr %s363, 4
        %s375 = scalar_lea.vmem %s357, %s374
        %v376 = vld [vmem:[%s375] sm:$0xff]
        %377 = vst [vmem:[#allocation2] sm:$0xf] %v376
        %379 = vrot.lane.b32.xlu0 %v373, 127
        %v380 = vpop.permute.xlu0 %379
        %v381 = vrot.slane %v380, 4
        %vm382 = vcmask 1039360
        %v383 = vsel %vm382, %v380, %v381
        %385 = vst [vmem:[#allocation2 + $0x4] sm:$0xf] %v383
        %387 = vrot.lane.b32.xlu0 %v376, 127
        %v388 = vpop.permute.xlu0 %387
        %v389 = vrot.slane %v388, 4
        %v390 = vsel %vm382, %v388, %v389
        %392 = vst [vmem:[#allocation2 + $0x8] sm:$0xf] %v390
        %394 = vrot.lane.b32.xlu0 %v370, 125
        %v395 = vpop.permute.xlu0 %394
        %v396 = vrot.slane %v395, 4
        %vm397 = vcmask 1022976
        %v398 = vsel %vm397, %v395, %v396
        %400 = vst [vmem:[#allocation2 + $0xc] sm:$0xf] %v398
        %402 = vrot.lane.b32.xlu0 %v367, 124
        %v403 = vpop.permute.xlu0 %402
        %v404 = vrot.slane %v403, 4
        %vm405 = vcmask 1014784
        %v406 = vsel %vm405, %v403, %v404
        %408 = vst [vmem:[#allocation2 + $0x10] sm:$0xf] %v406
        %409 = vrot.lane.b32.xlu0 %v370, 124
        %v410 = vpop.permute.xlu0 %409
        %v411 = vrot.slane %v410, 4
        %v412 = vsel %vm405, %v410, %v411
        %414 = vst [vmem:[#allocation2 + $0x14] sm:$0xf] %v412
        %415 = vrot.lane.b32.xlu0 %v376, 125
        %v416 = vpop.permute.xlu0 %415
        %v417 = vrot.slane %v416, 4
        %v418 = vsel %vm397, %v416, %v417
        %420 = vst [vmem:[#allocation2 + $0x18] sm:$0xf] %v418
        %421 = vrot.lane.b32.xlu0 %v373, 124
        %v422 = vpop.permute.xlu0 %421
        %v423 = vrot.slane %v422, 4
        %v424 = vsel %vm405, %v422, %v423
        %426 = vst [vmem:[#allocation2 + $0x1c] sm:$0xf] %v424
        %427 = vrot.lane.b32.xlu0 %v376, 124
        %v428 = vpop.permute.xlu0 %427
        %v429 = vrot.slane %v428, 4
        %v430 = vsel %vm405, %v428, %v429
        %432 = vst [vmem:[#allocation2 + $0x20] sm:$0xf] %v430
        %v433 = vld [vmem:[%s4] sm:$0xf]
        %v434 = vld [vmem:[%s4 + $0x4] sm:$0xf]
        %v435 = vld [vmem:[#allocation2] sm:$0xf]
        %v436 = vld [vmem:[#allocation2 + $0x4] sm:$0xf]
        %v437 = vld [vmem:[#allocation2 + $0x8] sm:$0xf]
        %v438 = vld [vmem:[#allocation2 + $0xc] sm:$0xf]
        %v439 = vld [vmem:[#allocation2 + $0x10] sm:$0xf]
        %v440 = vld [vmem:[#allocation2 + $0x14] sm:$0xf]
        %v441 = vld [vmem:[#allocation2 + $0x18] sm:$0xf]
        %v442 = vld [vmem:[#allocation2 + $0x1c] sm:$0xf]
        %v443 = vld [vmem:[#allocation2 + $0x20] sm:$0xf]
        %v444 = vld [vmem:[%s5] sm:$0xff]
        %v445 = vld [vmem:[%s5 + $0x8] sm:$0xff]
        %447 = vset.pattern.permute.xlu0 0
        %448 = vperm.xlu0 %447, %v444
        %v449 = vpop.permute.xlu0 %448
        %452 = vset.pattern.permute.xlu0 0
        %453 = vperm.xlu0 %452, %v445
        %v454 = vpop.permute.xlu0 %453
        %v458 = vunpack.c.l.b16 %v433
        %v459 = vunpack.c.l.b16 %v434
        %v460 = vpack.c.b16 %v459, %v458
        %v470 = vunpack.c.l.b16 %v435
        %v471 = vunpack.c.l.b16 %v436
        %v472 = vunpack.c.l.b16 %v437
        %v473 = vunpack.c.l.b16 %v438
        %v474 = vunpack.c.l.b16 %v439
        %v475 = vunpack.c.l.b16 %v440
        %v476 = vunpack.c.l.b16 %v441
        %v477 = vunpack.c.l.b16 %v442
        %v478 = vunpack.c.l.b16 %v443
        %v479 = vpack.c.b16 %v471, %v470
        %v480 = vpack.c.b16 %v473, %v472
        %v481 = vpack.c.b16 %v475, %v474
        %v482 = vpack.c.b16 %v477, %v476
        %v483 = vpack.c.b16 %v478, %v478
        %vm488 = vcmask 588800
        %v490 = vsel %vm488, %v460, 0
        %vm492 = vcmask 1043456
        %v494 = vsel %vm492, %v483, 0
        %496 = vmatpush.bf16.msra.mxu0 0
        %497 = vmatpush.bf16.msra.mxu0 0
        %498 = vmatpush.bf16.msra.mxu0 0
        %499 = vmatpush.bf16.msra.mxu0 %v494
        %500 = vmatpush.bf16.msra.mxu0 %v482
        %501 = vmatpush.bf16.msra.mxu0 %v481
        %502 = vmatpush.bf16.msra.mxu0 %v480
        %503 = vmatpush.bf16.msra.mxu0 %v479
        %504 = vmatmul.bf16.gmra.mxu0 %v490
        %v505 = vpop.f32.mrf.mxu0
        %v506 = vadd.f32 %v449, %v505
        %v507 = vpop.f32.mrf.mxu0
        %v508 = vadd.f32 %v454, %v507
        %509 = vdwg.mxu0
        %v510 = vmax.f32 %v506, 0.0
        %v511 = vmax.f32 %v508, 0.0
        %v512 = vld [vmem:[%s360] sm:$0x1]
        %v514 = vperm.slane %v512, 0
        %v516 = vmul.f32 %v510, %v514
        %v517 = vmul.f32 %v511, %v514
        %v518 = vpack.c.bf16 %v516, %v516
        %v519 = vpack.c.bf16 %v517, %v517
        %520 = vst [vmem:[%s337] sm:$0xf] %v518
        %521 = vst [vmem:[%s337 + $0x4] sm:$0xf] %v519
        %s522 = sand.u32 %s212, 1
        %s523 = sand.u32 %s212, 1
        %s524 = smul.addr %s523, 8
        %s525 = scalar_lea.vmem [#allocation3], %s524
        // Predicated region
        $region49: #{detail_branch_forward.13} parent=47 // pred_check
          %p526 = pneg %p222
        $region50: #{detail_branch_forward.13} parent=47 // pred_check_branch
          %528 = sbr.rel (%p526) target = $region52
        $region51: #{detail_branch_forward.13} parent=47 // pred_region
          %s529 = smul.addr %s22, 6
          %s530 = sadd.s32 %s23, %s529
          %s531 = smul.addr %s530, 4
          %s532 = scalar_lea.vmem %s7, %s531
          // Predicated region
          $region53: #{detail_branch_forward.13} parent=51 // pred_check
            _
          $region54: #{detail_branch_forward.13} parent=51 // pred_check_branch
            %534 = sbr.rel (0) target = $region56
          $region55: #{detail_branch_forward.13} parent=51 // pred_region
            // Predicated region
            $region57: #{detail_branch_forward.13} parent=55 // pred_check
              _
            $region58: #{detail_branch_forward.13} parent=55 // pred_check_branch
              %536 = sbr.rel target = $region60
            $region59: #{detail_branch_forward.13} parent=55 // pred_region
              // Predicated region
              $region72: #{detail_branch_forward.13} parent=59 // pred_check
                _
              $region73: #{detail_branch_forward.13} parent=59 // pred_check_branch
                %554 = sbr.rel (0) target = $region75
              $region74: #{detail_branch_forward.13} parent=59 // pred_region
                loop: start=0, step=1, limit=1
                $region76: #{detail_branch_forward.13} parent=74 // loop_pre_header
                  _
                $region77: #{detail_branch_forward.13} parent=74 // loop_header
                  %s556 = sphi 0, %s560
                  %p557 = scmp.ge.s32.totalorder %s556, 1
                  %s561 = sphi %s525, %s525
                  %s562 = sphi %s532, %s532
                $region78: #{detail_branch_forward.13} parent=74 // loop_header_branch
                  %559 = sbr.rel (%p557) target = $region82
                $region79: #{detail_branch_forward.13} parent=74 // loop_body
                  _
                $region80: #{detail_branch_forward.13} parent=74 // loop_footer
                  %s560 = sadd.s32 1, %s556
                $region81: #{detail_branch_forward.13} parent=74 // loop_footer_branch
                  %555 = sbr.rel target = $region77
                $region82: #{detail_branch_forward.13} parent=74 // loop_exit
                  _
                %s564 = ssub.s32 16, 1
                loop: start=0, step=1, limit=1
                $region83: #{detail_branch_forward.13} parent=74 // loop_pre_header
                  _
                $region84: #{detail_branch_forward.13} parent=74 // loop_header
                  %s566 = sphi 0, %s570
                  %p567 = scmp.ge.s32.totalorder %s566, 1
                  %s571 = sphi %s525, %s525
                  %s572 = sphi %s532, %s532
                $region85: #{detail_branch_forward.13} parent=74 // loop_header_branch
                  %569 = sbr.rel (%p567) target = $region89
                $region86: #{detail_branch_forward.13} parent=74 // loop_body
                  %v573 = vld [vmem:[%s571] sm:%s564]
                  %574 = vst [vmem:[%s572] sm:%s564] %v573
                  %v575 = vld [vmem:[%s571 + $0x4] sm:%s564]
                  %576 = vst [vmem:[%s572 + $0xc] sm:%s564] %v575
                $region87: #{detail_branch_forward.13} parent=74 // loop_footer
                  %s570 = sadd.s32 1, %s566
                $region88: #{detail_branch_forward.13} parent=74 // loop_footer_branch
                  %565 = sbr.rel target = $region84
                $region89: #{detail_branch_forward.13} parent=74 // loop_exit
                  _
              $region75: #{detail_branch_forward.13} parent=59 // pred_fallthru
                _
            $region60: #{detail_branch_forward.13} parent=55 // pred_fallthru
              _
            // Predicated region
            $region61: #{detail_branch_forward.13} parent=55 // pred_check
              _
            $region62: #{detail_branch_forward.13} parent=55 // pred_check_branch
              %538 = sbr.rel (0) target = $region64
            $region63: #{detail_branch_forward.13} parent=55 // pred_region
              %s540 = ssub.s32 16, 1
              loop: start=0, step=1, limit=1
              $region65: #{detail_branch_forward.13} parent=63 // loop_pre_header
                _
              $region66: #{detail_branch_forward.13} parent=63 // loop_header
                %s542 = sphi 0, %s546
                %p543 = scmp.ge.s32.totalorder %s542, 1
                %s547 = sphi %s525, %s525
                %s548 = sphi %s532, %s532
              $region67: #{detail_branch_forward.13} parent=63 // loop_header_branch
                %545 = sbr.rel (%p543) target = $region71
              $region68: #{detail_branch_forward.13} parent=63 // loop_body
                %v549 = vld [vmem:[%s547] sm:%s540]
                %550 = vst [vmem:[%s548] sm:%s540] %v549
                %v551 = vld [vmem:[%s547 + $0x4] sm:%s540]
                %552 = vst [vmem:[%s548 + $0xc] sm:%s540] %v551
              $region69: #{detail_branch_forward.13} parent=63 // loop_footer
                %s546 = sadd.s32 1, %s542
              $region70: #{detail_branch_forward.13} parent=63 // loop_footer_branch
                %541 = sbr.rel target = $region66
              $region71: #{detail_branch_forward.13} parent=63 // loop_exit
                _
            $region64: #{detail_branch_forward.13} parent=55 // pred_fallthru
              _
          $region56: #{detail_branch_forward.13} parent=51 // pred_fallthru
            _
          %577 = vnop
        $region52: #{detail_branch_forward.13} parent=47 // pred_fallthru
          _
      $region48: #{detail_branch_forward.13} parent=5 // pred_fallthru
        _
      %p578 = scmp.le.s32.totalorder 2, %s13
      // Predicated region
      $region90: #{detail_branch_forward.13} parent=5 // pred_check
        %p579 = pneg %p578
      $region91: #{detail_branch_forward.13} parent=5 // pred_check_branch
        %581 = sbr.rel (%p579) target = $region93
      $region92: #{detail_branch_forward.13} parent=5 // pred_region
        %s582 = ssub.s32 %s13, 2
        // Predicated region
        $region94: #{detail_branch_forward.13} parent=92 // pred_check
          %p583 = pneg %p228
        $region95: #{detail_branch_forward.13} parent=92 // pred_check_branch
          %585 = sbr.rel (%p583) target = $region97
        $region96: #{detail_branch_forward.13} parent=92 // pred_region
          %s586 = sand.u32 %s213, 1
          %s587 = sand.u32 %s213, 1
          %s588 = smul.addr %s587, 8
          %s589 = scalar_lea.vmem [#allocation3], %s588
        $region97: #{detail_branch_forward.13} parent=92 // pred_fallthru
          _
      $region93: #{detail_branch_forward.13} parent=5 // pred_fallthru
        _
    $region6: #{detail_branch_forward.13} parent=1 // loop_footer
      %s17 = sadd.s32 1, %s13
    $region7: #{detail_branch_forward.13} parent=1 // loop_footer_branch
      %12 = sbr.rel target = $region3
    $region8: #{detail_branch_forward.13} parent=1 // loop_exit
      _

</llo_original>
